<compile_context>
chip_gen: v7x
topology: tpu7x:2x2x1
jax: 0.10.0
libtpu: 0.0.40
codegen_flags: <defaults>
</compile_context>

<pallas_src>
import math

import jax
import jax.numpy as jnp
from jax.experimental import pallas as pl
from jax.experimental.pallas import tpu as pltpu


def _round_up(x, m):
    return ((x + m - 1) // m) * m


def _gelu(x):
    # tanh approximation of GELU (PyTorch nn.GELU() default is exact erf;
    # |diff| < 1e-3 -- acceptable for the downstream contrastive loss here).
    c = 0.7978845608028654  # sqrt(2/pi)
    return 0.5 * x * (1.0 + jnp.tanh(c * (x + 0.044715 * x * x * x)))


def _activation_dtype():
    """bf16 elementwise on v6e/v7x (bf16 VALU/EUP); f32 on v5e and older."""
    try:
        kind = jax.devices()[0].device_kind.lower()
    except Exception:
        kind = ""
    if "v6" in kind or "v7" in kind:
        return jnp.bfloat16
    return jnp.float32


def _as_bf16(w):
    # No-op if params were already prepared (prepare_params).
    return w if w.dtype == jnp.bfloat16 else w.astype(jnp.bfloat16)


# ----------------------------------------------------------------------------
# Fused kernel: BertPooler + mlp_embed (Linear/GELU/Linear/GELU/Linear) + L2
# normalize for BOTH texts.  Weights are bf16 (loaded once per grid step, the
# same VMEM copy serves both texts), matmuls accumulate in f32 on the MXU,
# activations run in `act_dtype` (bf16 on v6e/v7x, f32 on v5e), and the final
# projection + normalization stay in f32.
# ----------------------------------------------------------------------------
def _make_kernel(act_dtype):
    def kernel(x1_ref, x2_ref, wp_ref, bp_ref, w1_ref, b1_ref,
               w2_ref, b2_ref, w3_ref, b3_ref, o1_ref, o2_ref):
        wp = wp_ref[...]
        w1 = w1_ref[...]
        w2 = w2_ref[...]
        w3 = w3_ref[...]
        bp = bp_ref[...]
        b1 = b1_ref[...]
        b2 = b2_ref[...]
        b3 = b3_ref[...]

        def head(x_raw):
            x = x_raw.astype(jnp.bfloat16)
            pooled = jnp.tanh(
                (jnp.dot(x, wp, preferred_element_type=jnp.float32) + bp
                 ).astype(act_dtype))
            h = _gelu(
                (jnp.dot(pooled.astype(jnp.bfloat16), w1,
                         preferred_element_type=jnp.float32) + b1
                 ).astype(act_dtype))
            h = _gelu(
                (jnp.dot(h.astype(jnp.bfloat16), w2,
                         preferred_element_type=jnp.float32) + b2
                 ).astype(act_dtype))
            h = (jnp.dot(h.astype(jnp.bfloat16), w3,
                         preferred_element_type=jnp.float32) + b3)   # f32
            # F.normalize(h, dim=-1): h / max(||h||, 1e-12) == h * rsqrt(max(ss, 1e-24))
            ss = jnp.sum(h * h, axis=-1, keepdims=True)
            return h * jax.lax.rsqrt(jnp.maximum(ss, 1e-24))

        o1_ref[...] = head(x1_ref[...]).astype(o1_ref.dtype)
        o2_ref[...] = head(x2_ref[...]).astype(o2_ref.dtype)

    return kernel


def clp_clinical_forward(last_hidden1, last_hidden2, params):
    """Text branch of CLP_clinical after the BERT encoder.

    Returns (text1_features, text2_features, logit_scale.exp()).
    """
    B, _, E = last_hidden1.shape

    # CLS token per text -- cheap slices; no concat / zero-pack in the wrapper.
    cls1 = last_hidden1[:, 0, :]
    cls2 = last_hidden2[:, 0, :]

    # Per-text row tile.  Small batches: one grid step with a full (un-padded)
    # block; large batches: 256/512-row-per-text tiles (512/1024 MXU rows per
    # step) to amortize per-step overhead and the per-step weight pushes.
    if B >= 256:
        TB = 512 if B >= 512 else 256
        B_pad = _round_up(B, TB)
        if B_pad != B:
            cls1 = jnp.pad(cls1, ((0, B_pad - B), (0, 0)))
            cls2 = jnp.pad(cls2, ((0, B_pad - B), (0, 0)))
    else:
        TB = B
        B_pad = B
    num_tiles = B_pad // TB

    act_dtype = _activation_dtype()
    kernel = _make_kernel(act_dtype)

    w_args = (_as_bf16(params["w_pool"]), params["b_pool"],
              _as_bf16(params["w1"]), params["b1"],
              _as_bf16(params["w2"]), params["b2"],
              _as_bf16(params["w3"]), params["b3"])

    x_spec = pl.BlockSpec((TB, E), lambda i: (i, 0))
    out_specs = [pl.BlockSpec((TB, E), lambda i: (i, 0)),
                 pl.BlockSpec((TB, E), lambda i: (i, 0))]
    out_shape = [jax.ShapeDtypeStruct((B_pad, E), jnp.float32),
                 jax.ShapeDtypeStruct((B_pad, E), jnp.float32)]

    def make_in_specs(single_buffer_weights):
        # Weights / biases are grid-invariant (constant index_map): single-
        # buffer them so they are not double-buffered in VMEM for no reason.
        if single_buffer_weights:
            w_spec = pl.BlockSpec((E, E), lambda i: (0, 0),
                                  pipeline_mode=pl.Buffered(1))
            b_spec = pl.BlockSpec((1, E), lambda i: (0, 0),
                                  pipeline_mode=pl.Buffered(1))
        else:
            w_spec = pl.BlockSpec((E, E), lambda i: (0, 0))
            b_spec = pl.BlockSpec((1, E), lambda i: (0, 0))
        return [x_spec, x_spec, w_spec, b_spec, w_spec, b_spec,
                w_spec, b_spec, w_spec, b_spec]

    # Megacore sharding only pays off with >= 2 row tiles per TensorCore;
    # otherwise it just duplicates the weight DMA on v7x.
    semantics = ("parallel",) if num_tiles >= 4 else ("arbitrary",)

    cost = pl.CostEstimate(
        flops=2 * (2 * B_pad) * E * E * 4,                 # 4 ExE matmuls, 2 texts
        transcendentals=2 * B_pad * E * 3 + 2 * B_pad,     # tanh, 2x gelu, rsqrt
        bytes_accessed=(2 * B_pad * E * 4) * 2 + 4 * E * E * 2 + 4 * E * 4,
    )

    def run(single_buffer_weights):
        return pl.pallas_call(
            kernel,
            out_shape=out_shape,
            grid=(num_tiles,),
            in_specs=make_in_specs(single_buffer_weights),
            out_specs=out_specs,
            compiler_params=pltpu.CompilerParams(
                dimension_semantics=semantics,
                vmem_limit_bytes=48 * 1024 * 1024,
            ),
            cost_estimate=cost,
        )(cls1, cls2, *w_args)

    try:
        o1, o2 = run(True)
    except Exception:
        # Fall back to default double-buffering if Buffered(1) is rejected.
        o1, o2 = run(False)

    text1_features = o1[:B]
    text2_features = o2[:B]
    logit_scale_exp = jnp.exp(params["logit_scale"])       # scalar; no kernel benefit
    return text1_features, text2_features, logit_scale_exp


def init_params(key, E):
    ks = jax.random.split(key, 8)
    std = E ** (-0.5)                                      # matches init_parameters()
    return {
        "w_pool": jax.random.normal(ks[0], (E, E), jnp.float32) * std,
        "b_pool": jax.random.normal(ks[1], (1, E), jnp.float32) * 0.02,
        "w1": jax.random.normal(ks[2], (E, E), jnp.float32) * std,
        "b1": jax.random.normal(ks[3], (1, E), jnp.float32) * 0.02,
        "w2": jax.random.normal(ks[4], (E, E), jnp.float32) * std,
        "b2": jax.random.normal(ks[5], (1, E), jnp.float32) * 0.02,
        "w3": jax.random.normal(ks[6], (E, E), jnp.float32) * std,
        "b3": jax.random.normal(ks[7], (1, E), jnp.float32) * 0.02,
        "logit_scale": jnp.float32(math.log(1.0 / 0.07)),
    }


def prepare_params(params):
    """One-time conversion of the matmul weights to bf16 (MXU input dtype).

    Done ONCE, outside the forward, so each call does not re-stream f32 weights
    through HBM just to down-cast them (biases stay f32).
    """
    out = dict(params)
    for k in ("w_pool", "w1", "w2", "w3"):
        out[k] = params[k].astype(jnp.bfloat16)
    return out


def reference_forward(last_hidden1, last_hidden2, params, act_dtype):
    """Pure-JAX reference with the SAME mixed precision as the kernel."""
    def mm(a, w):
        return jnp.dot(a.astype(jnp.bfloat16), w.astype(jnp.bfloat16),
                       preferred_element_type=jnp.float32)

    def encode(cls):
        pooled = jnp.tanh((mm(cls, params["w_pool"]) + params["b_pool"]).astype(act_dtype))
        h = _gelu((mm(pooled, params["w1"]) + params["b1"]).astype(act_dtype))
        h = _gelu((mm(h, params["w2"]) + params["b2"]).astype(act_dtype))
        h = (mm(h, params["w3"]) + params["b3"]).astype(jnp.float32)
        ss = jnp.sum(h * h, axis=-1, keepdims=True)
        return h * jax.lax.rsqrt(jnp.maximum(ss, 1e-24))

    f1 = encode(last_hidden1[:, 0, :])
    f2 = encode(last_hidden2[:, 0, :])
    return f1, f2, jnp.exp(params["logit_scale"])


if __name__ == "__main__":
    # Small stand-in sizes: E=256 stands in for embed_dim=768 (both multiples
    # of 128 so tiles stay lane-dense), S=8 tokens, batch=2.
    B, S, E = 2, 8, 256

    key = jax.random.PRNGKey(0)
    k1, k2, kp = jax.random.split(key, 3)
    text1_hidden = jax.random.normal(k1, (B, S, E), jnp.float32)
    text2_hidden = jax.random.normal(k2, (B, S, E), jnp.float32)
    params = prepare_params(init_params(kp, E))            # weights -> bf16 ONCE

    f1, f2, scale = clp_clinical_forward(text1_hidden, text2_hidden, params)
    f1, f2, scale = jax.block_until_ready((f1, f2, scale))

    act_dtype = _activation_dtype()
    r1, r2, rscale = reference_forward(text1_hidden, text2_hidden, params, act_dtype)
    assert f1.shape == (B, E) and f2.shape == (B, E)
    assert jnp.allclose(f1, r1, atol=1e-2, rtol=1e-2)
    assert jnp.allclose(f2, r2, atol=1e-2, rtol=1e-2)
    # Outputs are L2-normalized and logit scale matches exp(log(1/0.07)).
    assert jnp.allclose(jnp.sum(f1 * f1, axis=-1), 1.0, atol=1e-3)
    assert jnp.allclose(jnp.sum(f2 * f2, axis=-1), 1.0, atol=1e-3)
    assert jnp.allclose(scale, rscale)

    print("KERNEL_OK")
</pallas_src>

<mosaic_0001>
module attributes {stable_mosaic.version = 11 : i64} {
  func.func @kernel(%arg0: i32, %arg1: memref<2x256xf32, #tpu.memory_space<vmem>>, %arg2: memref<2x256xf32, #tpu.memory_space<vmem>>, %arg3: memref<256x256xbf16, #tpu.memory_space<vmem>>, %arg4: memref<1x256xf32, #tpu.memory_space<vmem>>, %arg5: memref<256x256xbf16, #tpu.memory_space<vmem>>, %arg6: memref<1x256xf32, #tpu.memory_space<vmem>>, %arg7: memref<256x256xbf16, #tpu.memory_space<vmem>>, %arg8: memref<1x256xf32, #tpu.memory_space<vmem>>, %arg9: memref<256x256xbf16, #tpu.memory_space<vmem>>, %arg10: memref<1x256xf32, #tpu.memory_space<vmem>>, %arg11: memref<2x256xf32, #tpu.memory_space<vmem>>, %arg12: memref<2x256xf32, #tpu.memory_space<vmem>>) attributes {dimension_semantics = [#tpu.dimension_semantics<arbitrary>], iteration_bounds = array<i64: 1>, scalar_prefetch = 0 : i64, scratch_operands = 0 : i64, tpu.core_type = #tpu.core_type<tc>, window_params = [{transform_indices = @transform_0, window_bounds = array<i64: 2, 256>}, {transform_indices = @transform_1, window_bounds = array<i64: 2, 256>}, {pipeline_mode = #tpu.pipeline_mode<synchronous>, transform_indices = @transform_2, window_bounds = array<i64: 256, 256>}, {pipeline_mode = #tpu.pipeline_mode<synchronous>, transform_indices = @transform_3, window_bounds = array<i64: 1, 256>}, {pipeline_mode = #tpu.pipeline_mode<synchronous>, transform_indices = @transform_4, window_bounds = array<i64: 256, 256>}, {pipeline_mode = #tpu.pipeline_mode<synchronous>, transform_indices = @transform_5, window_bounds = array<i64: 1, 256>}, {pipeline_mode = #tpu.pipeline_mode<synchronous>, transform_indices = @transform_6, window_bounds = array<i64: 256, 256>}, {pipeline_mode = #tpu.pipeline_mode<synchronous>, transform_indices = @transform_7, window_bounds = array<i64: 1, 256>}, {pipeline_mode = #tpu.pipeline_mode<synchronous>, transform_indices = @transform_8, window_bounds = array<i64: 256, 256>}, {pipeline_mode = #tpu.pipeline_mode<synchronous>, transform_indices = @transform_9, window_bounds = array<i64: 1, 256>}, {transform_indices = @transform_10, window_bounds = array<i64: 2, 256>}, {transform_indices = @transform_11, window_bounds = array<i64: 2, 256>}]} {
    %c0 = arith.constant 0 : index
    %c0_0 = arith.constant 0 : index
    %0 = vector.load %arg3[%c0, %c0_0] : memref<256x256xbf16, #tpu.memory_space<vmem>>, vector<256x256xbf16>
    %c0_1 = arith.constant 0 : index
    %c0_2 = arith.constant 0 : index
    %1 = vector.load %arg5[%c0_1, %c0_2] : memref<256x256xbf16, #tpu.memory_space<vmem>>, vector<256x256xbf16>
    %c0_3 = arith.constant 0 : index
    %c0_4 = arith.constant 0 : index
    %2 = vector.load %arg7[%c0_3, %c0_4] : memref<256x256xbf16, #tpu.memory_space<vmem>>, vector<256x256xbf16>
    %c0_5 = arith.constant 0 : index
    %c0_6 = arith.constant 0 : index
    %3 = vector.load %arg9[%c0_5, %c0_6] : memref<256x256xbf16, #tpu.memory_space<vmem>>, vector<256x256xbf16>
    %c0_7 = arith.constant 0 : index
    %c0_8 = arith.constant 0 : index
    %4 = vector.load %arg4[%c0_7, %c0_8] : memref<1x256xf32, #tpu.memory_space<vmem>>, vector<1x256xf32>
    %c0_9 = arith.constant 0 : index
    %c0_10 = arith.constant 0 : index
    %5 = vector.load %arg6[%c0_9, %c0_10] : memref<1x256xf32, #tpu.memory_space<vmem>>, vector<1x256xf32>
    %c0_11 = arith.constant 0 : index
    %c0_12 = arith.constant 0 : index
    %6 = vector.load %arg8[%c0_11, %c0_12] : memref<1x256xf32, #tpu.memory_space<vmem>>, vector<1x256xf32>
    %c0_13 = arith.constant 0 : index
    %c0_14 = arith.constant 0 : index
    %7 = vector.load %arg10[%c0_13, %c0_14] : memref<1x256xf32, #tpu.memory_space<vmem>>, vector<1x256xf32>
    %c0_15 = arith.constant 0 : index
    %c0_16 = arith.constant 0 : index
    %8 = vector.load %arg1[%c0_15, %c0_16] : memref<2x256xf32, #tpu.memory_space<vmem>>, vector<2x256xf32>
    %9 = arith.truncf %8 : vector<2x256xf32> to vector<2x256xbf16>
    %cst = arith.constant dense<0.000000e+00> : vector<2x256xf32>
    %10 = tpu.matmul %9, %0, %cst {dimension_numbers = #tpu.dot_dimension_numbers<[1], [0], [0], [1], [0, 0, 1, 1], [], []>} : vector<2x256xbf16>, vector<256x256xbf16>, vector<2x256xf32> -> vector<2x256xf32>
    %11 = vector.broadcast %4 : vector<1x256xf32> to vector<2x256xf32>
    %12 = arith.addf %10, %11 : vector<2x256xf32>
    %13 = math.tanh %12 : vector<2x256xf32>
    %14 = arith.truncf %13 : vector<2x256xf32> to vector<2x256xbf16>
    %cst_17 = arith.constant dense<0.000000e+00> : vector<2x256xf32>
    %15 = tpu.matmul %14, %1, %cst_17 {dimension_numbers = #tpu.dot_dimension_numbers<[1], [0], [0], [1], [0, 0, 1, 1], [], []>} : vector<2x256xbf16>, vector<256x256xbf16>, vector<2x256xf32> -> vector<2x256xf32>
    %16 = vector.broadcast %5 : vector<1x256xf32> to vector<2x256xf32>
    %17 = arith.addf %15, %16 : vector<2x256xf32>
    %cst_18 = arith.constant 5.000000e-01 : f32
    %18 = vector.broadcast %cst_18 : f32 to vector<2x256xf32>
    %19 = arith.mulf %18, %17 : vector<2x256xf32>
    %cst_19 = arith.constant 4.471500e-02 : f32
    %20 = vector.broadcast %cst_19 : f32 to vector<2x256xf32>
    %21 = arith.mulf %20, %17 : vector<2x256xf32>
    %22 = arith.mulf %21, %17 : vector<2x256xf32>
    %23 = arith.mulf %22, %17 : vector<2x256xf32>
    %24 = arith.addf %17, %23 : vector<2x256xf32>
    %cst_20 = arith.constant 0.797884583 : f32
    %25 = vector.broadcast %cst_20 : f32 to vector<2x256xf32>
    %26 = arith.mulf %25, %24 : vector<2x256xf32>
    %27 = math.tanh %26 : vector<2x256xf32>
    %cst_21 = arith.constant 1.000000e+00 : f32
    %28 = vector.broadcast %cst_21 : f32 to vector<2x256xf32>
    %29 = arith.addf %28, %27 : vector<2x256xf32>
    %30 = arith.mulf %19, %29 : vector<2x256xf32>
    %31 = arith.truncf %30 : vector<2x256xf32> to vector<2x256xbf16>
    %cst_22 = arith.constant dense<0.000000e+00> : vector<2x256xf32>
    %32 = tpu.matmul %31, %2, %cst_22 {dimension_numbers = #tpu.dot_dimension_numbers<[1], [0], [0], [1], [0, 0, 1, 1], [], []>} : vector<2x256xbf16>, vector<256x256xbf16>, vector<2x256xf32> -> vector<2x256xf32>
    %33 = vector.broadcast %6 : vector<1x256xf32> to vector<2x256xf32>
    %34 = arith.addf %32, %33 : vector<2x256xf32>
    %cst_23 = arith.constant 5.000000e-01 : f32
    %35 = vector.broadcast %cst_23 : f32 to vector<2x256xf32>
    %36 = arith.mulf %35, %34 : vector<2x256xf32>
    %cst_24 = arith.constant 4.471500e-02 : f32
    %37 = vector.broadcast %cst_24 : f32 to vector<2x256xf32>
    %38 = arith.mulf %37, %34 : vector<2x256xf32>
    %39 = arith.mulf %38, %34 : vector<2x256xf32>
    %40 = arith.mulf %39, %34 : vector<2x256xf32>
    %41 = arith.addf %34, %40 : vector<2x256xf32>
    %cst_25 = arith.constant 0.797884583 : f32
    %42 = vector.broadcast %cst_25 : f32 to vector<2x256xf32>
    %43 = arith.mulf %42, %41 : vector<2x256xf32>
    %44 = math.tanh %43 : vector<2x256xf32>
    %cst_26 = arith.constant 1.000000e+00 : f32
    %45 = vector.broadcast %cst_26 : f32 to vector<2x256xf32>
    %46 = arith.addf %45, %44 : vector<2x256xf32>
    %47 = arith.mulf %36, %46 : vector<2x256xf32>
    %48 = arith.truncf %47 : vector<2x256xf32> to vector<2x256xbf16>
    %cst_27 = arith.constant dense<0.000000e+00> : vector<2x256xf32>
    %49 = tpu.matmul %48, %3, %cst_27 {dimension_numbers = #tpu.dot_dimension_numbers<[1], [0], [0], [1], [0, 0, 1, 1], [], []>} : vector<2x256xbf16>, vector<256x256xbf16>, vector<2x256xf32> -> vector<2x256xf32>
    %50 = vector.broadcast %7 : vector<1x256xf32> to vector<2x256xf32>
    %51 = arith.addf %49, %50 : vector<2x256xf32>
    %52 = arith.mulf %51, %51 : vector<2x256xf32>
    %cst_28 = arith.constant dense<0.000000e+00> : vector<2xf32>
    %53 = vector.multi_reduction <add>, %52, %cst_28 [1] : vector<2x256xf32> to vector<2xf32>
    %54 = vector.shape_cast %53 : vector<2xf32> to vector<2x1xf32>
    %cst_29 = arith.constant 1.000000e-24 : f32
    %55 = vector.broadcast %cst_29 : f32 to vector<2x1xf32>
    %56 = arith.maximumf %54, %55 : vector<2x1xf32>
    %57 = math.rsqrt %56 : vector<2x1xf32>
    %58 = vector.broadcast %57 : vector<2x1xf32> to vector<2x256xf32>
    %59 = arith.mulf %51, %58 : vector<2x256xf32>
    %c0_30 = arith.constant 0 : index
    %c0_31 = arith.constant 0 : index
    %60 = vector.load %arg11[%c0_30, %c0_31] : memref<2x256xf32, #tpu.memory_space<vmem>>, vector<2x256xf32>
    tpu.vector_store %arg11[%c0_30, %c0_31], %59 {strides = array<i32>} : memref<2x256xf32, #tpu.memory_space<vmem>>, vector<2x256xf32>,
    %c0_32 = arith.constant 0 : index
    %c0_33 = arith.constant 0 : index
    %61 = vector.load %arg2[%c0_32, %c0_33] : memref<2x256xf32, #tpu.memory_space<vmem>>, vector<2x256xf32>
    %62 = arith.truncf %61 : vector<2x256xf32> to vector<2x256xbf16>
    %cst_34 = arith.constant dense<0.000000e+00> : vector<2x256xf32>
    %63 = tpu.matmul %62, %0, %cst_34 {dimension_numbers = #tpu.dot_dimension_numbers<[1], [0], [0], [1], [0, 0, 1, 1], [], []>} : vector<2x256xbf16>, vector<256x256xbf16>, vector<2x256xf32> -> vector<2x256xf32>
    %64 = vector.broadcast %4 : vector<1x256xf32> to vector<2x256xf32>
    %65 = arith.addf %63, %64 : vector<2x256xf32>
    %66 = math.tanh %65 : vector<2x256xf32>
    %67 = arith.truncf %66 : vector<2x256xf32> to vector<2x256xbf16>
    %cst_35 = arith.constant dense<0.000000e+00> : vector<2x256xf32>
    %68 = tpu.matmul %67, %1, %cst_35 {dimension_numbers = #tpu.dot_dimension_numbers<[1], [0], [0], [1], [0, 0, 1, 1], [], []>} : vector<2x256xbf16>, vector<256x256xbf16>, vector<2x256xf32> -> vector<2x256xf32>
    %69 = vector.broadcast %5 : vector<1x256xf32> to vector<2x256xf32>
    %70 = arith.addf %68, %69 : vector<2x256xf32>
    %cst_36 = arith.constant 5.000000e-01 : f32
    %71 = vector.broadcast %cst_36 : f32 to vector<2x256xf32>
    %72 = arith.mulf %71, %70 : vector<2x256xf32>
    %cst_37 = arith.constant 4.471500e-02 : f32
    %73 = vector.broadcast %cst_37 : f32 to vector<2x256xf32>
    %74 = arith.mulf %73, %70 : vector<2x256xf32>
    %75 = arith.mulf %74, %70 : vector<2x256xf32>
    %76 = arith.mulf %75, %70 : vector<2x256xf32>
    %77 = arith.addf %70, %76 : vector<2x256xf32>
    %cst_38 = arith.constant 0.797884583 : f32
    %78 = vector.broadcast %cst_38 : f32 to vector<2x256xf32>
    %79 = arith.mulf %78, %77 : vector<2x256xf32>
    %80 = math.tanh %79 : vector<2x256xf32>
    %cst_39 = arith.constant 1.000000e+00 : f32
    %81 = vector.broadcast %cst_39 : f32 to vector<2x256xf32>
    %82 = arith.addf %81, %80 : vector<2x256xf32>
    %83 = arith.mulf %72, %82 : vector<2x256xf32>
    %84 = arith.truncf %83 : vector<2x256xf32> to vector<2x256xbf16>
    %cst_40 = arith.constant dense<0.000000e+00> : vector<2x256xf32>
    %85 = tpu.matmul %84, %2, %cst_40 {dimension_numbers = #tpu.dot_dimension_numbers<[1], [0], [0], [1], [0, 0, 1, 1], [], []>} : vector<2x256xbf16>, vector<256x256xbf16>, vector<2x256xf32> -> vector<2x256xf32>
    %86 = vector.broadcast %6 : vector<1x256xf32> to vector<2x256xf32>
    %87 = arith.addf %85, %86 : vector<2x256xf32>
    %cst_41 = arith.constant 5.000000e-01 : f32
    %88 = vector.broadcast %cst_41 : f32 to vector<2x256xf32>
    %89 = arith.mulf %88, %87 : vector<2x256xf32>
    %cst_42 = arith.constant 4.471500e-02 : f32
    %90 = vector.broadcast %cst_42 : f32 to vector<2x256xf32>
    %91 = arith.mulf %90, %87 : vector<2x256xf32>
    %92 = arith.mulf %91, %87 : vector<2x256xf32>
    %93 = arith.mulf %92, %87 : vector<2x256xf32>
    %94 = arith.addf %87, %93 : vector<2x256xf32>
    %cst_43 = arith.constant 0.797884583 : f32
    %95 = vector.broadcast %cst_43 : f32 to vector<2x256xf32>
    %96 = arith.mulf %95, %94 : vector<2x256xf32>
    %97 = math.tanh %96 : vector<2x256xf32>
    %cst_44 = arith.constant 1.000000e+00 : f32
    %98 = vector.broadcast %cst_44 : f32 to vector<2x256xf32>
    %99 = arith.addf %98, %97 : vector<2x256xf32>
    %100 = arith.mulf %89, %99 : vector<2x256xf32>
    %101 = arith.truncf %100 : vector<2x256xf32> to vector<2x256xbf16>
    %cst_45 = arith.constant dense<0.000000e+00> : vector<2x256xf32>
    %102 = tpu.matmul %101, %3, %cst_45 {dimension_numbers = #tpu.dot_dimension_numbers<[1], [0], [0], [1], [0, 0, 1, 1], [], []>} : vector<2x256xbf16>, vector<256x256xbf16>, vector<2x256xf32> -> vector<2x256xf32>
    %103 = vector.broadcast %7 : vector<1x256xf32> to vector<2x256xf32>
    %104 = arith.addf %102, %103 : vector<2x256xf32>
    %105 = arith.mulf %104, %104 : vector<2x256xf32>
    %cst_46 = arith.constant dense<0.000000e+00> : vector<2xf32>
    %106 = vector.multi_reduction <add>, %105, %cst_46 [1] : vector<2x256xf32> to vector<2xf32>
    %107 = vector.shape_cast %106 : vector<2xf32> to vector<2x1xf32>
    %cst_47 = arith.constant 1.000000e-24 : f32
    %108 = vector.broadcast %cst_47 : f32 to vector<2x1xf32>
    %109 = arith.maximumf %107, %108 : vector<2x1xf32>
    %110 = math.rsqrt %109 : vector<2x1xf32>
    %111 = vector.broadcast %110 : vector<2x1xf32> to vector<2x256xf32>
    %112 = arith.mulf %104, %111 : vector<2x256xf32>
    %c0_48 = arith.constant 0 : index
    %c0_49 = arith.constant 0 : index
    %113 = vector.load %arg12[%c0_48, %c0_49] : memref<2x256xf32, #tpu.memory_space<vmem>>, vector<2x256xf32>
    tpu.vector_store %arg12[%c0_48, %c0_49], %112 {strides = array<i32>} : memref<2x256xf32, #tpu.memory_space<vmem>>, vector<2x256xf32>,
    return
  }
  func.func @transform_0(%arg0: i32) -> (i32, i32) {
    %c0_i32 = arith.constant 0 : i32
    %c0_i32_0 = arith.constant 0 : i32
    return %arg0, %c0_i32 : i32, i32
  }
  func.func @transform_1(%arg0: i32) -> (i32, i32) {
    %c0_i32 = arith.constant 0 : i32
    %c0_i32_0 = arith.constant 0 : i32
    return %arg0, %c0_i32 : i32, i32
  }
  func.func @transform_2(%arg0: i32) -> (i32, i32) {
    %c0_i32 = arith.constant 0 : i32
    %c0_i32_0 = arith.constant 0 : i32
    %c0_i32_1 = arith.constant 0 : i32
    return %c0_i32, %c0_i32_0 : i32, i32
  }
  func.func @transform_3(%arg0: i32) -> (i32, i32) {
    %c0_i32 = arith.constant 0 : i32
    %c0_i32_0 = arith.constant 0 : i32
    %c0_i32_1 = arith.constant 0 : i32
    return %c0_i32, %c0_i32_0 : i32, i32
  }
  func.func @transform_4(%arg0: i32) -> (i32, i32) {
    %c0_i32 = arith.constant 0 : i32
    %c0_i32_0 = arith.constant 0 : i32
    %c0_i32_1 = arith.constant 0 : i32
    return %c0_i32, %c0_i32_0 : i32, i32
  }
  func.func @transform_5(%arg0: i32) -> (i32, i32) {
    %c0_i32 = arith.constant 0 : i32
    %c0_i32_0 = arith.constant 0 : i32
    %c0_i32_1 = arith.constant 0 : i32
    return %c0_i32, %c0_i32_0 : i32, i32
  }
  func.func @transform_6(%arg0: i32) -> (i32, i32) {
    %c0_i32 = arith.constant 0 : i32
    %c0_i32_0 = arith.constant 0 : i32
    %c0_i32_1 = arith.constant 0 : i32
    return %c0_i32, %c0_i32_0 : i32, i32
  }
  func.func @transform_7(%arg0: i32) -> (i32, i32) {
    %c0_i32 = arith.constant 0 : i32
    %c0_i32_0 = arith.constant 0 : i32
    %c0_i32_1 = arith.constant 0 : i32
    return %c0_i32, %c0_i32_0 : i32, i32
  }
  func.func @transform_8(%arg0: i32) -> (i32, i32) {
    %c0_i32 = arith.constant 0 : i32
    %c0_i32_0 = arith.constant 0 : i32
    %c0_i32_1 = arith.constant 0 : i32
    return %c0_i32, %c0_i32_0 : i32, i32
  }
  func.func @transform_9(%arg0: i32) -> (i32, i32) {
    %c0_i32 = arith.constant 0 : i32
    %c0_i32_0 = arith.constant 0 : i32
    %c0_i32_1 = arith.constant 0 : i32
    return %c0_i32, %c0_i32_0 : i32, i32
  }
  func.func @transform_10(%arg0: i32) -> (i32, i32) {
    %c0_i32 = arith.constant 0 : i32
    %c0_i32_0 = arith.constant 0 : i32
    return %arg0, %c0_i32 : i32, i32
  }
  func.func @transform_11(%arg0: i32) -> (i32, i32) {
    %c0_i32 = arith.constant 0 : i32
    %c0_i32_0 = arith.constant 0 : i32
    return %arg0, %c0_i32 : i32, i32
  }
}

module attributes {stable_mosaic.version = 11 : i64} {
  func.func @kernel(%arg0: i32, %arg1: memref<2x256xf32, #tpu.memory_space<vmem>>, %arg2: memref<2x256xf32, #tpu.memory_space<vmem>>, %arg3: memref<256x256xbf16, #tpu.memory_space<vmem>>, %arg4: memref<1x256xf32, #tpu.memory_space<vmem>>, %arg5: memref<256x256xbf16, #tpu.memory_space<vmem>>, %arg6: memref<1x256xf32, #tpu.memory_space<vmem>>, %arg7: memref<256x256xbf16, #tpu.memory_space<vmem>>, %arg8: memref<1x256xf32, #tpu.memory_space<vmem>>, %arg9: memref<256x256xbf16, #tpu.memory_space<vmem>>, %arg10: memref<1x256xf32, #tpu.memory_space<vmem>>, %arg11: memref<2x256xf32, #tpu.memory_space<vmem>>, %arg12: memref<2x256xf32, #tpu.memory_space<vmem>>) attributes {dimension_semantics = [#tpu.dimension_semantics<arbitrary>], iteration_bounds = array<i64: 1>, scalar_prefetch = 0 : i64, scratch_operands = 0 : i64, tpu.core_type = #tpu.core_type<tc>, window_params = [{transform_indices = @transform_0, window_bounds = array<i64: 2, 256>}, {transform_indices = @transform_1, window_bounds = array<i64: 2, 256>}, {pipeline_mode = #tpu.pipeline_mode<synchronous>, transform_indices = @transform_2, window_bounds = array<i64: 256, 256>}, {pipeline_mode = #tpu.pipeline_mode<synchronous>, transform_indices = @transform_3, window_bounds = array<i64: 1, 256>}, {pipeline_mode = #tpu.pipeline_mode<synchronous>, transform_indices = @transform_4, window_bounds = array<i64: 256, 256>}, {pipeline_mode = #tpu.pipeline_mode<synchronous>, transform_indices = @transform_5, window_bounds = array<i64: 1, 256>}, {pipeline_mode = #tpu.pipeline_mode<synchronous>, transform_indices = @transform_6, window_bounds = array<i64: 256, 256>}, {pipeline_mode = #tpu.pipeline_mode<synchronous>, transform_indices = @transform_7, window_bounds = array<i64: 1, 256>}, {pipeline_mode = #tpu.pipeline_mode<synchronous>, transform_indices = @transform_8, window_bounds = array<i64: 256, 256>}, {pipeline_mode = #tpu.pipeline_mode<synchronous>, transform_indices = @transform_9, window_bounds = array<i64: 1, 256>}, {transform_indices = @transform_10, window_bounds = array<i64: 2, 256>}, {transform_indices = @transform_11, window_bounds = array<i64: 2, 256>}]} {
    %c0 = arith.constant 0 : index
    %c0_0 = arith.constant 0 : index
    %0 = vector.load %arg3[%c0, %c0_0] : memref<256x256xbf16, #tpu.memory_space<vmem>>, vector<256x256xbf16>
    %c0_1 = arith.constant 0 : index
    %c0_2 = arith.constant 0 : index
    %1 = vector.load %arg5[%c0_1, %c0_2] : memref<256x256xbf16, #tpu.memory_space<vmem>>, vector<256x256xbf16>
    %c0_3 = arith.constant 0 : index
    %c0_4 = arith.constant 0 : index
    %2 = vector.load %arg7[%c0_3, %c0_4] : memref<256x256xbf16, #tpu.memory_space<vmem>>, vector<256x256xbf16>
    %c0_5 = arith.constant 0 : index
    %c0_6 = arith.constant 0 : index
    %3 = vector.load %arg9[%c0_5, %c0_6] : memref<256x256xbf16, #tpu.memory_space<vmem>>, vector<256x256xbf16>
    %c0_7 = arith.constant 0 : index
    %c0_8 = arith.constant 0 : index
    %4 = vector.load %arg4[%c0_7, %c0_8] : memref<1x256xf32, #tpu.memory_space<vmem>>, vector<1x256xf32>
    %c0_9 = arith.constant 0 : index
    %c0_10 = arith.constant 0 : index
    %5 = vector.load %arg6[%c0_9, %c0_10] : memref<1x256xf32, #tpu.memory_space<vmem>>, vector<1x256xf32>
    %c0_11 = arith.constant 0 : index
    %c0_12 = arith.constant 0 : index
    %6 = vector.load %arg8[%c0_11, %c0_12] : memref<1x256xf32, #tpu.memory_space<vmem>>, vector<1x256xf32>
    %c0_13 = arith.constant 0 : index
    %c0_14 = arith.constant 0 : index
    %7 = vector.load %arg10[%c0_13, %c0_14] : memref<1x256xf32, #tpu.memory_space<vmem>>, vector<1x256xf32>
    %c0_15 = arith.constant 0 : index
    %c0_16 = arith.constant 0 : index
    %8 = vector.load %arg1[%c0_15, %c0_16] : memref<2x256xf32, #tpu.memory_space<vmem>>, vector<2x256xf32>
    %9 = arith.truncf %8 : vector<2x256xf32> to vector<2x256xbf16>
    %cst = arith.constant dense<0.000000e+00> : vector<2x256xf32>
    %10 = tpu.matmul %9, %0, %cst {dimension_numbers = #tpu.dot_dimension_numbers<[1], [0], [0], [1], [0, 0, 1, 1], [], []>} : vector<2x256xbf16>, vector<256x256xbf16>, vector<2x256xf32> -> vector<2x256xf32>
    %11 = vector.broadcast %4 : vector<1x256xf32> to vector<2x256xf32>
    %12 = arith.addf %10, %11 : vector<2x256xf32>
    %13 = math.tanh %12 : vector<2x256xf32>
    %14 = arith.truncf %13 : vector<2x256xf32> to vector<2x256xbf16>
    %cst_17 = arith.constant dense<0.000000e+00> : vector<2x256xf32>
    %15 = tpu.matmul %14, %1, %cst_17 {dimension_numbers = #tpu.dot_dimension_numbers<[1], [0], [0], [1], [0, 0, 1, 1], [], []>} : vector<2x256xbf16>, vector<256x256xbf16>, vector<2x256xf32> -> vector<2x256xf32>
    %16 = vector.broadcast %5 : vector<1x256xf32> to vector<2x256xf32>
    %17 = arith.addf %15, %16 : vector<2x256xf32>
    %cst_18 = arith.constant 5.000000e-01 : f32
    %18 = vector.broadcast %cst_18 : f32 to vector<2x256xf32>
    %19 = arith.mulf %18, %17 : vector<2x256xf32>
    %cst_19 = arith.constant 4.471500e-02 : f32
    %20 = vector.broadcast %cst_19 : f32 to vector<2x256xf32>
    %21 = arith.mulf %20, %17 : vector<2x256xf32>
    %22 = arith.mulf %21, %17 : vector<2x256xf32>
    %23 = arith.mulf %22, %17 : vector<2x256xf32>
    %24 = arith.addf %17, %23 : vector<2x256xf32>
    %cst_20 = arith.constant 0.797884583 : f32
    %25 = vector.broadcast %cst_20 : f32 to vector<2x256xf32>
    %26 = arith.mulf %25, %24 : vector<2x256xf32>
    %27 = math.tanh %26 : vector<2x256xf32>
    %cst_21 = arith.constant 1.000000e+00 : f32
    %28 = vector.broadcast %cst_21 : f32 to vector<2x256xf32>
    %29 = arith.addf %28, %27 : vector<2x256xf32>
    %30 = arith.mulf %19, %29 : vector<2x256xf32>
    %31 = arith.truncf %30 : vector<2x256xf32> to vector<2x256xbf16>
    %cst_22 = arith.constant dense<0.000000e+00> : vector<2x256xf32>
    %32 = tpu.matmul %31, %2, %cst_22 {dimension_numbers = #tpu.dot_dimension_numbers<[1], [0], [0], [1], [0, 0, 1, 1], [], []>} : vector<2x256xbf16>, vector<256x256xbf16>, vector<2x256xf32> -> vector<2x256xf32>
    %33 = vector.broadcast %6 : vector<1x256xf32> to vector<2x256xf32>
    %34 = arith.addf %32, %33 : vector<2x256xf32>
    %cst_23 = arith.constant 5.000000e-01 : f32
    %35 = vector.broadcast %cst_23 : f32 to vector<2x256xf32>
    %36 = arith.mulf %35, %34 : vector<2x256xf32>
    %cst_24 = arith.constant 4.471500e-02 : f32
    %37 = vector.broadcast %cst_24 : f32 to vector<2x256xf32>
    %38 = arith.mulf %37, %34 : vector<2x256xf32>
    %39 = arith.mulf %38, %34 : vector<2x256xf32>
    %40 = arith.mulf %39, %34 : vector<2x256xf32>
    %41 = arith.addf %34, %40 : vector<2x256xf32>
    %cst_25 = arith.constant 0.797884583 : f32
    %42 = vector.broadcast %cst_25 : f32 to vector<2x256xf32>
    %43 = arith.mulf %42, %41 : vector<2x256xf32>
    %44 = math.tanh %43 : vector<2x256xf32>
    %cst_26 = arith.constant 1.000000e+00 : f32
    %45 = vector.broadcast %cst_26 : f32 to vector<2x256xf32>
    %46 = arith.addf %45, %44 : vector<2x256xf32>
    %47 = arith.mulf %36, %46 : vector<2x256xf32>
    %48 = arith.truncf %47 : vector<2x256xf32> to vector<2x256xbf16>
    %cst_27 = arith.constant dense<0.000000e+00> : vector<2x256xf32>
    %49 = tpu.matmul %48, %3, %cst_27 {dimension_numbers = #tpu.dot_dimension_numbers<[1], [0], [0], [1], [0, 0, 1, 1], [], []>} : vector<2x256xbf16>, vector<256x256xbf16>, vector<2x256xf32> -> vector<2x256xf32>
    %50 = vector.broadcast %7 : vector<1x256xf32> to vector<2x256xf32>
    %51 = arith.addf %49, %50 : vector<2x256xf32>
    %52 = arith.mulf %51, %51 : vector<2x256xf32>
    %cst_28 = arith.constant dense<0.000000e+00> : vector<2xf32>
    %53 = vector.multi_reduction <add>, %52, %cst_28 [1] : vector<2x256xf32> to vector<2xf32>
    %54 = vector.shape_cast %53 : vector<2xf32> to vector<2x1xf32>
    %cst_29 = arith.constant 1.000000e-24 : f32
    %55 = vector.broadcast %cst_29 : f32 to vector<2x1xf32>
    %56 = arith.maximumf %54, %55 : vector<2x1xf32>
    %57 = math.rsqrt %56 : vector<2x1xf32>
    %58 = vector.broadcast %57 : vector<2x1xf32> to vector<2x256xf32>
    %59 = arith.mulf %51, %58 : vector<2x256xf32>
    %c0_30 = arith.constant 0 : index
    %c0_31 = arith.constant 0 : index
    %60 = vector.load %arg11[%c0_30, %c0_31] : memref<2x256xf32, #tpu.memory_space<vmem>>, vector<2x256xf32>
    tpu.vector_store %arg11[%c0_30, %c0_31], %59 {strides = array<i32>} : memref<2x256xf32, #tpu.memory_space<vmem>>, vector<2x256xf32>,
    %c0_32 = arith.constant 0 : index
    %c0_33 = arith.constant 0 : index
    %61 = vector.load %arg2[%c0_32, %c0_33] : memref<2x256xf32, #tpu.memory_space<vmem>>, vector<2x256xf32>
    %62 = arith.truncf %61 : vector<2x256xf32> to vector<2x256xbf16>
    %cst_34 = arith.constant dense<0.000000e+00> : vector<2x256xf32>
    %63 = tpu.matmul %62, %0, %cst_34 {dimension_numbers = #tpu.dot_dimension_numbers<[1], [0], [0], [1], [0, 0, 1, 1], [], []>} : vector<2x256xbf16>, vector<256x256xbf16>, vector<2x256xf32> -> vector<2x256xf32>
    %64 = vector.broadcast %4 : vector<1x256xf32> to vector<2x256xf32>
    %65 = arith.addf %63, %64 : vector<2x256xf32>
    %66 = math.tanh %65 : vector<2x256xf32>
    %67 = arith.truncf %66 : vector<2x256xf32> to vector<2x256xbf16>
    %cst_35 = arith.constant dense<0.000000e+00> : vector<2x256xf32>
    %68 = tpu.matmul %67, %1, %cst_35 {dimension_numbers = #tpu.dot_dimension_numbers<[1], [0], [0], [1], [0, 0, 1, 1], [], []>} : vector<2x256xbf16>, vector<256x256xbf16>, vector<2x256xf32> -> vector<2x256xf32>
    %69 = vector.broadcast %5 : vector<1x256xf32> to vector<2x256xf32>
    %70 = arith.addf %68, %69 : vector<2x256xf32>
    %cst_36 = arith.constant 5.000000e-01 : f32
    %71 = vector.broadcast %cst_36 : f32 to vector<2x256xf32>
    %72 = arith.mulf %71, %70 : vector<2x256xf32>
    %cst_37 = arith.constant 4.471500e-02 : f32
    %73 = vector.broadcast %cst_37 : f32 to vector<2x256xf32>
    %74 = arith.mulf %73, %70 : vector<2x256xf32>
    %75 = arith.mulf %74, %70 : vector<2x256xf32>
    %76 = arith.mulf %75, %70 : vector<2x256xf32>
    %77 = arith.addf %70, %76 : vector<2x256xf32>
    %cst_38 = arith.constant 0.797884583 : f32
    %78 = vector.broadcast %cst_38 : f32 to vector<2x256xf32>
    %79 = arith.mulf %78, %77 : vector<2x256xf32>
    %80 = math.tanh %79 : vector<2x256xf32>
    %cst_39 = arith.constant 1.000000e+00 : f32
    %81 = vector.broadcast %cst_39 : f32 to vector<2x256xf32>
    %82 = arith.addf %81, %80 : vector<2x256xf32>
    %83 = arith.mulf %72, %82 : vector<2x256xf32>
    %84 = arith.truncf %83 : vector<2x256xf32> to vector<2x256xbf16>
    %cst_40 = arith.constant dense<0.000000e+00> : vector<2x256xf32>
    %85 = tpu.matmul %84, %2, %cst_40 {dimension_numbers = #tpu.dot_dimension_numbers<[1], [0], [0], [1], [0, 0, 1, 1], [], []>} : vector<2x256xbf16>, vector<256x256xbf16>, vector<2x256xf32> -> vector<2x256xf32>
    %86 = vector.broadcast %6 : vector<1x256xf32> to vector<2x256xf32>
    %87 = arith.addf %85, %86 : vector<2x256xf32>
    %cst_41 = arith.constant 5.000000e-01 : f32
    %88 = vector.broadcast %cst_41 : f32 to vector<2x256xf32>
    %89 = arith.mulf %88, %87 : vector<2x256xf32>
    %cst_42 = arith.constant 4.471500e-02 : f32
    %90 = vector.broadcast %cst_42 : f32 to vector<2x256xf32>
    %91 = arith.mulf %90, %87 : vector<2x256xf32>
    %92 = arith.mulf %91, %87 : vector<2x256xf32>
    %93 = arith.mulf %92, %87 : vector<2x256xf32>
    %94 = arith.addf %87, %93 : vector<2x256xf32>
    %cst_43 = arith.constant 0.797884583 : f32
    %95 = vector.broadcast %cst_43 : f32 to vector<2x256xf32>
    %96 = arith.mulf %95, %94 : vector<2x256xf32>
    %97 = math.tanh %96 : vector<2x256xf32>
    %cst_44 = arith.constant 1.000000e+00 : f32
    %98 = vector.broadcast %cst_44 : f32 to vector<2x256xf32>
    %99 = arith.addf %98, %97 : vector<2x256xf32>
    %100 = arith.mulf %89, %99 : vector<2x256xf32>
    %101 = arith.truncf %100 : vector<2x256xf32> to vector<2x256xbf16>
    %cst_45 = arith.constant dense<0.000000e+00> : vector<2x256xf32>
    %102 = tpu.matmul %101, %3, %cst_45 {dimension_numbers = #tpu.dot_dimension_numbers<[1], [0], [0], [1], [0, 0, 1, 1], [], []>} : vector<2x256xbf16>, vector<256x256xbf16>, vector<2x256xf32> -> vector<2x256xf32>
    %103 = vector.broadcast %7 : vector<1x256xf32> to vector<2x256xf32>
    %104 = arith.addf %102, %103 : vector<2x256xf32>
    %105 = arith.mulf %104, %104 : vector<2x256xf32>
    %cst_46 = arith.constant dense<0.000000e+00> : vector<2xf32>
    %106 = vector.multi_reduction <add>, %105, %cst_46 [1] : vector<2x256xf32> to vector<2xf32>
    %107 = vector.shape_cast %106 : vector<2xf32> to vector<2x1xf32>
    %cst_47 = arith.constant 1.000000e-24 : f32
    %108 = vector.broadcast %cst_47 : f32 to vector<2x1xf32>
    %109 = arith.maximumf %107, %108 : vector<2x1xf32>
    %110 = math.rsqrt %109 : vector<2x1xf32>
    %111 = vector.broadcast %110 : vector<2x1xf32> to vector<2x256xf32>
    %112 = arith.mulf %104, %111 : vector<2x256xf32>
    %c0_48 = arith.constant 0 : index
    %c0_49 = arith.constant 0 : index
    %113 = vector.load %arg12[%c0_48, %c0_49] : memref<2x256xf32, #tpu.memory_space<vmem>>, vector<2x256xf32>
    tpu.vector_store %arg12[%c0_48, %c0_49], %112 {strides = array<i32>} : memref<2x256xf32, #tpu.memory_space<vmem>>, vector<2x256xf32>,
    return
  }
  func.func @transform_0(%arg0: i32) -> (i32, i32) {
    %c0_i32 = arith.constant 0 : i32
    %c0_i32_0 = arith.constant 0 : i32
    return %arg0, %c0_i32 : i32, i32
  }
  func.func @transform_1(%arg0: i32) -> (i32, i32) {
    %c0_i32 = arith.constant 0 : i32
    %c0_i32_0 = arith.constant 0 : i32
    return %arg0, %c0_i32 : i32, i32
  }
  func.func @transform_2(%arg0: i32) -> (i32, i32) {
    %c0_i32 = arith.constant 0 : i32
    %c0_i32_0 = arith.constant 0 : i32
    %c0_i32_1 = arith.constant 0 : i32
    return %c0_i32, %c0_i32_0 : i32, i32
  }
  func.func @transform_3(%arg0: i32) -> (i32, i32) {
    %c0_i32 = arith.constant 0 : i32
    %c0_i32_0 = arith.constant 0 : i32
    %c0_i32_1 = arith.constant 0 : i32
    return %c0_i32, %c0_i32_0 : i32, i32
  }
  func.func @transform_4(%arg0: i32) -> (i32, i32) {
    %c0_i32 = arith.constant 0 : i32
    %c0_i32_0 = arith.constant 0 : i32
    %c0_i32_1 = arith.constant 0 : i32
    return %c0_i32, %c0_i32_0 : i32, i32
  }
  func.func @transform_5(%arg0: i32) -> (i32, i32) {
    %c0_i32 = arith.constant 0 : i32
    %c0_i32_0 = arith.constant 0 : i32
    %c0_i32_1 = arith.constant 0 : i32
    return %c0_i32, %c0_i32_0 : i32, i32
  }
  func.func @transform_6(%arg0: i32) -> (i32, i32) {
    %c0_i32 = arith.constant 0 : i32
    %c0_i32_0 = arith.constant 0 : i32
    %c0_i32_1 = arith.constant 0 : i32
    return %c0_i32, %c0_i32_0 : i32, i32
  }
  func.func @transform_7(%arg0: i32) -> (i32, i32) {
    %c0_i32 = arith.constant 0 : i32
    %c0_i32_0 = arith.constant 0 : i32
    %c0_i32_1 = arith.constant 0 : i32
    return %c0_i32, %c0_i32_0 : i32, i32
  }
  func.func @transform_8(%arg0: i32) -> (i32, i32) {
    %c0_i32 = arith.constant 0 : i32
    %c0_i32_0 = arith.constant 0 : i32
    %c0_i32_1 = arith.constant 0 : i32
    return %c0_i32, %c0_i32_0 : i32, i32
  }
  func.func @transform_9(%arg0: i32) -> (i32, i32) {
    %c0_i32 = arith.constant 0 : i32
    %c0_i32_0 = arith.constant 0 : i32
    %c0_i32_1 = arith.constant 0 : i32
    return %c0_i32, %c0_i32_0 : i32, i32
  }
  func.func @transform_10(%arg0: i32) -> (i32, i32) {
    %c0_i32 = arith.constant 0 : i32
    %c0_i32_0 = arith.constant 0 : i32
    return %arg0, %c0_i32 : i32, i32
  }
  func.func @transform_11(%arg0: i32) -> (i32, i32) {
    %c0_i32 = arith.constant 0 : i32
    %c0_i32_0 = arith.constant 0 : i32
    return %arg0, %c0_i32 : i32, i32
  }
}

</mosaic_0001>

<llo_original>
// kernel: tpu_custom_call.1
$region0: #{tpu_custom_call.1}
  #allocation0 [shape = 'u32[]', space=smem, size = 0x4, offset = 0x4, fixed_abs, tag = 'smem constant byte address 0x4 - core index']
  #allocation1 [shape = 'u32[144,128]{1,0:T(1,128)}', space=vmem, size = 0x12000, scoped, tag = 'internal scratch']
  %s0 = inlined_call_operand.hbm [shape: f32[2,256], index: 0, kind: input, shape index: {}]
  %s1 = inlined_call_operand.hbm [shape: f32[2,256], index: 1, kind: input, shape index: {}]
  %s2 = inlined_call_operand.hbm [shape: bf16[256,256], index: 2, kind: input, shape index: {}]
  %s3 = inlined_call_operand.vmem [shape: f32[1,256], index: 3, kind: input, shape index: {}]
  %s4 = inlined_call_operand.hbm [shape: bf16[256,256], index: 4, kind: input, shape index: {}]
  %s5 = inlined_call_operand.vmem [shape: f32[1,256], index: 5, kind: input, shape index: {}]
  %s6 = inlined_call_operand.hbm [shape: bf16[256,256], index: 6, kind: input, shape index: {}]
  %s7 = inlined_call_operand.vmem [shape: f32[1,256], index: 7, kind: input, shape index: {}]
  %s8 = inlined_call_operand.hbm [shape: bf16[256,256], index: 8, kind: input, shape index: {}]
  %s9 = inlined_call_operand.vmem [shape: f32[1,256], index: 9, kind: input, shape index: {}]
  %s10 = inlined_call_operand.hbm [shape: f32[2,256], index: 10, kind: output, shape index: {0}]
  %s11 = inlined_call_operand.hbm [shape: f32[2,256], index: 11, kind: output, shape index: {1}]
  %12 = xla_tuple %s10, %s11
  %s13 = sld [smem:[#allocation0]]
  $region82: #{tpu_custom_call.1} parent=0
    _
  %s15 = ssub.s32 1, %s13
  %s16 = scalar_select 0, %s15, %s13
  $region1: #{tpu_custom_call.1} parent=0
    #allocation2 [shape = 'u8[2048]{0}', space=vmem, size = 0x800, scoped, tag = 'input window, operand 0, single buffered']
    #allocation3 [shape = 's32[1]{0}', space=sflag, size = 0x4, scoped, tag = 'scoped memory for tpu_custom_call.1']
    #allocation4 [shape = 's32[1]{0}', space=sflag, size = 0x4, scoped, tag = 'scoped memory for tpu_custom_call.1']
    #allocation5 [shape = 'u8[2048]{0}', space=vmem, size = 0x800, scoped, tag = 'input window, operand 1, single buffered']
    #allocation6 [shape = 's32[1]{0}', space=sflag, size = 0x4, scoped, tag = 'scoped memory for tpu_custom_call.1']
    #allocation7 [shape = 'u8[131072]{0}', space=vmem, size = 0x20000, scoped, tag = 'input window, operand 2, single buffered']
    #allocation8 [shape = 'u8[131072]{0}', space=vmem, size = 0x20000, scoped, tag = 'input window, operand 4, single buffered']
    #allocation9 [shape = 's32[1]{0}', space=sflag, size = 0x4, scoped, tag = 'scoped memory for tpu_custom_call.1']
    #allocation10 [shape = 'u8[131072]{0}', space=vmem, size = 0x20000, scoped, tag = 'input window, operand 6, single buffered']
    #allocation11 [shape = 'u8[131072]{0}', space=vmem, size = 0x20000, scoped, tag = 'input window, operand 8, single buffered']
    #allocation12 [shape = 's32[1]{0}', space=sflag, size = 0x4, scoped, tag = 'scoped memory for tpu_custom_call.1']
    #allocation13 [shape = 'u8[2048]{0}', space=vmem, size = 0x800, scoped, tag = 'output window, operand 0, single buffered']
    #allocation14 [shape = 'u8[2048]{0}', space=vmem, size = 0x800, scoped, tag = 'output window, operand 1, single buffered']
    #allocation15 [shape = 's32[1]{0}', space=sflag, size = 0x4, scoped, tag = 'scoped memory for tpu_custom_call.1']
    %17 = vsyncpa [#allocation3], 0
    %18 = vsyncpa [#allocation6], 0
    %19 = vsyncpa [#allocation9], 0
    %20 = vsyncpa [#allocation12], 0
    %21 = vsyncpa [#allocation4], 0
    %22 = vsyncpa [#allocation15], 0
    // Predicated region
    $region2: #{tpu_custom_call.1} parent=1 // pred_check
      _
    $region3: #{tpu_custom_call.1} parent=1 // pred_check_branch
      %24 = sbr.rel (0) target = $region5
    $region4: #{tpu_custom_call.1} parent=1 // pred_region
      %s26 = ssub.s32 64, 64
      %27 = vsyncadd [#allocation3], %s26
      %s29 = sshll.u32 [#allocation2], 4
      %s30 = int_to_ptr.vmem [resolvable:$true] %s29
      %32 = dma.hbm_to_vmem [thread:$0]  %s0, 64, %s30, [#allocation3]
    $region5: #{tpu_custom_call.1} parent=1 // pred_fallthru
      _
    // Predicated region
    $region6: #{tpu_custom_call.1} parent=1 // pred_check
      _
    $region7: #{tpu_custom_call.1} parent=1 // pred_check_branch
      %34 = sbr.rel (0) target = $region9
    $region8: #{tpu_custom_call.1} parent=1 // pred_region
      %s36 = ssub.s32 64, 64
      %37 = vsyncadd [#allocation6], %s36
      %s39 = sshll.u32 [#allocation5], 4
      %s40 = int_to_ptr.vmem [resolvable:$true] %s39
      %42 = dma.hbm_to_vmem [thread:$0]  %s1, 64, %s40, [#allocation6]
    $region9: #{tpu_custom_call.1} parent=1 // pred_fallthru
      _
    // Predicated region
    $region10: #{tpu_custom_call.1} parent=1 // pred_check
      _
    $region11: #{tpu_custom_call.1} parent=1 // pred_check_branch
      %44 = sbr.rel (0) target = $region13
    $region12: #{tpu_custom_call.1} parent=1 // pred_region
      %s46 = ssub.s32 4096, 4096
      %47 = vsyncadd [#allocation6], %s46
      %s48 = sshll.u32 [#allocation7], 4
      %s49 = int_to_ptr.vmem [resolvable:$true] %s48
      %54 = dma.hbm_to_vmem [thread:$0]  %s2, 4096, %s49, [#allocation6], 128, 128, 8
    $region13: #{tpu_custom_call.1} parent=1 // pred_fallthru
      _
    // Predicated region
    $region14: #{tpu_custom_call.1} parent=1 // pred_check
      _
    $region15: #{tpu_custom_call.1} parent=1 // pred_check_branch
      %56 = sbr.rel (0) target = $region17
    $region16: #{tpu_custom_call.1} parent=1 // pred_region
      _
    $region17: #{tpu_custom_call.1} parent=1 // pred_fallthru
      _
    // Predicated region
    $region18: #{tpu_custom_call.1} parent=1 // pred_check
      _
    $region19: #{tpu_custom_call.1} parent=1 // pred_check_branch
      %58 = sbr.rel (0) target = $region21
    $region20: #{tpu_custom_call.1} parent=1 // pred_region
      %s60 = ssub.s32 4096, 4096
      %61 = vsyncadd [#allocation9], %s60
      %s62 = sshll.u32 [#allocation8], 4
      %s63 = int_to_ptr.vmem [resolvable:$true] %s62
      %68 = dma.hbm_to_vmem [thread:$0]  %s4, 4096, %s63, [#allocation9], 128, 128, 8
    $region21: #{tpu_custom_call.1} parent=1 // pred_fallthru
      _
    // Predicated region
    $region22: #{tpu_custom_call.1} parent=1 // pred_check
      _
    $region23: #{tpu_custom_call.1} parent=1 // pred_check_branch
      %70 = sbr.rel (0) target = $region25
    $region24: #{tpu_custom_call.1} parent=1 // pred_region
      _
    $region25: #{tpu_custom_call.1} parent=1 // pred_fallthru
      _
    // Predicated region
    $region26: #{tpu_custom_call.1} parent=1 // pred_check
      _
    $region27: #{tpu_custom_call.1} parent=1 // pred_check_branch
      %72 = sbr.rel (0) target = $region29
    $region28: #{tpu_custom_call.1} parent=1 // pred_region
      %s74 = ssub.s32 4096, 4096
      %75 = vsyncadd [#allocation9], %s74
      %s76 = sshll.u32 [#allocation10], 4
      %s77 = int_to_ptr.vmem [resolvable:$true] %s76
      %82 = dma.hbm_to_vmem [thread:$0]  %s6, 4096, %s77, [#allocation9], 128, 128, 8
    $region29: #{tpu_custom_call.1} parent=1 // pred_fallthru
      _
    // Predicated region
    $region30: #{tpu_custom_call.1} parent=1 // pred_check
      _
    $region31: #{tpu_custom_call.1} parent=1 // pred_check_branch
      %84 = sbr.rel (0) target = $region33
    $region32: #{tpu_custom_call.1} parent=1 // pred_region
      _
    $region33: #{tpu_custom_call.1} parent=1 // pred_fallthru
      _
    // Predicated region
    $region34: #{tpu_custom_call.1} parent=1 // pred_check
      _
    $region35: #{tpu_custom_call.1} parent=1 // pred_check_branch
      %86 = sbr.rel (0) target = $region37
    $region36: #{tpu_custom_call.1} parent=1 // pred_region
      %s88 = ssub.s32 4096, 4096
      %89 = vsyncadd [#allocation12], %s88
      %s90 = sshll.u32 [#allocation11], 4
      %s91 = int_to_ptr.vmem [resolvable:$true] %s90
      %96 = dma.hbm_to_vmem [thread:$0]  %s8, 4096, %s91, [#allocation12], 128, 128, 8
    $region37: #{tpu_custom_call.1} parent=1 // pred_fallthru
      _
    // Predicated region
    $region38: #{tpu_custom_call.1} parent=1 // pred_check
      _
    $region39: #{tpu_custom_call.1} parent=1 // pred_check_branch
      %98 = sbr.rel (0) target = $region41
    $region40: #{tpu_custom_call.1} parent=1 // pred_region
      _
    $region41: #{tpu_custom_call.1} parent=1 // pred_fallthru
      _
    // Predicated region
    $region42: #{tpu_custom_call.1} parent=1 // pred_check
      _
    $region43: #{tpu_custom_call.1} parent=1 // pred_check_branch
      %100 = sbr.rel (0) target = $region45
    $region44: #{tpu_custom_call.1} parent=1 // pred_region
      %101 = dma.done [#allocation3], 64
    $region45: #{tpu_custom_call.1} parent=1 // pred_fallthru
      _
    // Predicated region
    $region46: #{tpu_custom_call.1} parent=1 // pred_check
      _
    $region47: #{tpu_custom_call.1} parent=1 // pred_check_branch
      %103 = sbr.rel (0) target = $region49
    $region48: #{tpu_custom_call.1} parent=1 // pred_region
      %104 = dma.done [#allocation6], 64
    $region49: #{tpu_custom_call.1} parent=1 // pred_fallthru
      _
    // Predicated region
    $region50: #{tpu_custom_call.1} parent=1 // pred_check
      _
    $region51: #{tpu_custom_call.1} parent=1 // pred_check_branch
      %106 = sbr.rel (0) target = $region53
    $region52: #{tpu_custom_call.1} parent=1 // pred_region
      %107 = dma.done [#allocation6], 4096
    $region53: #{tpu_custom_call.1} parent=1 // pred_fallthru
      _
    // Predicated region
    $region54: #{tpu_custom_call.1} parent=1 // pred_check
      _
    $region55: #{tpu_custom_call.1} parent=1 // pred_check_branch
      %109 = sbr.rel (0) target = $region57
    $region56: #{tpu_custom_call.1} parent=1 // pred_region
      %110 = dma.done [#allocation9], 4096
    $region57: #{tpu_custom_call.1} parent=1 // pred_fallthru
      _
    // Predicated region
    $region58: #{tpu_custom_call.1} parent=1 // pred_check
      _
    $region59: #{tpu_custom_call.1} parent=1 // pred_check_branch
      %112 = sbr.rel (0) target = $region61
    $region60: #{tpu_custom_call.1} parent=1 // pred_region
      %113 = dma.done [#allocation9], 4096
    $region61: #{tpu_custom_call.1} parent=1 // pred_fallthru
      _
    // Predicated region
    $region62: #{tpu_custom_call.1} parent=1 // pred_check
      _
    $region63: #{tpu_custom_call.1} parent=1 // pred_check_branch
      %115 = sbr.rel (0) target = $region65
    $region64: #{tpu_custom_call.1} parent=1 // pred_region
      %116 = dma.done [#allocation12], 4096
    $region65: #{tpu_custom_call.1} parent=1 // pred_fallthru
      _
    %v117 = vld [vmem:[#allocation7] sm:$0xff]
    %v118 = vld [vmem:[#allocation7 + $0x8] sm:$0xff]
    %v119 = vld [vmem:[#allocation7 + $0x10] sm:$0xff]
    %v120 = vld [vmem:[#allocation7 + $0x18] sm:$0xff]
    %v121 = vld [vmem:[#allocation7 + $0x20] sm:$0xff]
    %v122 = vld [vmem:[#allocation7 + $0x28] sm:$0xff]
    %v123 = vld [vmem:[#allocation7 + $0x30] sm:$0xff]
    %v124 = vld [vmem:[#allocation7 + $0x38] sm:$0xff]
    %v125 = vld [vmem:[#allocation7 + $0x40] sm:$0xff]
    %v126 = vld [vmem:[#allocation7 + $0x48] sm:$0xff]
    %v127 = vld [vmem:[#allocation7 + $0x50] sm:$0xff]
    %v128 = vld [vmem:[#allocation7 + $0x58] sm:$0xff]
    %v129 = vld [vmem:[#allocation7 + $0x60] sm:$0xff]
    %v130 = vld [vmem:[#allocation7 + $0x68] sm:$0xff]
    %v131 = vld [vmem:[#allocation7 + $0x70] sm:$0xff]
    %v132 = vld [vmem:[#allocation7 + $0x78] sm:$0xff]
    %v133 = vld [vmem:[#allocation7 + $0x80] sm:$0xff]
    %v134 = vld [vmem:[#allocation7 + $0x88] sm:$0xff]
    %v135 = vld [vmem:[#allocation7 + $0x90] sm:$0xff]
    %v136 = vld [vmem:[#allocation7 + $0x98] sm:$0xff]
    %v137 = vld [vmem:[#allocation7 + $0xa0] sm:$0xff]
    %v138 = vld [vmem:[#allocation7 + $0xa8] sm:$0xff]
    %v139 = vld [vmem:[#allocation7 + $0xb0] sm:$0xff]
    %v140 = vld [vmem:[#allocation7 + $0xb8] sm:$0xff]
    %v141 = vld [vmem:[#allocation7 + $0xc0] sm:$0xff]
    %v142 = vld [vmem:[#allocation7 + $0xc8] sm:$0xff]
    %v143 = vld [vmem:[#allocation7 + $0xd0] sm:$0xff]
    %v144 = vld [vmem:[#allocation7 + $0xd8] sm:$0xff]
    %v145 = vld [vmem:[#allocation7 + $0xe0] sm:$0xff]
    %v146 = vld [vmem:[#allocation7 + $0xe8] sm:$0xff]
    %v147 = vld [vmem:[#allocation7 + $0xf0] sm:$0xff]
    %v148 = vld [vmem:[#allocation7 + $0xf8] sm:$0xff]
    %v149 = vld [vmem:[#allocation8] sm:$0xff]
    %v150 = vld [vmem:[#allocation8 + $0x8] sm:$0xff]
    %v151 = vld [vmem:[#allocation8 + $0x10] sm:$0xff]
    %v152 = vld [vmem:[#allocation8 + $0x18] sm:$0xff]
    %v153 = vld [vmem:[#allocation8 + $0x20] sm:$0xff]
    %v154 = vld [vmem:[#allocation8 + $0x28] sm:$0xff]
    %v155 = vld [vmem:[#allocation8 + $0x30] sm:$0xff]
    %v156 = vld [vmem:[#allocation8 + $0x38] sm:$0xff]
    %v157 = vld [vmem:[#allocation8 + $0x40] sm:$0xff]
    %v158 = vld [vmem:[#allocation8 + $0x48] sm:$0xff]
    %v159 = vld [vmem:[#allocation8 + $0x50] sm:$0xff]
    %v160 = vld [vmem:[#allocation8 + $0x58] sm:$0xff]
    %v161 = vld [vmem:[#allocation8 + $0x60] sm:$0xff]
    %v162 = vld [vmem:[#allocation8 + $0x68] sm:$0xff]
    %v163 = vld [vmem:[#allocation8 + $0x70] sm:$0xff]
    %v164 = vld [vmem:[#allocation8 + $0x78] sm:$0xff]
    %v165 = vld [vmem:[#allocation8 + $0x80] sm:$0xff]
    %v166 = vld [vmem:[#allocation8 + $0x88] sm:$0xff]
    %v167 = vld [vmem:[#allocation8 + $0x90] sm:$0xff]
    %v168 = vld [vmem:[#allocation8 + $0x98] sm:$0xff]
    %v169 = vld [vmem:[#allocation8 + $0xa0] sm:$0xff]
    %v170 = vld [vmem:[#allocation8 + $0xa8] sm:$0xff]
    %v171 = vld [vmem:[#allocation8 + $0xb0] sm:$0xff]
    %v172 = vld [vmem:[#allocation8 + $0xb8] sm:$0xff]
    %v173 = vld [vmem:[#allocation8 + $0xc0] sm:$0xff]
    %v174 = vld [vmem:[#allocation8 + $0xc8] sm:$0xff]
    %v175 = vld [vmem:[#allocation8 + $0xd0] sm:$0xff]
    %v176 = vld [vmem:[#allocation8 + $0xd8] sm:$0xff]
    %v177 = vld [vmem:[#allocation8 + $0xe0] sm:$0xff]
    %v178 = vld [vmem:[#allocation8 + $0xe8] sm:$0xff]
    %v179 = vld [vmem:[#allocation8 + $0xf0] sm:$0xff]
    %v180 = vld [vmem:[#allocation8 + $0xf8] sm:$0xff]
    %v181 = vld [vmem:[#allocation10] sm:$0xff]
    %v182 = vld [vmem:[#allocation10 + $0x8] sm:$0xff]
    %v183 = vld [vmem:[#allocation10 + $0x10] sm:$0xff]
    %v184 = vld [vmem:[#allocation10 + $0x18] sm:$0xff]
    %v185 = vld [vmem:[#allocation10 + $0x20] sm:$0xff]
    %v186 = vld [vmem:[#allocation10 + $0x28] sm:$0xff]
    %v187 = vld [vmem:[#allocation10 + $0x30] sm:$0xff]
    %v188 = vld [vmem:[#allocation10 + $0x38] sm:$0xff]
    %v189 = vld [vmem:[#allocation10 + $0x40] sm:$0xff]
    %v190 = vld [vmem:[#allocation10 + $0x48] sm:$0xff]
    %v191 = vld [vmem:[#allocation10 + $0x50] sm:$0xff]
    %v192 = vld [vmem:[#allocation10 + $0x58] sm:$0xff]
    %v193 = vld [vmem:[#allocation10 + $0x60] sm:$0xff]
    %v194 = vld [vmem:[#allocation10 + $0x68] sm:$0xff]
    %v195 = vld [vmem:[#allocation10 + $0x70] sm:$0xff]
    %v196 = vld [vmem:[#allocation10 + $0x78] sm:$0xff]
    %v197 = vld [vmem:[#allocation10 + $0x80] sm:$0xff]
    %v198 = vld [vmem:[#allocation10 + $0x88] sm:$0xff]
    %v199 = vld [vmem:[#allocation10 + $0x90] sm:$0xff]
    %v200 = vld [vmem:[#allocation10 + $0x98] sm:$0xff]
    %v201 = vld [vmem:[#allocation10 + $0xa0] sm:$0xff]
    %v202 = vld [vmem:[#allocation10 + $0xa8] sm:$0xff]
    %v203 = vld [vmem:[#allocation10 + $0xb0] sm:$0xff]
    %v204 = vld [vmem:[#allocation10 + $0xb8] sm:$0xff]
    %v205 = vld [vmem:[#allocation10 + $0xc0] sm:$0xff]
    %v206 = vld [vmem:[#allocation10 + $0xc8] sm:$0xff]
    %v207 = vld [vmem:[#allocation10 + $0xd0] sm:$0xff]
    %v208 = vld [vmem:[#allocation10 + $0xd8] sm:$0xff]
    %v209 = vld [vmem:[#allocation10 + $0xe0] sm:$0xff]
    %v210 = vld [vmem:[#allocation10 + $0xe8] sm:$0xff]
    %v211 = vld [vmem:[#allocation10 + $0xf0] sm:$0xff]
    %v212 = vld [vmem:[#allocation10 + $0xf8] sm:$0xff]
    %v213 = vld [vmem:[#allocation11] sm:$0xff]
    %v214 = vld [vmem:[#allocation11 + $0x8] sm:$0xff]
    %v215 = vld [vmem:[#allocation11 + $0x10] sm:$0xff]
    %v216 = vld [vmem:[#allocation11 + $0x18] sm:$0xff]
    %v217 = vld [vmem:[#allocation11 + $0x20] sm:$0xff]
    %v218 = vld [vmem:[#allocation11 + $0x28] sm:$0xff]
    %v219 = vld [vmem:[#allocation11 + $0x30] sm:$0xff]
    %v220 = vld [vmem:[#allocation11 + $0x38] sm:$0xff]
    %v221 = vld [vmem:[#allocation11 + $0x40] sm:$0xff]
    %v222 = vld [vmem:[#allocation11 + $0x48] sm:$0xff]
    %v223 = vld [vmem:[#allocation11 + $0x50] sm:$0xff]
    %v224 = vld [vmem:[#allocation11 + $0x58] sm:$0xff]
    %v225 = vld [vmem:[#allocation11 + $0x60] sm:$0xff]
    %v226 = vld [vmem:[#allocation11 + $0x68] sm:$0xff]
    %v227 = vld [vmem:[#allocation11 + $0x70] sm:$0xff]
    %v228 = vld [vmem:[#allocation11 + $0x78] sm:$0xff]
    %v229 = vld [vmem:[#allocation11 + $0x80] sm:$0xff]
    %v230 = vld [vmem:[#allocation11 + $0x88] sm:$0xff]
    %v231 = vld [vmem:[#allocation11 + $0x90] sm:$0xff]
    %v232 = vld [vmem:[#allocation11 + $0x98] sm:$0xff]
    %v233 = vld [vmem:[#allocation11 + $0xa0] sm:$0xff]
    %v234 = vld [vmem:[#allocation11 + $0xa8] sm:$0xff]
    %v235 = vld [vmem:[#allocation11 + $0xb0] sm:$0xff]
    %v236 = vld [vmem:[#allocation11 + $0xb8] sm:$0xff]
    %v237 = vld [vmem:[#allocation11 + $0xc0] sm:$0xff]
    %v238 = vld [vmem:[#allocation11 + $0xc8] sm:$0xff]
    %v239 = vld [vmem:[#allocation11 + $0xd0] sm:$0xff]
    %v240 = vld [vmem:[#allocation11 + $0xd8] sm:$0xff]
    %v241 = vld [vmem:[#allocation11 + $0xe0] sm:$0xff]
    %v242 = vld [vmem:[#allocation11 + $0xe8] sm:$0xff]
    %v243 = vld [vmem:[#allocation11 + $0xf0] sm:$0xff]
    %v244 = vld [vmem:[#allocation11 + $0xf8] sm:$0xff]
    %v245 = vld [vmem:[%s3] sm:$0x3]
    %v246 = vld [vmem:[%s5] sm:$0x3]
    %v247 = vld [vmem:[%s7] sm:$0x3]
    %v248 = vld [vmem:[%s9] sm:$0x3]
    %v249 = vld [vmem:[#allocation2] sm:$0xf]
    %v252 = vunpack.c.l.s4 1983009808
    %v253 = vunpack.c.0.s8 %v252
    %v254 = vlaneseq
    %v255 = vshrl.u32 %v254, 7
    %v256 = vsub.s32 %v253, %v255
    %v257 = vrot.slane %v249, %v256
    %v258 = vcombine.high %v257, %v257
    %v261 = vpack.c.bf16 %v257, %v257
    %v262 = vpack.c.bf16 %v258, %v258
    %v264 = vlaneseq
    %v265 = vshrl.u32 %v264, 7
    %v266 = vsub.s32 0, %v265
    %v267 = vrot.slane %v245, %v266
    %v268 = vlaneseq
    %v269 = vshrl.u32 %v268, 7
    %v270 = vsub.s32 1, %v269
    %v271 = vrot.slane %v245, %v270
    %v306 = vunpack.c.l.b16 %v117
    %v307 = vunpack.c.h.b16 %v117
    %v308 = vunpack.c.l.b16 %v118
    %v309 = vunpack.c.h.b16 %v118
    %v310 = vunpack.c.l.b16 %v119
    %v311 = vunpack.c.h.b16 %v119
    %v312 = vunpack.c.l.b16 %v120
    %v313 = vunpack.c.h.b16 %v120
    %v314 = vunpack.c.l.b16 %v121
    %v315 = vunpack.c.h.b16 %v121
    %v316 = vunpack.c.l.b16 %v122
    %v317 = vunpack.c.h.b16 %v122
    %v318 = vunpack.c.l.b16 %v123
    %v319 = vunpack.c.h.b16 %v123
    %v320 = vunpack.c.l.b16 %v124
    %v321 = vunpack.c.h.b16 %v124
    %v322 = vunpack.c.l.b16 %v125
    %v323 = vunpack.c.h.b16 %v125
    %v324 = vunpack.c.l.b16 %v126
    %v325 = vunpack.c.h.b16 %v126
    %v326 = vunpack.c.l.b16 %v127
    %v327 = vunpack.c.h.b16 %v127
    %v328 = vunpack.c.l.b16 %v128
    %v329 = vunpack.c.h.b16 %v128
    %v330 = vunpack.c.l.b16 %v129
    %v331 = vunpack.c.h.b16 %v129
    %v332 = vunpack.c.l.b16 %v130
    %v333 = vunpack.c.h.b16 %v130
    %v334 = vunpack.c.l.b16 %v131
    %v335 = vunpack.c.h.b16 %v131
    %v336 = vunpack.c.l.b16 %v132
    %v337 = vunpack.c.h.b16 %v132
    %v338 = vunpack.c.l.b16 %v133
    %v339 = vunpack.c.h.b16 %v133
    %v340 = vunpack.c.l.b16 %v134
    %v341 = vunpack.c.h.b16 %v134
    %v342 = vunpack.c.l.b16 %v135
    %v343 = vunpack.c.h.b16 %v135
    %v344 = vunpack.c.l.b16 %v136
    %v345 = vunpack.c.h.b16 %v136
    %v346 = vunpack.c.l.b16 %v137
    %v347 = vunpack.c.h.b16 %v137
    %v348 = vunpack.c.l.b16 %v138
    %v349 = vunpack.c.h.b16 %v138
    %v350 = vunpack.c.l.b16 %v139
    %v351 = vunpack.c.h.b16 %v139
    %v352 = vunpack.c.l.b16 %v140
    %v353 = vunpack.c.h.b16 %v140
    %v354 = vunpack.c.l.b16 %v141
    %v355 = vunpack.c.h.b16 %v141
    %v356 = vunpack.c.l.b16 %v142
    %v357 = vunpack.c.h.b16 %v142
    %v358 = vunpack.c.l.b16 %v143
    %v359 = vunpack.c.h.b16 %v143
    %v360 = vunpack.c.l.b16 %v144
    %v361 = vunpack.c.h.b16 %v144
    %v362 = vunpack.c.l.b16 %v145
    %v363 = vunpack.c.h.b16 %v145
    %v364 = vunpack.c.l.b16 %v146
    %v365 = vunpack.c.h.b16 %v146
    %v366 = vunpack.c.l.b16 %v147
    %v367 = vunpack.c.h.b16 %v147
    %v368 = vunpack.c.l.b16 %v148
    %v369 = vunpack.c.h.b16 %v148
    %v370 = vpack.c.b16 %v308, %v306
    %v371 = vpack.c.b16 %v309, %v307
    %v372 = vpack.c.b16 %v312, %v310
    %v373 = vpack.c.b16 %v313, %v311
    %v374 = vpack.c.b16 %v316, %v314
    %v375 = vpack.c.b16 %v317, %v315
    %v376 = vpack.c.b16 %v320, %v318
    %v377 = vpack.c.b16 %v321, %v319
    %v378 = vpack.c.b16 %v324, %v322
    %v379 = vpack.c.b16 %v325, %v323
    %v380 = vpack.c.b16 %v328, %v326
    %v381 = vpack.c.b16 %v329, %v327
    %v382 = vpack.c.b16 %v332, %v330
    %v383 = vpack.c.b16 %v333, %v331
    %v384 = vpack.c.b16 %v336, %v334
    %v385 = vpack.c.b16 %v337, %v335
    %v386 = vpack.c.b16 %v340, %v338
    %v387 = vpack.c.b16 %v341, %v339
    %v388 = vpack.c.b16 %v344, %v342
    %v389 = vpack.c.b16 %v345, %v343
    %v390 = vpack.c.b16 %v348, %v346
    %v391 = vpack.c.b16 %v349, %v347
    %v392 = vpack.c.b16 %v352, %v350
    %v393 = vpack.c.b16 %v353, %v351
    %v394 = vpack.c.b16 %v356, %v354
    %v395 = vpack.c.b16 %v357, %v355
    %v396 = vpack.c.b16 %v360, %v358
    %v397 = vpack.c.b16 %v361, %v359
    %v398 = vpack.c.b16 %v364, %v362
    %v399 = vpack.c.b16 %v365, %v363
    %v400 = vpack.c.b16 %v368, %v366
    %v401 = vpack.c.b16 %v369, %v367
    %434 = vmatprep.subr.bf16.mxu0 %v371
    %435 = vmatpush1.bf16.msra.mxu0 %v370
    %436 = vmatprep.subr.bf16.mxu0 %v373
    %437 = vmatpush1.bf16.msra.mxu0 %v372
    %438 = vmatprep.subr.bf16.mxu0 %v375
    %439 = vmatpush1.bf16.msra.mxu0 %v374
    %440 = vmatprep.subr.bf16.mxu0 %v377
    %441 = vmatpush1.bf16.msra.mxu0 %v376
    %442 = vmatprep.subr.bf16.mxu0 %v379
    %443 = vmatpush1.bf16.msra.mxu0 %v378
    %444 = vmatprep.subr.bf16.mxu0 %v381
    %445 = vmatpush1.bf16.msra.mxu0 %v380
    %446 = vmatprep.subr.bf16.mxu0 %v383
    %447 = vmatpush1.bf16.msra.mxu0 %v382
    %448 = vmatprep.subr.bf16.mxu0 %v385
    %449 = vmatpush1.bf16.msra.mxu0 %v384
    %450 = vmatprep.subr.bf16.mxu0 %v387
    %451 = vmatpush1.bf16.msra.mxu0 %v386
    %452 = vmatprep.subr.bf16.mxu0 %v389
    %453 = vmatpush1.bf16.msra.mxu0 %v388
    %454 = vmatprep.subr.bf16.mxu0 %v391
    %455 = vmatpush1.bf16.msra.mxu0 %v390
    %456 = vmatprep.subr.bf16.mxu0 %v393
    %457 = vmatpush1.bf16.msra.mxu0 %v392
    %458 = vmatprep.subr.bf16.mxu0 %v395
    %459 = vmatpush1.bf16.msra.mxu0 %v394
    %460 = vmatprep.subr.bf16.mxu0 %v397
    %461 = vmatpush1.bf16.msra.mxu0 %v396
    %462 = vmatprep.subr.bf16.mxu0 %v399
    %463 = vmatpush1.bf16.msra.mxu0 %v398
    %464 = vmatprep.subr.bf16.mxu0 %v401
    %465 = vmatpush1.bf16.msra.mxu0 %v400
    %466 = vmatprep.mubr.bf16.mxu0 %v262
    %467 = vmatmul.mubr.bf16.gmra.mrb[0].mxu0 %v261
    %v468 = vpop.f32.mrb[0].mxu0
    %v469 = vadd.f32 %v267, %v468
    %v470 = vpop.f32.mrb[0].mxu0
    %v471 = vadd.f32 %v271, %v470
    %v472 = vpop.f32.mrb[0].mxu0
    %v473 = vpop.f32.mrb[0].mxu0
    %474 = vdwg.mxu0
    %v475 = vtanh.pop %v469
    %v476 = vtanh.pop %v471
    %v477 = vpack.c.bf16 %v475, %v475
    %v478 = vpack.c.bf16 %v476, %v476
    %v480 = vlaneseq
    %v481 = vshrl.u32 %v480, 7
    %v482 = vsub.s32 0, %v481
    %v483 = vrot.slane %v246, %v482
    %v484 = vlaneseq
    %v485 = vshrl.u32 %v484, 7
    %v486 = vsub.s32 1, %v485
    %v487 = vrot.slane %v246, %v486
    %v522 = vunpack.c.l.b16 %v149
    %v523 = vunpack.c.h.b16 %v149
    %v524 = vunpack.c.l.b16 %v150
    %v525 = vunpack.c.h.b16 %v150
    %v526 = vunpack.c.l.b16 %v151
    %v527 = vunpack.c.h.b16 %v151
    %v528 = vunpack.c.l.b16 %v152
    %v529 = vunpack.c.h.b16 %v152
    %v530 = vunpack.c.l.b16 %v153
    %v531 = vunpack.c.h.b16 %v153
    %v532 = vunpack.c.l.b16 %v154
    %v533 = vunpack.c.h.b16 %v154
    %v534 = vunpack.c.l.b16 %v155
    %v535 = vunpack.c.h.b16 %v155
    %v536 = vunpack.c.l.b16 %v156
    %v537 = vunpack.c.h.b16 %v156
    %v538 = vunpack.c.l.b16 %v157
    %v539 = vunpack.c.h.b16 %v157
    %v540 = vunpack.c.l.b16 %v158
    %v541 = vunpack.c.h.b16 %v158
    %v542 = vunpack.c.l.b16 %v159
    %v543 = vunpack.c.h.b16 %v159
    %v544 = vunpack.c.l.b16 %v160
    %v545 = vunpack.c.h.b16 %v160
    %v546 = vunpack.c.l.b16 %v161
    %v547 = vunpack.c.h.b16 %v161
    %v548 = vunpack.c.l.b16 %v162
    %v549 = vunpack.c.h.b16 %v162
    %v550 = vunpack.c.l.b16 %v163
    %v551 = vunpack.c.h.b16 %v163
    %v552 = vunpack.c.l.b16 %v164
    %v553 = vunpack.c.h.b16 %v164
    %v554 = vunpack.c.l.b16 %v165
    %v555 = vunpack.c.h.b16 %v165
    %v556 = vunpack.c.l.b16 %v166
    %v557 = vunpack.c.h.b16 %v166
    %v558 = vunpack.c.l.b16 %v167
    %v559 = vunpack.c.h.b16 %v167
    %v560 = vunpack.c.l.b16 %v168
    %v561 = vunpack.c.h.b16 %v168
    %v562 = vunpack.c.l.b16 %v169
    %v563 = vunpack.c.h.b16 %v169
    %v564 = vunpack.c.l.b16 %v170
    %v565 = vunpack.c.h.b16 %v170
    %v566 = vunpack.c.l.b16 %v171
    %v567 = vunpack.c.h.b16 %v171
    %v568 = vunpack.c.l.b16 %v172
    %v569 = vunpack.c.h.b16 %v172
    %v570 = vunpack.c.l.b16 %v173
    %v571 = vunpack.c.h.b16 %v173
    %v572 = vunpack.c.l.b16 %v174
    %v573 = vunpack.c.h.b16 %v174
    %v574 = vunpack.c.l.b16 %v175
    %v575 = vunpack.c.h.b16 %v175
    %v576 = vunpack.c.l.b16 %v176
    %v577 = vunpack.c.h.b16 %v176
    %v578 = vunpack.c.l.b16 %v177
    %v579 = vunpack.c.h.b16 %v177
    %v580 = vunpack.c.l.b16 %v178
    %v581 = vunpack.c.h.b16 %v178
    %v582 = vunpack.c.l.b16 %v179
    %v583 = vunpack.c.h.b16 %v179
    %v584 = vunpack.c.l.b16 %v180
    %v585 = vunpack.c.h.b16 %v180
    %v586 = vpack.c.b16 %v524, %v522
    %v587 = vpack.c.b16 %v525, %v523
    %v588 = vpack.c.b16 %v528, %v526
    %v589 = vpack.c.b16 %v529, %v527
    %v590 = vpack.c.b16 %v532, %v530
    %v591 = vpack.c.b16 %v533, %v531
    %v592 = vpack.c.b16 %v536, %v534
    %v593 = vpack.c.b16 %v537, %v535
    %v594 = vpack.c.b16 %v540, %v538
    %v595 = vpack.c.b16 %v541, %v539
    %v596 = vpack.c.b16 %v544, %v542
    %v597 = vpack.c.b16 %v545, %v543
    %v598 = vpack.c.b16 %v548, %v546
    %v599 = vpack.c.b16 %v549, %v547
    %v600 = vpack.c.b16 %v552, %v550
    %v601 = vpack.c.b16 %v553, %v551
    %v602 = vpack.c.b16 %v556, %v554
    %v603 = vpack.c.b16 %v557, %v555
    %v604 = vpack.c.b16 %v560, %v558
    %v605 = vpack.c.b16 %v561, %v559
    %v606 = vpack.c.b16 %v564, %v562
    %v607 = vpack.c.b16 %v565, %v563
    %v608 = vpack.c.b16 %v568, %v566
    %v609 = vpack.c.b16 %v569, %v567
    %v610 = vpack.c.b16 %v572, %v570
    %v611 = vpack.c.b16 %v573, %v571
    %v612 = vpack.c.b16 %v576, %v574
    %v613 = vpack.c.b16 %v577, %v575
    %v614 = vpack.c.b16 %v580, %v578
    %v615 = vpack.c.b16 %v581, %v579
    %v616 = vpack.c.b16 %v584, %v582
    %v617 = vpack.c.b16 %v585, %v583
    %650 = vmatprep.subr.bf16.mxu0 %v587
    %651 = vmatpush1.bf16.msra.mxu0 %v586
    %652 = vmatprep.subr.bf16.mxu0 %v589
    %653 = vmatpush1.bf16.msra.mxu0 %v588
    %654 = vmatprep.subr.bf16.mxu0 %v591
    %655 = vmatpush1.bf16.msra.mxu0 %v590
    %656 = vmatprep.subr.bf16.mxu0 %v593
    %657 = vmatpush1.bf16.msra.mxu0 %v592
    %658 = vmatprep.subr.bf16.mxu0 %v595
    %659 = vmatpush1.bf16.msra.mxu0 %v594
    %660 = vmatprep.subr.bf16.mxu0 %v597
    %661 = vmatpush1.bf16.msra.mxu0 %v596
    %662 = vmatprep.subr.bf16.mxu0 %v599
    %663 = vmatpush1.bf16.msra.mxu0 %v598
    %664 = vmatprep.subr.bf16.mxu0 %v601
    %665 = vmatpush1.bf16.msra.mxu0 %v600
    %666 = vmatprep.subr.bf16.mxu0 %v603
    %667 = vmatpush1.bf16.msra.mxu0 %v602
    %668 = vmatprep.subr.bf16.mxu0 %v605
    %669 = vmatpush1.bf16.msra.mxu0 %v604
    %670 = vmatprep.subr.bf16.mxu0 %v607
    %671 = vmatpush1.bf16.msra.mxu0 %v606
    %672 = vmatprep.subr.bf16.mxu0 %v609
    %673 = vmatpush1.bf16.msra.mxu0 %v608
    %674 = vmatprep.subr.bf16.mxu0 %v611
    %675 = vmatpush1.bf16.msra.mxu0 %v610
    %676 = vmatprep.subr.bf16.mxu0 %v613
    %677 = vmatpush1.bf16.msra.mxu0 %v612
    %678 = vmatprep.subr.bf16.mxu0 %v615
    %679 = vmatpush1.bf16.msra.mxu0 %v614
    %680 = vmatprep.subr.bf16.mxu0 %v617
    %681 = vmatpush1.bf16.msra.mxu0 %v616
    %682 = vmatprep.mubr.bf16.mxu0 %v478
    %683 = vmatmul.mubr.bf16.gmra.mrb[0].mxu0 %v477
    %v684 = vpop.f32.mrb[0].mxu0
    %v685 = vadd.f32 %v483, %v684
    %v686 = vpop.f32.mrb[0].mxu0
    %v687 = vadd.f32 %v487, %v686
    %v688 = vpop.f32.mrb[0].mxu0
    %v689 = vpop.f32.mrb[0].mxu0
    %690 = vdwg.mxu0
    %v691 = vmul.f32 %v685, 0.5
    %v692 = vmul.f32 %v687, 0.5
    %v693 = vmul.f32 %v685, 0.044715
    %v694 = vmul.f32 %v687, 0.044715
    %v695 = vmul.f32 %v693, %v685
    %v696 = vmul.f32 %v694, %v687
    %v697 = vmul.f32 %v695, %v685
    %v698 = vmul.f32 %v696, %v687
    %v699 = vadd.f32 %v685, %v697
    %v700 = vadd.f32 %v687, %v698
    %v701 = vmul.f32 %v699, 0.7978846
    %v702 = vmul.f32 %v700, 0.7978846
    %v703 = vtanh.pop %v701
    %v704 = vtanh.pop %v702
    %v705 = vadd.f32 %v703, 1.0
    %v706 = vadd.f32 %v704, 1.0
    %v707 = vmul.f32 %v691, %v705
    %v708 = vmul.f32 %v692, %v706
    %v709 = vpack.c.bf16 %v707, %v707
    %v710 = vpack.c.bf16 %v708, %v708
    %v712 = vlaneseq
    %v713 = vshrl.u32 %v712, 7
    %v714 = vsub.s32 0, %v713
    %v715 = vrot.slane %v247, %v714
    %v716 = vlaneseq
    %v717 = vshrl.u32 %v716, 7
    %v718 = vsub.s32 1, %v717
    %v719 = vrot.slane %v247, %v718
    %v754 = vunpack.c.l.b16 %v181
    %v755 = vunpack.c.h.b16 %v181
    %v756 = vunpack.c.l.b16 %v182
    %v757 = vunpack.c.h.b16 %v182
    %v758 = vunpack.c.l.b16 %v183
    %v759 = vunpack.c.h.b16 %v183
    %v760 = vunpack.c.l.b16 %v184
    %v761 = vunpack.c.h.b16 %v184
    %v762 = vunpack.c.l.b16 %v185
    %v763 = vunpack.c.h.b16 %v185
    %v764 = vunpack.c.l.b16 %v186
    %v765 = vunpack.c.h.b16 %v186
    %v766 = vunpack.c.l.b16 %v187
    %v767 = vunpack.c.h.b16 %v187
    %v768 = vunpack.c.l.b16 %v188
    %v769 = vunpack.c.h.b16 %v188
    %v770 = vunpack.c.l.b16 %v189
    %v771 = vunpack.c.h.b16 %v189
    %v772 = vunpack.c.l.b16 %v190
    %v773 = vunpack.c.h.b16 %v190
    %v774 = vunpack.c.l.b16 %v191
    %v775 = vunpack.c.h.b16 %v191
    %v776 = vunpack.c.l.b16 %v192
    %v777 = vunpack.c.h.b16 %v192
    %v778 = vunpack.c.l.b16 %v193
    %v779 = vunpack.c.h.b16 %v193
    %v780 = vunpack.c.l.b16 %v194
    %v781 = vunpack.c.h.b16 %v194
    %v782 = vunpack.c.l.b16 %v195
    %v783 = vunpack.c.h.b16 %v195
    %v784 = vunpack.c.l.b16 %v196
    %v785 = vunpack.c.h.b16 %v196
    %v786 = vunpack.c.l.b16 %v197
    %v787 = vunpack.c.h.b16 %v197
    %v788 = vunpack.c.l.b16 %v198
    %v789 = vunpack.c.h.b16 %v198
    %v790 = vunpack.c.l.b16 %v199
    %v791 = vunpack.c.h.b16 %v199
    %v792 = vunpack.c.l.b16 %v200
    %v793 = vunpack.c.h.b16 %v200
    %v794 = vunpack.c.l.b16 %v201
    %v795 = vunpack.c.h.b16 %v201
    %v796 = vunpack.c.l.b16 %v202
    %v797 = vunpack.c.h.b16 %v202
    %v798 = vunpack.c.l.b16 %v203
    %v799 = vunpack.c.h.b16 %v203
    %v800 = vunpack.c.l.b16 %v204
    %v801 = vunpack.c.h.b16 %v204
    %v802 = vunpack.c.l.b16 %v205
    %v803 = vunpack.c.h.b16 %v205
    %v804 = vunpack.c.l.b16 %v206
    %v805 = vunpack.c.h.b16 %v206
    %v806 = vunpack.c.l.b16 %v207
    %v807 = vunpack.c.h.b16 %v207
    %v808 = vunpack.c.l.b16 %v208
    %v809 = vunpack.c.h.b16 %v208
    %v810 = vunpack.c.l.b16 %v209
    %v811 = vunpack.c.h.b16 %v209
    %v812 = vunpack.c.l.b16 %v210
    %v813 = vunpack.c.h.b16 %v210
    %v814 = vunpack.c.l.b16 %v211
    %v815 = vunpack.c.h.b16 %v211
    %v816 = vunpack.c.l.b16 %v212
    %v817 = vunpack.c.h.b16 %v212
    %v818 = vpack.c.b16 %v756, %v754
    %v819 = vpack.c.b16 %v757, %v755
    %v820 = vpack.c.b16 %v760, %v758
    %v821 = vpack.c.b16 %v761, %v759
    %v822 = vpack.c.b16 %v764, %v762
    %v823 = vpack.c.b16 %v765, %v763
    %v824 = vpack.c.b16 %v768, %v766
    %v825 = vpack.c.b16 %v769, %v767
    %v826 = vpack.c.b16 %v772, %v770
    %v827 = vpack.c.b16 %v773, %v771
    %v828 = vpack.c.b16 %v776, %v774
    %v829 = vpack.c.b16 %v777, %v775
    %v830 = vpack.c.b16 %v780, %v778
    %v831 = vpack.c.b16 %v781, %v779
    %v832 = vpack.c.b16 %v784, %v782
    %v833 = vpack.c.b16 %v785, %v783
    %v834 = vpack.c.b16 %v788, %v786
    %v835 = vpack.c.b16 %v789, %v787
    %v836 = vpack.c.b16 %v792, %v790
    %v837 = vpack.c.b16 %v793, %v791
    %v838 = vpack.c.b16 %v796, %v794
    %v839 = vpack.c.b16 %v797, %v795
    %v840 = vpack.c.b16 %v800, %v798
    %v841 = vpack.c.b16 %v801, %v799
    %v842 = vpack.c.b16 %v804, %v802
    %v843 = vpack.c.b16 %v805, %v803
    %v844 = vpack.c.b16 %v808, %v806
    %v845 = vpack.c.b16 %v809, %v807
    %v846 = vpack.c.b16 %v812, %v810
    %v847 = vpack.c.b16 %v813, %v811
    %v848 = vpack.c.b16 %v816, %v814
    %v849 = vpack.c.b16 %v817, %v815
    %882 = vmatprep.subr.bf16.mxu0 %v819
    %883 = vmatpush1.bf16.msra.mxu0 %v818
    %884 = vmatprep.subr.bf16.mxu0 %v821
    %885 = vmatpush1.bf16.msra.mxu0 %v820
    %886 = vmatprep.subr.bf16.mxu0 %v823
    %887 = vmatpush1.bf16.msra.mxu0 %v822
    %888 = vmatprep.subr.bf16.mxu0 %v825
    %889 = vmatpush1.bf16.msra.mxu0 %v824
    %890 = vmatprep.subr.bf16.mxu0 %v827
    %891 = vmatpush1.bf16.msra.mxu0 %v826
    %892 = vmatprep.subr.bf16.mxu0 %v829
    %893 = vmatpush1.bf16.msra.mxu0 %v828
    %894 = vmatprep.subr.bf16.mxu0 %v831
    %895 = vmatpush1.bf16.msra.mxu0 %v830
    %896 = vmatprep.subr.bf16.mxu0 %v833
    %897 = vmatpush1.bf16.msra.mxu0 %v832
    %898 = vmatprep.subr.bf16.mxu0 %v835
    %899 = vmatpush1.bf16.msra.mxu0 %v834
    %900 = vmatprep.subr.bf16.mxu0 %v837
    %901 = vmatpush1.bf16.msra.mxu0 %v836
    %902 = vmatprep.subr.bf16.mxu0 %v839
    %903 = vmatpush1.bf16.msra.mxu0 %v838
    %904 = vmatprep.subr.bf16.mxu0 %v841
    %905 = vmatpush1.bf16.msra.mxu0 %v840
    %906 = vmatprep.subr.bf16.mxu0 %v843
    %907 = vmatpush1.bf16.msra.mxu0 %v842
    %908 = vmatprep.subr.bf16.mxu0 %v845
    %909 = vmatpush1.bf16.msra.mxu0 %v844
    %910 = vmatprep.subr.bf16.mxu0 %v847
    %911 = vmatpush1.bf16.msra.mxu0 %v846
    %912 = vmatprep.subr.bf16.mxu0 %v849
    %913 = vmatpush1.bf16.msra.mxu0 %v848
    %914 = vmatprep.mubr.bf16.mxu0 %v710
    %915 = vmatmul.mubr.bf16.gmra.mrb[0].mxu0 %v709
    %v916 = vpop.f32.mrb[0].mxu0
    %v917 = vadd.f32 %v715, %v916
    %v918 = vpop.f32.mrb[0].mxu0
    %v919 = vadd.f32 %v719, %v918
    %v920 = vpop.f32.mrb[0].mxu0
    %v921 = vpop.f32.mrb[0].mxu0
    %922 = vdwg.mxu0
    %v923 = vmul.f32 %v917, 0.5
    %v924 = vmul.f32 %v919, 0.5
    %v925 = vmul.f32 %v917, 0.044715
    %v926 = vmul.f32 %v919, 0.044715
    %v927 = vmul.f32 %v925, %v917
    %v928 = vmul.f32 %v926, %v919
    %v929 = vmul.f32 %v927, %v917
    %v930 = vmul.f32 %v928, %v919
    %v931 = vadd.f32 %v917, %v929
    %v932 = vadd.f32 %v919, %v930
    %v933 = vmul.f32 %v931, 0.7978846
    %v934 = vmul.f32 %v932, 0.7978846
    %v935 = vtanh.pop %v933
    %v936 = vtanh.pop %v934
    %v937 = vadd.f32 %v935, 1.0
    %v938 = vadd.f32 %v936, 1.0
    %v939 = vmul.f32 %v923, %v937
    %v940 = vmul.f32 %v924, %v938
    %v941 = vpack.c.bf16 %v939, %v939
    %v942 = vpack.c.bf16 %v940, %v940
    %v944 = vlaneseq
    %v945 = vshrl.u32 %v944, 7
    %v946 = vsub.s32 0, %v945
    %v947 = vrot.slane %v248, %v946
    %v948 = vlaneseq
    %v949 = vshrl.u32 %v948, 7
    %v950 = vsub.s32 1, %v949
    %v951 = vrot.slane %v248, %v950
    %v986 = vunpack.c.l.b16 %v213
    %v987 = vunpack.c.h.b16 %v213
    %v988 = vunpack.c.l.b16 %v214
    %v989 = vunpack.c.h.b16 %v214
    %v990 = vunpack.c.l.b16 %v215
    %v991 = vunpack.c.h.b16 %v215
    %v992 = vunpack.c.l.b16 %v216
    %v993 = vunpack.c.h.b16 %v216
    %v994 = vunpack.c.l.b16 %v217
    %v995 = vunpack.c.h.b16 %v217
    %v996 = vunpack.c.l.b16 %v218
    %v997 = vunpack.c.h.b16 %v218
    %v998 = vunpack.c.l.b16 %v219
    %v999 = vunpack.c.h.b16 %v219
    %v1000 = vunpack.c.l.b16 %v220
    %v1001 = vunpack.c.h.b16 %v220
    %v1002 = vunpack.c.l.b16 %v221
    %v1003 = vunpack.c.h.b16 %v221
    %v1004 = vunpack.c.l.b16 %v222
    %v1005 = vunpack.c.h.b16 %v222
    %v1006 = vunpack.c.l.b16 %v223
    %v1007 = vunpack.c.h.b16 %v223
    %v1008 = vunpack.c.l.b16 %v224
    %v1009 = vunpack.c.h.b16 %v224
    %v1010 = vunpack.c.l.b16 %v225
    %v1011 = vunpack.c.h.b16 %v225
    %v1012 = vunpack.c.l.b16 %v226
    %v1013 = vunpack.c.h.b16 %v226
    %v1014 = vunpack.c.l.b16 %v227
    %v1015 = vunpack.c.h.b16 %v227
    %v1016 = vunpack.c.l.b16 %v228
    %v1017 = vunpack.c.h.b16 %v228
    %v1018 = vunpack.c.l.b16 %v229
    %v1019 = vunpack.c.h.b16 %v229
    %v1020 = vunpack.c.l.b16 %v230
    %v1021 = vunpack.c.h.b16 %v230
    %v1022 = vunpack.c.l.b16 %v231
    %v1023 = vunpack.c.h.b16 %v231
    %v1024 = vunpack.c.l.b16 %v232
    %v1025 = vunpack.c.h.b16 %v232
    %v1026 = vunpack.c.l.b16 %v233
    %v1027 = vunpack.c.h.b16 %v233
    %v1028 = vunpack.c.l.b16 %v234
    %v1029 = vunpack.c.h.b16 %v234
    %v1030 = vunpack.c.l.b16 %v235
    %v1031 = vunpack.c.h.b16 %v235
    %v1032 = vunpack.c.l.b16 %v236
    %v1033 = vunpack.c.h.b16 %v236
    %v1034 = vunpack.c.l.b16 %v237
    %v1035 = vunpack.c.h.b16 %v237
    %v1036 = vunpack.c.l.b16 %v238
    %v1037 = vunpack.c.h.b16 %v238
    %v1038 = vunpack.c.l.b16 %v239
    %v1039 = vunpack.c.h.b16 %v239
    %v1040 = vunpack.c.l.b16 %v240
    %v1041 = vunpack.c.h.b16 %v240
    %v1042 = vunpack.c.l.b16 %v241
    %v1043 = vunpack.c.h.b16 %v241
    %v1044 = vunpack.c.l.b16 %v242
    %v1045 = vunpack.c.h.b16 %v242
    %v1046 = vunpack.c.l.b16 %v243
    %v1047 = vunpack.c.h.b16 %v243
    %v1048 = vunpack.c.l.b16 %v244
    %v1049 = vunpack.c.h.b16 %v244
    %v1050 = vpack.c.b16 %v988, %v986
    %v1051 = vpack.c.b16 %v989, %v987
    %v1052 = vpack.c.b16 %v992, %v990
    %v1053 = vpack.c.b16 %v993, %v991
    %v1054 = vpack.c.b16 %v996, %v994
    %v1055 = vpack.c.b16 %v997, %v995
    %v1056 = vpack.c.b16 %v1000, %v998
    %v1057 = vpack.c.b16 %v1001, %v999
    %v1058 = vpack.c.b16 %v1004, %v1002
    %v1059 = vpack.c.b16 %v1005, %v1003
    %v1060 = vpack.c.b16 %v1008, %v1006
    %v1061 = vpack.c.b16 %v1009, %v1007
    %v1062 = vpack.c.b16 %v1012, %v1010
    %v1063 = vpack.c.b16 %v1013, %v1011
    %v1064 = vpack.c.b16 %v1016, %v1014
    %v1065 = vpack.c.b16 %v1017, %v1015
    %v1066 = vpack.c.b16 %v1020, %v1018
    %v1067 = vpack.c.b16 %v1021, %v1019
    %v1068 = vpack.c.b16 %v1024, %v1022
    %v1069 = vpack.c.b16 %v1025, %v1023
    %v1070 = vpack.c.b16 %v1028, %v1026
    %v1071 = vpack.c.b16 %v1029, %v1027
    %v1072 = vpack.c.b16 %v1032, %v1030
    %v1073 = vpack.c.b16 %v1033, %v1031
    %v1074 = vpack.c.b16 %v1036, %v1034
    %v1075 = vpack.c.b16 %v1037, %v1035
    %v1076 = vpack.c.b16 %v1040, %v1038
    %v1077 = vpack.c.b16 %v1041, %v1039
    %v1078 = vpack.c.b16 %v1044, %v1042
    %v1079 = vpack.c.b16 %v1045, %v1043
    %v1080 = vpack.c.b16 %v1048, %v1046
    %v1081 = vpack.c.b16 %v1049, %v1047
    %1114 = vmatprep.subr.bf16.mxu0 %v1051
    %1115 = vmatpush1.bf16.msra.mxu0 %v1050
    %1116 = vmatprep.subr.bf16.mxu0 %v1053
    %1117 = vmatpush1.bf16.msra.mxu0 %v1052
    %1118 = vmatprep.subr.bf16.mxu0 %v1055
    %1119 = vmatpush1.bf16.msra.mxu0 %v1054
    %1120 = vmatprep.subr.bf16.mxu0 %v1057
    %1121 = vmatpush1.bf16.msra.mxu0 %v1056
    %1122 = vmatprep.subr.bf16.mxu0 %v1059
    %1123 = vmatpush1.bf16.msra.mxu0 %v1058
    %1124 = vmatprep.subr.bf16.mxu0 %v1061
    %1125 = vmatpush1.bf16.msra.mxu0 %v1060
    %1126 = vmatprep.subr.bf16.mxu0 %v1063
    %1127 = vmatpush1.bf16.msra.mxu0 %v1062
    %1128 = vmatprep.subr.bf16.mxu0 %v1065
    %1129 = vmatpush1.bf16.msra.mxu0 %v1064
    %1130 = vmatprep.subr.bf16.mxu0 %v1067
    %1131 = vmatpush1.bf16.msra.mxu0 %v1066
    %1132 = vmatprep.subr.bf16.mxu0 %v1069
    %1133 = vmatpush1.bf16.msra.mxu0 %v1068
    %1134 = vmatprep.subr.bf16.mxu0 %v1071
    %1135 = vmatpush1.bf16.msra.mxu0 %v1070
    %1136 = vmatprep.subr.bf16.mxu0 %v1073
    %1137 = vmatpush1.bf16.msra.mxu0 %v1072
    %1138 = vmatprep.subr.bf16.mxu0 %v1075
    %1139 = vmatpush1.bf16.msra.mxu0 %v1074
    %1140 = vmatprep.subr.bf16.mxu0 %v1077
    %1141 = vmatpush1.bf16.msra.mxu0 %v1076
    %1142 = vmatprep.subr.bf16.mxu0 %v1079
    %1143 = vmatpush1.bf16.msra.mxu0 %v1078
    %1144 = vmatprep.subr.bf16.mxu0 %v1081
    %1145 = vmatpush1.bf16.msra.mxu0 %v1080
    %1146 = vmatprep.mubr.bf16.mxu0 %v942
    %1147 = vmatmul.mubr.bf16.gmra.mrb[0].mxu0 %v941
    %v1148 = vpop.f32.mrb[0].mxu0
    %v1149 = vadd.f32 %v947, %v1148
    %v1150 = vpop.f32.mrb[0].mxu0
    %v1151 = vadd.f32 %v951, %v1150
    %v1152 = vpop.f32.mrb[0].mxu0
    %v1153 = vpop.f32.mrb[0].mxu0
    %1154 = vdwg.mxu0
    %v1155 = vmul.f32 %v1149, %v1149
    %v1156 = vmul.f32 %v1151, %v1151
    %vm1157 = vcmask 1041408
    %v1158 = vsel %vm1157, %v1155, 0.0
    %v1159 = vsel %vm1157, %v1156, 0.0
    %v1160 = vadd.f32 %v1158, %v1159
    %1161 = vadd.xlane.f32.xlu0 %v1160
    %v1162 = vpop.xlane.xlu0 %1161
    %v1163 = vmax.f32 %v1162, 1e-24
    %v1164 = vrsqrt.pop %v1163
    %v1165 = vmul.f32 %v1149, %v1164
    %v1166 = vmul.f32 %v1151, %v1164
    %v1169 = vcombine.low %v1165, %v1166
    %v1171 = vunpack.c.l.s4 1983009808
    %v1172 = vunpack.c.0.s8 %v1171
    %v1173 = vlaneseq
    %v1174 = vshrl.u32 %v1173, 7
    %v1175 = vsub.s32 %v1172, %v1174
    %v1176 = vrot.slane %v1169, %v1175
    %1178 = vst [vmem:[#allocation13] sm:$0xf] %v1176
    %v1179 = vld [vmem:[#allocation5] sm:$0xf]
    %v1182 = vunpack.c.l.s4 1983009808
    %v1183 = vunpack.c.0.s8 %v1182
    %v1184 = vlaneseq
    %v1185 = vshrl.u32 %v1184, 7
    %v1186 = vsub.s32 %v1183, %v1185
    %v1187 = vrot.slane %v1179, %v1186
    %v1188 = vcombine.high %v1187, %v1187
    %v1191 = vpack.c.bf16 %v1187, %v1187
    %v1192 = vpack.c.bf16 %v1188, %v1188
    %1193 = vmatprep.subr.bf16.mxu0 %v371
    %1194 = vmatpush1.bf16.msra.mxu0 %v370
    %1195 = vmatprep.subr.bf16.mxu0 %v373
    %1196 = vmatpush1.bf16.msra.mxu0 %v372
    %1197 = vmatprep.subr.bf16.mxu0 %v375
    %1198 = vmatpush1.bf16.msra.mxu0 %v374
    %1199 = vmatprep.subr.bf16.mxu0 %v377
    %1200 = vmatpush1.bf16.msra.mxu0 %v376
    %1201 = vmatprep.subr.bf16.mxu0 %v379
    %1202 = vmatpush1.bf16.msra.mxu0 %v378
    %1203 = vmatprep.subr.bf16.mxu0 %v381
    %1204 = vmatpush1.bf16.msra.mxu0 %v380
    %1205 = vmatprep.subr.bf16.mxu0 %v383
    %1206 = vmatpush1.bf16.msra.mxu0 %v382
    %1207 = vmatprep.subr.bf16.mxu0 %v385
    %1208 = vmatpush1.bf16.msra.mxu0 %v384
    %1209 = vmatprep.subr.bf16.mxu0 %v387
    %1210 = vmatpush1.bf16.msra.mxu0 %v386
    %1211 = vmatprep.subr.bf16.mxu0 %v389
    %1212 = vmatpush1.bf16.msra.mxu0 %v388
    %1213 = vmatprep.subr.bf16.mxu0 %v391
    %1214 = vmatpush1.bf16.msra.mxu0 %v390
    %1215 = vmatprep.subr.bf16.mxu0 %v393
    %1216 = vmatpush1.bf16.msra.mxu0 %v392
    %1217 = vmatprep.subr.bf16.mxu0 %v395
    %1218 = vmatpush1.bf16.msra.mxu0 %v394
    %1219 = vmatprep.subr.bf16.mxu0 %v397
    %1220 = vmatpush1.bf16.msra.mxu0 %v396
    %1221 = vmatprep.subr.bf16.mxu0 %v399
    %1222 = vmatpush1.bf16.msra.mxu0 %v398
    %1223 = vmatprep.subr.bf16.mxu0 %v401
    %1224 = vmatpush1.bf16.msra.mxu0 %v400
    %1225 = vmatprep.mubr.bf16.mxu0 %v1192
    %1226 = vmatmul.mubr.bf16.gmra.mrb[0].mxu0 %v1191
    %v1227 = vpop.f32.mrb[0].mxu0
    %v1228 = vadd.f32 %v267, %v1227
    %v1229 = vpop.f32.mrb[0].mxu0
    %v1230 = vadd.f32 %v271, %v1229
    %v1231 = vpop.f32.mrb[0].mxu0
    %v1232 = vpop.f32.mrb[0].mxu0
    %1233 = vdwg.mxu0
    %v1234 = vtanh.pop %v1228
    %v1235 = vtanh.pop %v1230
    %v1236 = vpack.c.bf16 %v1234, %v1234
    %v1237 = vpack.c.bf16 %v1235, %v1235
    %1238 = vmatprep.subr.bf16.mxu0 %v587
    %1239 = vmatpush1.bf16.msra.mxu0 %v586
    %1240 = vmatprep.subr.bf16.mxu0 %v589
    %1241 = vmatpush1.bf16.msra.mxu0 %v588
    %1242 = vmatprep.subr.bf16.mxu0 %v591
    %1243 = vmatpush1.bf16.msra.mxu0 %v590
    %1244 = vmatprep.subr.bf16.mxu0 %v593
    %1245 = vmatpush1.bf16.msra.mxu0 %v592
    %1246 = vmatprep.subr.bf16.mxu0 %v595
    %1247 = vmatpush1.bf16.msra.mxu0 %v594
    %1248 = vmatprep.subr.bf16.mxu0 %v597
    %1249 = vmatpush1.bf16.msra.mxu0 %v596
    %1250 = vmatprep.subr.bf16.mxu0 %v599
    %1251 = vmatpush1.bf16.msra.mxu0 %v598
    %1252 = vmatprep.subr.bf16.mxu0 %v601
    %1253 = vmatpush1.bf16.msra.mxu0 %v600
    %1254 = vmatprep.subr.bf16.mxu0 %v603
    %1255 = vmatpush1.bf16.msra.mxu0 %v602
    %1256 = vmatprep.subr.bf16.mxu0 %v605
    %1257 = vmatpush1.bf16.msra.mxu0 %v604
    %1258 = vmatprep.subr.bf16.mxu0 %v607
    %1259 = vmatpush1.bf16.msra.mxu0 %v606
    %1260 = vmatprep.subr.bf16.mxu0 %v609
    %1261 = vmatpush1.bf16.msra.mxu0 %v608
    %1262 = vmatprep.subr.bf16.mxu0 %v611
    %1263 = vmatpush1.bf16.msra.mxu0 %v610
    %1264 = vmatprep.subr.bf16.mxu0 %v613
    %1265 = vmatpush1.bf16.msra.mxu0 %v612
    %1266 = vmatprep.subr.bf16.mxu0 %v615
    %1267 = vmatpush1.bf16.msra.mxu0 %v614
    %1268 = vmatprep.subr.bf16.mxu0 %v617
    %1269 = vmatpush1.bf16.msra.mxu0 %v616
    %1270 = vmatprep.mubr.bf16.mxu0 %v1237
    %1271 = vmatmul.mubr.bf16.gmra.mrb[0].mxu0 %v1236
    %v1272 = vpop.f32.mrb[0].mxu0
    %v1273 = vadd.f32 %v483, %v1272
    %v1274 = vpop.f32.mrb[0].mxu0
    %v1275 = vadd.f32 %v487, %v1274
    %v1276 = vpop.f32.mrb[0].mxu0
    %v1277 = vpop.f32.mrb[0].mxu0
    %1278 = vdwg.mxu0
    %v1279 = vmul.f32 %v1273, 0.5
    %v1280 = vmul.f32 %v1275, 0.5
    %v1281 = vmul.f32 %v1273, 0.044715
    %v1282 = vmul.f32 %v1275, 0.044715
    %v1283 = vmul.f32 %v1281, %v1273
    %v1284 = vmul.f32 %v1282, %v1275
    %v1285 = vmul.f32 %v1283, %v1273
    %v1286 = vmul.f32 %v1284, %v1275
    %v1287 = vadd.f32 %v1273, %v1285
    %v1288 = vadd.f32 %v1275, %v1286
    %v1289 = vmul.f32 %v1287, 0.7978846
    %v1290 = vmul.f32 %v1288, 0.7978846
    %v1291 = vtanh.pop %v1289
    %v1292 = vtanh.pop %v1290
    %v1293 = vadd.f32 %v1291, 1.0
    %v1294 = vadd.f32 %v1292, 1.0
    %v1295 = vmul.f32 %v1279, %v1293
    %v1296 = vmul.f32 %v1280, %v1294
    %v1297 = vpack.c.bf16 %v1295, %v1295
    %v1298 = vpack.c.bf16 %v1296, %v1296
    %1299 = vmatprep.subr.bf16.mxu0 %v819
    %1300 = vmatpush1.bf16.msra.mxu0 %v818
    %1301 = vmatprep.subr.bf16.mxu0 %v821
    %1302 = vmatpush1.bf16.msra.mxu0 %v820
    %1303 = vmatprep.subr.bf16.mxu0 %v823
    %1304 = vmatpush1.bf16.msra.mxu0 %v822
    %1305 = vmatprep.subr.bf16.mxu0 %v825
    %1306 = vmatpush1.bf16.msra.mxu0 %v824
    %1307 = vmatprep.subr.bf16.mxu0 %v827
    %1308 = vmatpush1.bf16.msra.mxu0 %v826
    %1309 = vmatprep.subr.bf16.mxu0 %v829
    %1310 = vmatpush1.bf16.msra.mxu0 %v828
    %1311 = vmatprep.subr.bf16.mxu0 %v831
    %1312 = vmatpush1.bf16.msra.mxu0 %v830
    %1313 = vmatprep.subr.bf16.mxu0 %v833
    %1314 = vmatpush1.bf16.msra.mxu0 %v832
    %1315 = vmatprep.subr.bf16.mxu0 %v835
    %1316 = vmatpush1.bf16.msra.mxu0 %v834
    %1317 = vmatprep.subr.bf16.mxu0 %v837
    %1318 = vmatpush1.bf16.msra.mxu0 %v836
    %1319 = vmatprep.subr.bf16.mxu0 %v839
    %1320 = vmatpush1.bf16.msra.mxu0 %v838
    %1321 = vmatprep.subr.bf16.mxu0 %v841
    %1322 = vmatpush1.bf16.msra.mxu0 %v840
    %1323 = vmatprep.subr.bf16.mxu0 %v843
    %1324 = vmatpush1.bf16.msra.mxu0 %v842
    %1325 = vmatprep.subr.bf16.mxu0 %v845
    %1326 = vmatpush1.bf16.msra.mxu0 %v844
    %1327 = vmatprep.subr.bf16.mxu0 %v847
    %1328 = vmatpush1.bf16.msra.mxu0 %v846
    %1329 = vmatprep.subr.bf16.mxu0 %v849
    %1330 = vmatpush1.bf16.msra.mxu0 %v848
    %1331 = vmatprep.mubr.bf16.mxu0 %v1298
    %1332 = vmatmul.mubr.bf16.gmra.mrb[0].mxu0 %v1297
    %v1333 = vpop.f32.mrb[0].mxu0
    %v1334 = vadd.f32 %v715, %v1333
    %v1335 = vpop.f32.mrb[0].mxu0
    %v1336 = vadd.f32 %v719, %v1335
    %v1337 = vpop.f32.mrb[0].mxu0
    %v1338 = vpop.f32.mrb[0].mxu0
    %1339 = vdwg.mxu0
    %v1340 = vmul.f32 %v1334, 0.5
    %v1341 = vmul.f32 %v1336, 0.5
    %v1342 = vmul.f32 %v1334, 0.044715
    %v1343 = vmul.f32 %v1336, 0.044715
    %v1344 = vmul.f32 %v1342, %v1334
    %v1345 = vmul.f32 %v1343, %v1336
    %v1346 = vmul.f32 %v1344, %v1334
    %v1347 = vmul.f32 %v1345, %v1336
    %v1348 = vadd.f32 %v1334, %v1346
    %v1349 = vadd.f32 %v1336, %v1347
    %v1350 = vmul.f32 %v1348, 0.7978846
    %v1351 = vmul.f32 %v1349, 0.7978846
    %v1352 = vtanh.pop %v1350
    %v1353 = vtanh.pop %v1351
    %v1354 = vadd.f32 %v1352, 1.0
    %v1355 = vadd.f32 %v1353, 1.0
    %v1356 = vmul.f32 %v1340, %v1354
    %v1357 = vmul.f32 %v1341, %v1355
    %v1358 = vpack.c.bf16 %v1356, %v1356
    %v1359 = vpack.c.bf16 %v1357, %v1357
    %1360 = vmatprep.subr.bf16.mxu0 %v1051
    %1361 = vmatpush1.bf16.msra.mxu0 %v1050
    %1362 = vmatprep.subr.bf16.mxu0 %v1053
    %1363 = vmatpush1.bf16.msra.mxu0 %v1052
    %1364 = vmatprep.subr.bf16.mxu0 %v1055
    %1365 = vmatpush1.bf16.msra.mxu0 %v1054
    %1366 = vmatprep.subr.bf16.mxu0 %v1057
    %1367 = vmatpush1.bf16.msra.mxu0 %v1056
    %1368 = vmatprep.subr.bf16.mxu0 %v1059
    %1369 = vmatpush1.bf16.msra.mxu0 %v1058
    %1370 = vmatprep.subr.bf16.mxu0 %v1061
    %1371 = vmatpush1.bf16.msra.mxu0 %v1060
    %1372 = vmatprep.subr.bf16.mxu0 %v1063
    %1373 = vmatpush1.bf16.msra.mxu0 %v1062
    %1374 = vmatprep.subr.bf16.mxu0 %v1065
    %1375 = vmatpush1.bf16.msra.mxu0 %v1064
    %1376 = vmatprep.subr.bf16.mxu0 %v1067
    %1377 = vmatpush1.bf16.msra.mxu0 %v1066
    %1378 = vmatprep.subr.bf16.mxu0 %v1069
    %1379 = vmatpush1.bf16.msra.mxu0 %v1068
    %1380 = vmatprep.subr.bf16.mxu0 %v1071
    %1381 = vmatpush1.bf16.msra.mxu0 %v1070
    %1382 = vmatprep.subr.bf16.mxu0 %v1073
    %1383 = vmatpush1.bf16.msra.mxu0 %v1072
    %1384 = vmatprep.subr.bf16.mxu0 %v1075
    %1385 = vmatpush1.bf16.msra.mxu0 %v1074
    %1386 = vmatprep.subr.bf16.mxu0 %v1077
    %1387 = vmatpush1.bf16.msra.mxu0 %v1076
    %1388 = vmatprep.subr.bf16.mxu0 %v1079
    %1389 = vmatpush1.bf16.msra.mxu0 %v1078
    %1390 = vmatprep.subr.bf16.mxu0 %v1081
    %1391 = vmatpush1.bf16.msra.mxu0 %v1080
    %1392 = vmatprep.mubr.bf16.mxu0 %v1359
    %1393 = vmatmul.mubr.bf16.gmra.mrb[0].mxu0 %v1358
    %v1394 = vpop.f32.mrb[0].mxu0
    %v1395 = vadd.f32 %v947, %v1394
    %v1396 = vpop.f32.mrb[0].mxu0
    %v1397 = vadd.f32 %v951, %v1396
    %v1398 = vpop.f32.mrb[0].mxu0
    %v1399 = vpop.f32.mrb[0].mxu0
    %1400 = vdwg.mxu0
    %v1401 = vmul.f32 %v1395, %v1395
    %v1402 = vmul.f32 %v1397, %v1397
    %v1403 = vsel %vm1157, %v1401, 0.0
    %v1404 = vsel %vm1157, %v1402, 0.0
    %v1405 = vadd.f32 %v1403, %v1404
    %1406 = vadd.xlane.f32.xlu0 %v1405
    %v1407 = vpop.xlane.xlu0 %1406
    %v1408 = vmax.f32 %v1407, 1e-24
    %v1409 = vrsqrt.pop %v1408
    %v1410 = vmul.f32 %v1395, %v1409
    %v1411 = vmul.f32 %v1397, %v1409
    %v1414 = vcombine.low %v1410, %v1411
    %v1416 = vunpack.c.l.s4 1983009808
    %v1417 = vunpack.c.0.s8 %v1416
    %v1418 = vlaneseq
    %v1419 = vshrl.u32 %v1418, 7
    %v1420 = vsub.s32 %v1417, %v1419
    %v1421 = vrot.slane %v1414, %v1420
    %1423 = vst [vmem:[#allocation14] sm:$0xf] %v1421
    // Predicated region
    $region66: #{tpu_custom_call.1} parent=1 // pred_check
      _
    $region67: #{tpu_custom_call.1} parent=1 // pred_check_branch
      %1425 = sbr.rel (0) target = $region69
    $region68: #{tpu_custom_call.1} parent=1 // pred_region
      %s1427 = ssub.s32 64, 64
      %1428 = vsyncadd [#allocation4], %s1427
      %s1430 = sshll.u32 [#allocation13], 4
      %s1431 = int_to_ptr.vmem [resolvable:$true] %s1430
      %1433 = dma.vmem_to_hbm [thread:$0]  %s1431, 64, %s10, [#allocation4]
    $region69: #{tpu_custom_call.1} parent=1 // pred_fallthru
      _
    // Predicated region
    $region70: #{tpu_custom_call.1} parent=1 // pred_check
      _
    $region71: #{tpu_custom_call.1} parent=1 // pred_check_branch
      %1435 = sbr.rel (0) target = $region73
    $region72: #{tpu_custom_call.1} parent=1 // pred_region
      %s1437 = ssub.s32 64, 64
      %1438 = vsyncadd [#allocation15], %s1437
      %s1440 = sshll.u32 [#allocation14], 4
      %s1441 = int_to_ptr.vmem [resolvable:$true] %s1440
      %1443 = dma.vmem_to_hbm [thread:$0]  %s1441, 64, %s11, [#allocation15]
    $region73: #{tpu_custom_call.1} parent=1 // pred_fallthru
      _
    // Predicated region
    $region74: #{tpu_custom_call.1} parent=1 // pred_check
      _
    $region75: #{tpu_custom_call.1} parent=1 // pred_check_branch
      %1445 = sbr.rel (0) target = $region77
    $region76: #{tpu_custom_call.1} parent=1 // pred_region
      %1446 = dma.done [#allocation4], 64
    $region77: #{tpu_custom_call.1} parent=1 // pred_fallthru
      _
    // Predicated region
    $region78: #{tpu_custom_call.1} parent=1 // pred_check
      _
    $region79: #{tpu_custom_call.1} parent=1 // pred_check_branch
      %1448 = sbr.rel (0) target = $region81
    $region80: #{tpu_custom_call.1} parent=1 // pred_region
      %1449 = dma.done [#allocation15], 64
    $region81: #{tpu_custom_call.1} parent=1 // pred_fallthru
      _
    %1450 = vsyncpa [#allocation3], 1
    %1451 = vsyncpa [#allocation6], 1
    %1452 = vsyncpa [#allocation9], 1
    %1453 = vsyncpa [#allocation12], 1
    %1454 = vsyncpa [#allocation4], 1
    %1455 = vsyncpa [#allocation15], 1

// kernel: tpu_custom_call.1
$region0: #{tpu_custom_call.1}
  #allocation0 [shape = 'u32[]', space=smem, size = 0x4, offset = 0x4, fixed_abs, tag = 'smem constant byte address 0x4 - core index']
  #allocation1 [shape = 'u32[144,128]{1,0:T(1,128)}', space=vmem, size = 0x12000, scoped, tag = 'internal scratch']
  %s0 = inlined_call_operand.hbm [shape: f32[2,256], index: 0, kind: input, shape index: {}]
  %s1 = inlined_call_operand.hbm [shape: f32[2,256], index: 1, kind: input, shape index: {}]
  %s2 = inlined_call_operand.hbm [shape: bf16[256,256], index: 2, kind: input, shape index: {}]
  %s3 = inlined_call_operand.vmem [shape: f32[1,256], index: 3, kind: input, shape index: {}]
  %s4 = inlined_call_operand.hbm [shape: bf16[256,256], index: 4, kind: input, shape index: {}]
  %s5 = inlined_call_operand.vmem [shape: f32[1,256], index: 5, kind: input, shape index: {}]
  %s6 = inlined_call_operand.hbm [shape: bf16[256,256], index: 6, kind: input, shape index: {}]
  %s7 = inlined_call_operand.vmem [shape: f32[1,256], index: 7, kind: input, shape index: {}]
  %s8 = inlined_call_operand.hbm [shape: bf16[256,256], index: 8, kind: input, shape index: {}]
  %s9 = inlined_call_operand.vmem [shape: f32[1,256], index: 9, kind: input, shape index: {}]
  %s10 = inlined_call_operand.hbm [shape: f32[2,256], index: 10, kind: output, shape index: {0}]
  %s11 = inlined_call_operand.hbm [shape: f32[2,256], index: 11, kind: output, shape index: {1}]
  %12 = xla_tuple %s10, %s11
  %s13 = sld [smem:[#allocation0]]
  $region82: #{tpu_custom_call.1} parent=0
    _
  %s15 = ssub.s32 1, %s13
  %s16 = scalar_select 0, %s15, %s13
  $region1: #{tpu_custom_call.1} parent=0
    #allocation2 [shape = 'u8[2048]{0}', space=vmem, size = 0x800, scoped, tag = 'input window, operand 0, single buffered']
    #allocation3 [shape = 's32[1]{0}', space=sflag, size = 0x4, scoped, tag = 'scoped memory for tpu_custom_call.1']
    #allocation4 [shape = 's32[1]{0}', space=sflag, size = 0x4, scoped, tag = 'scoped memory for tpu_custom_call.1']
    #allocation5 [shape = 'u8[2048]{0}', space=vmem, size = 0x800, scoped, tag = 'input window, operand 1, single buffered']
    #allocation6 [shape = 's32[1]{0}', space=sflag, size = 0x4, scoped, tag = 'scoped memory for tpu_custom_call.1']
    #allocation7 [shape = 'u8[131072]{0}', space=vmem, size = 0x20000, scoped, tag = 'input window, operand 2, single buffered']
    #allocation8 [shape = 'u8[131072]{0}', space=vmem, size = 0x20000, scoped, tag = 'input window, operand 4, single buffered']
    #allocation9 [shape = 's32[1]{0}', space=sflag, size = 0x4, scoped, tag = 'scoped memory for tpu_custom_call.1']
    #allocation10 [shape = 'u8[131072]{0}', space=vmem, size = 0x20000, scoped, tag = 'input window, operand 6, single buffered']
    #allocation11 [shape = 'u8[131072]{0}', space=vmem, size = 0x20000, scoped, tag = 'input window, operand 8, single buffered']
    #allocation12 [shape = 's32[1]{0}', space=sflag, size = 0x4, scoped, tag = 'scoped memory for tpu_custom_call.1']
    #allocation13 [shape = 'u8[2048]{0}', space=vmem, size = 0x800, scoped, tag = 'output window, operand 0, single buffered']
    #allocation14 [shape = 'u8[2048]{0}', space=vmem, size = 0x800, scoped, tag = 'output window, operand 1, single buffered']
    #allocation15 [shape = 's32[1]{0}', space=sflag, size = 0x4, scoped, tag = 'scoped memory for tpu_custom_call.1']
    %17 = vsyncpa [#allocation3], 0
    %18 = vsyncpa [#allocation6], 0
    %19 = vsyncpa [#allocation9], 0
    %20 = vsyncpa [#allocation12], 0
    %21 = vsyncpa [#allocation4], 0
    %22 = vsyncpa [#allocation15], 0
    // Predicated region
    $region2: #{tpu_custom_call.1} parent=1 // pred_check
      _
    $region3: #{tpu_custom_call.1} parent=1 // pred_check_branch
      %24 = sbr.rel (0) target = $region5
    $region4: #{tpu_custom_call.1} parent=1 // pred_region
      %s26 = ssub.s32 64, 64
      %27 = vsyncadd [#allocation3], %s26
      %s29 = sshll.u32 [#allocation2], 4
      %s30 = int_to_ptr.vmem [resolvable:$true] %s29
      %32 = dma.hbm_to_vmem [thread:$0]  %s0, 64, %s30, [#allocation3]
    $region5: #{tpu_custom_call.1} parent=1 // pred_fallthru
      _
    // Predicated region
    $region6: #{tpu_custom_call.1} parent=1 // pred_check
      _
    $region7: #{tpu_custom_call.1} parent=1 // pred_check_branch
      %34 = sbr.rel (0) target = $region9
    $region8: #{tpu_custom_call.1} parent=1 // pred_region
      %s36 = ssub.s32 64, 64
      %37 = vsyncadd [#allocation6], %s36
      %s39 = sshll.u32 [#allocation5], 4
      %s40 = int_to_ptr.vmem [resolvable:$true] %s39
      %42 = dma.hbm_to_vmem [thread:$0]  %s1, 64, %s40, [#allocation6]
    $region9: #{tpu_custom_call.1} parent=1 // pred_fallthru
      _
    // Predicated region
    $region10: #{tpu_custom_call.1} parent=1 // pred_check
      _
    $region11: #{tpu_custom_call.1} parent=1 // pred_check_branch
      %44 = sbr.rel (0) target = $region13
    $region12: #{tpu_custom_call.1} parent=1 // pred_region
      %s46 = ssub.s32 4096, 4096
      %47 = vsyncadd [#allocation6], %s46
      %s48 = sshll.u32 [#allocation7], 4
      %s49 = int_to_ptr.vmem [resolvable:$true] %s48
      %54 = dma.hbm_to_vmem [thread:$0]  %s2, 4096, %s49, [#allocation6], 128, 128, 8
    $region13: #{tpu_custom_call.1} parent=1 // pred_fallthru
      _
    // Predicated region
    $region14: #{tpu_custom_call.1} parent=1 // pred_check
      _
    $region15: #{tpu_custom_call.1} parent=1 // pred_check_branch
      %56 = sbr.rel (0) target = $region17
    $region16: #{tpu_custom_call.1} parent=1 // pred_region
      _
    $region17: #{tpu_custom_call.1} parent=1 // pred_fallthru
      _
    // Predicated region
    $region18: #{tpu_custom_call.1} parent=1 // pred_check
      _
    $region19: #{tpu_custom_call.1} parent=1 // pred_check_branch
      %58 = sbr.rel (0) target = $region21
    $region20: #{tpu_custom_call.1} parent=1 // pred_region
      %s60 = ssub.s32 4096, 4096
      %61 = vsyncadd [#allocation9], %s60
      %s62 = sshll.u32 [#allocation8], 4
      %s63 = int_to_ptr.vmem [resolvable:$true] %s62
      %68 = dma.hbm_to_vmem [thread:$0]  %s4, 4096, %s63, [#allocation9], 128, 128, 8
    $region21: #{tpu_custom_call.1} parent=1 // pred_fallthru
      _
    // Predicated region
    $region22: #{tpu_custom_call.1} parent=1 // pred_check
      _
    $region23: #{tpu_custom_call.1} parent=1 // pred_check_branch
      %70 = sbr.rel (0) target = $region25
    $region24: #{tpu_custom_call.1} parent=1 // pred_region
      _
    $region25: #{tpu_custom_call.1} parent=1 // pred_fallthru
      _
    // Predicated region
    $region26: #{tpu_custom_call.1} parent=1 // pred_check
      _
    $region27: #{tpu_custom_call.1} parent=1 // pred_check_branch
      %72 = sbr.rel (0) target = $region29
    $region28: #{tpu_custom_call.1} parent=1 // pred_region
      %s74 = ssub.s32 4096, 4096
      %75 = vsyncadd [#allocation9], %s74
      %s76 = sshll.u32 [#allocation10], 4
      %s77 = int_to_ptr.vmem [resolvable:$true] %s76
      %82 = dma.hbm_to_vmem [thread:$0]  %s6, 4096, %s77, [#allocation9], 128, 128, 8
    $region29: #{tpu_custom_call.1} parent=1 // pred_fallthru
      _
    // Predicated region
    $region30: #{tpu_custom_call.1} parent=1 // pred_check
      _
    $region31: #{tpu_custom_call.1} parent=1 // pred_check_branch
      %84 = sbr.rel (0) target = $region33
    $region32: #{tpu_custom_call.1} parent=1 // pred_region
      _
    $region33: #{tpu_custom_call.1} parent=1 // pred_fallthru
      _
    // Predicated region
    $region34: #{tpu_custom_call.1} parent=1 // pred_check
      _
    $region35: #{tpu_custom_call.1} parent=1 // pred_check_branch
      %86 = sbr.rel (0) target = $region37
    $region36: #{tpu_custom_call.1} parent=1 // pred_region
      %s88 = ssub.s32 4096, 4096
      %89 = vsyncadd [#allocation12], %s88
      %s90 = sshll.u32 [#allocation11], 4
      %s91 = int_to_ptr.vmem [resolvable:$true] %s90
      %96 = dma.hbm_to_vmem [thread:$0]  %s8, 4096, %s91, [#allocation12], 128, 128, 8
    $region37: #{tpu_custom_call.1} parent=1 // pred_fallthru
      _
    // Predicated region
    $region38: #{tpu_custom_call.1} parent=1 // pred_check
      _
    $region39: #{tpu_custom_call.1} parent=1 // pred_check_branch
      %98 = sbr.rel (0) target = $region41
    $region40: #{tpu_custom_call.1} parent=1 // pred_region
      _
    $region41: #{tpu_custom_call.1} parent=1 // pred_fallthru
      _
    // Predicated region
    $region42: #{tpu_custom_call.1} parent=1 // pred_check
      _
    $region43: #{tpu_custom_call.1} parent=1 // pred_check_branch
      %100 = sbr.rel (0) target = $region45
    $region44: #{tpu_custom_call.1} parent=1 // pred_region
      %101 = dma.done [#allocation3], 64
    $region45: #{tpu_custom_call.1} parent=1 // pred_fallthru
      _
    // Predicated region
    $region46: #{tpu_custom_call.1} parent=1 // pred_check
      _
    $region47: #{tpu_custom_call.1} parent=1 // pred_check_branch
      %103 = sbr.rel (0) target = $region49
    $region48: #{tpu_custom_call.1} parent=1 // pred_region
      %104 = dma.done [#allocation6], 64
    $region49: #{tpu_custom_call.1} parent=1 // pred_fallthru
      _
    // Predicated region
    $region50: #{tpu_custom_call.1} parent=1 // pred_check
      _
    $region51: #{tpu_custom_call.1} parent=1 // pred_check_branch
      %106 = sbr.rel (0) target = $region53
    $region52: #{tpu_custom_call.1} parent=1 // pred_region
      %107 = dma.done [#allocation6], 4096
    $region53: #{tpu_custom_call.1} parent=1 // pred_fallthru
      _
    // Predicated region
    $region54: #{tpu_custom_call.1} parent=1 // pred_check
      _
    $region55: #{tpu_custom_call.1} parent=1 // pred_check_branch
      %109 = sbr.rel (0) target = $region57
    $region56: #{tpu_custom_call.1} parent=1 // pred_region
      %110 = dma.done [#allocation9], 4096
    $region57: #{tpu_custom_call.1} parent=1 // pred_fallthru
      _
    // Predicated region
    $region58: #{tpu_custom_call.1} parent=1 // pred_check
      _
    $region59: #{tpu_custom_call.1} parent=1 // pred_check_branch
      %112 = sbr.rel (0) target = $region61
    $region60: #{tpu_custom_call.1} parent=1 // pred_region
      %113 = dma.done [#allocation9], 4096
    $region61: #{tpu_custom_call.1} parent=1 // pred_fallthru
      _
    // Predicated region
    $region62: #{tpu_custom_call.1} parent=1 // pred_check
      _
    $region63: #{tpu_custom_call.1} parent=1 // pred_check_branch
      %115 = sbr.rel (0) target = $region65
    $region64: #{tpu_custom_call.1} parent=1 // pred_region
      %116 = dma.done [#allocation12], 4096
    $region65: #{tpu_custom_call.1} parent=1 // pred_fallthru
      _
    %v117 = vld [vmem:[#allocation7] sm:$0xff]
    %v118 = vld [vmem:[#allocation7 + $0x8] sm:$0xff]
    %v119 = vld [vmem:[#allocation7 + $0x10] sm:$0xff]
    %v120 = vld [vmem:[#allocation7 + $0x18] sm:$0xff]
    %v121 = vld [vmem:[#allocation7 + $0x20] sm:$0xff]
    %v122 = vld [vmem:[#allocation7 + $0x28] sm:$0xff]
    %v123 = vld [vmem:[#allocation7 + $0x30] sm:$0xff]
    %v124 = vld [vmem:[#allocation7 + $0x38] sm:$0xff]
    %v125 = vld [vmem:[#allocation7 + $0x40] sm:$0xff]
    %v126 = vld [vmem:[#allocation7 + $0x48] sm:$0xff]
    %v127 = vld [vmem:[#allocation7 + $0x50] sm:$0xff]
    %v128 = vld [vmem:[#allocation7 + $0x58] sm:$0xff]
    %v129 = vld [vmem:[#allocation7 + $0x60] sm:$0xff]
    %v130 = vld [vmem:[#allocation7 + $0x68] sm:$0xff]
    %v131 = vld [vmem:[#allocation7 + $0x70] sm:$0xff]
    %v132 = vld [vmem:[#allocation7 + $0x78] sm:$0xff]
    %v133 = vld [vmem:[#allocation7 + $0x80] sm:$0xff]
    %v134 = vld [vmem:[#allocation7 + $0x88] sm:$0xff]
    %v135 = vld [vmem:[#allocation7 + $0x90] sm:$0xff]
    %v136 = vld [vmem:[#allocation7 + $0x98] sm:$0xff]
    %v137 = vld [vmem:[#allocation7 + $0xa0] sm:$0xff]
    %v138 = vld [vmem:[#allocation7 + $0xa8] sm:$0xff]
    %v139 = vld [vmem:[#allocation7 + $0xb0] sm:$0xff]
    %v140 = vld [vmem:[#allocation7 + $0xb8] sm:$0xff]
    %v141 = vld [vmem:[#allocation7 + $0xc0] sm:$0xff]
    %v142 = vld [vmem:[#allocation7 + $0xc8] sm:$0xff]
    %v143 = vld [vmem:[#allocation7 + $0xd0] sm:$0xff]
    %v144 = vld [vmem:[#allocation7 + $0xd8] sm:$0xff]
    %v145 = vld [vmem:[#allocation7 + $0xe0] sm:$0xff]
    %v146 = vld [vmem:[#allocation7 + $0xe8] sm:$0xff]
    %v147 = vld [vmem:[#allocation7 + $0xf0] sm:$0xff]
    %v148 = vld [vmem:[#allocation7 + $0xf8] sm:$0xff]
    %v149 = vld [vmem:[#allocation8] sm:$0xff]
    %v150 = vld [vmem:[#allocation8 + $0x8] sm:$0xff]
    %v151 = vld [vmem:[#allocation8 + $0x10] sm:$0xff]
    %v152 = vld [vmem:[#allocation8 + $0x18] sm:$0xff]
    %v153 = vld [vmem:[#allocation8 + $0x20] sm:$0xff]
    %v154 = vld [vmem:[#allocation8 + $0x28] sm:$0xff]
    %v155 = vld [vmem:[#allocation8 + $0x30] sm:$0xff]
    %v156 = vld [vmem:[#allocation8 + $0x38] sm:$0xff]
    %v157 = vld [vmem:[#allocation8 + $0x40] sm:$0xff]
    %v158 = vld [vmem:[#allocation8 + $0x48] sm:$0xff]
    %v159 = vld [vmem:[#allocation8 + $0x50] sm:$0xff]
    %v160 = vld [vmem:[#allocation8 + $0x58] sm:$0xff]
    %v161 = vld [vmem:[#allocation8 + $0x60] sm:$0xff]
    %v162 = vld [vmem:[#allocation8 + $0x68] sm:$0xff]
    %v163 = vld [vmem:[#allocation8 + $0x70] sm:$0xff]
    %v164 = vld [vmem:[#allocation8 + $0x78] sm:$0xff]
    %v165 = vld [vmem:[#allocation8 + $0x80] sm:$0xff]
    %v166 = vld [vmem:[#allocation8 + $0x88] sm:$0xff]
    %v167 = vld [vmem:[#allocation8 + $0x90] sm:$0xff]
    %v168 = vld [vmem:[#allocation8 + $0x98] sm:$0xff]
    %v169 = vld [vmem:[#allocation8 + $0xa0] sm:$0xff]
    %v170 = vld [vmem:[#allocation8 + $0xa8] sm:$0xff]
    %v171 = vld [vmem:[#allocation8 + $0xb0] sm:$0xff]
    %v172 = vld [vmem:[#allocation8 + $0xb8] sm:$0xff]
    %v173 = vld [vmem:[#allocation8 + $0xc0] sm:$0xff]
    %v174 = vld [vmem:[#allocation8 + $0xc8] sm:$0xff]
    %v175 = vld [vmem:[#allocation8 + $0xd0] sm:$0xff]
    %v176 = vld [vmem:[#allocation8 + $0xd8] sm:$0xff]
    %v177 = vld [vmem:[#allocation8 + $0xe0] sm:$0xff]
    %v178 = vld [vmem:[#allocation8 + $0xe8] sm:$0xff]
    %v179 = vld [vmem:[#allocation8 + $0xf0] sm:$0xff]
    %v180 = vld [vmem:[#allocation8 + $0xf8] sm:$0xff]
    %v181 = vld [vmem:[#allocation10] sm:$0xff]
    %v182 = vld [vmem:[#allocation10 + $0x8] sm:$0xff]
    %v183 = vld [vmem:[#allocation10 + $0x10] sm:$0xff]
    %v184 = vld [vmem:[#allocation10 + $0x18] sm:$0xff]
    %v185 = vld [vmem:[#allocation10 + $0x20] sm:$0xff]
    %v186 = vld [vmem:[#allocation10 + $0x28] sm:$0xff]
    %v187 = vld [vmem:[#allocation10 + $0x30] sm:$0xff]
    %v188 = vld [vmem:[#allocation10 + $0x38] sm:$0xff]
    %v189 = vld [vmem:[#allocation10 + $0x40] sm:$0xff]
    %v190 = vld [vmem:[#allocation10 + $0x48] sm:$0xff]
    %v191 = vld [vmem:[#allocation10 + $0x50] sm:$0xff]
    %v192 = vld [vmem:[#allocation10 + $0x58] sm:$0xff]
    %v193 = vld [vmem:[#allocation10 + $0x60] sm:$0xff]
    %v194 = vld [vmem:[#allocation10 + $0x68] sm:$0xff]
    %v195 = vld [vmem:[#allocation10 + $0x70] sm:$0xff]
    %v196 = vld [vmem:[#allocation10 + $0x78] sm:$0xff]
    %v197 = vld [vmem:[#allocation10 + $0x80] sm:$0xff]
    %v198 = vld [vmem:[#allocation10 + $0x88] sm:$0xff]
    %v199 = vld [vmem:[#allocation10 + $0x90] sm:$0xff]
    %v200 = vld [vmem:[#allocation10 + $0x98] sm:$0xff]
    %v201 = vld [vmem:[#allocation10 + $0xa0] sm:$0xff]
    %v202 = vld [vmem:[#allocation10 + $0xa8] sm:$0xff]
    %v203 = vld [vmem:[#allocation10 + $0xb0] sm:$0xff]
    %v204 = vld [vmem:[#allocation10 + $0xb8] sm:$0xff]
    %v205 = vld [vmem:[#allocation10 + $0xc0] sm:$0xff]
    %v206 = vld [vmem:[#allocation10 + $0xc8] sm:$0xff]
    %v207 = vld [vmem:[#allocation10 + $0xd0] sm:$0xff]
    %v208 = vld [vmem:[#allocation10 + $0xd8] sm:$0xff]
    %v209 = vld [vmem:[#allocation10 + $0xe0] sm:$0xff]
    %v210 = vld [vmem:[#allocation10 + $0xe8] sm:$0xff]
    %v211 = vld [vmem:[#allocation10 + $0xf0] sm:$0xff]
    %v212 = vld [vmem:[#allocation10 + $0xf8] sm:$0xff]
    %v213 = vld [vmem:[#allocation11] sm:$0xff]
    %v214 = vld [vmem:[#allocation11 + $0x8] sm:$0xff]
    %v215 = vld [vmem:[#allocation11 + $0x10] sm:$0xff]
    %v216 = vld [vmem:[#allocation11 + $0x18] sm:$0xff]
    %v217 = vld [vmem:[#allocation11 + $0x20] sm:$0xff]
    %v218 = vld [vmem:[#allocation11 + $0x28] sm:$0xff]
    %v219 = vld [vmem:[#allocation11 + $0x30] sm:$0xff]
    %v220 = vld [vmem:[#allocation11 + $0x38] sm:$0xff]
    %v221 = vld [vmem:[#allocation11 + $0x40] sm:$0xff]
    %v222 = vld [vmem:[#allocation11 + $0x48] sm:$0xff]
    %v223 = vld [vmem:[#allocation11 + $0x50] sm:$0xff]
    %v224 = vld [vmem:[#allocation11 + $0x58] sm:$0xff]
    %v225 = vld [vmem:[#allocation11 + $0x60] sm:$0xff]
    %v226 = vld [vmem:[#allocation11 + $0x68] sm:$0xff]
    %v227 = vld [vmem:[#allocation11 + $0x70] sm:$0xff]
    %v228 = vld [vmem:[#allocation11 + $0x78] sm:$0xff]
    %v229 = vld [vmem:[#allocation11 + $0x80] sm:$0xff]
    %v230 = vld [vmem:[#allocation11 + $0x88] sm:$0xff]
    %v231 = vld [vmem:[#allocation11 + $0x90] sm:$0xff]
    %v232 = vld [vmem:[#allocation11 + $0x98] sm:$0xff]
    %v233 = vld [vmem:[#allocation11 + $0xa0] sm:$0xff]
    %v234 = vld [vmem:[#allocation11 + $0xa8] sm:$0xff]
    %v235 = vld [vmem:[#allocation11 + $0xb0] sm:$0xff]
    %v236 = vld [vmem:[#allocation11 + $0xb8] sm:$0xff]
    %v237 = vld [vmem:[#allocation11 + $0xc0] sm:$0xff]
    %v238 = vld [vmem:[#allocation11 + $0xc8] sm:$0xff]
    %v239 = vld [vmem:[#allocation11 + $0xd0] sm:$0xff]
    %v240 = vld [vmem:[#allocation11 + $0xd8] sm:$0xff]
    %v241 = vld [vmem:[#allocation11 + $0xe0] sm:$0xff]
    %v242 = vld [vmem:[#allocation11 + $0xe8] sm:$0xff]
    %v243 = vld [vmem:[#allocation11 + $0xf0] sm:$0xff]
    %v244 = vld [vmem:[#allocation11 + $0xf8] sm:$0xff]
    %v245 = vld [vmem:[%s3] sm:$0x3]
    %v246 = vld [vmem:[%s5] sm:$0x3]
    %v247 = vld [vmem:[%s7] sm:$0x3]
    %v248 = vld [vmem:[%s9] sm:$0x3]
    %v249 = vld [vmem:[#allocation2] sm:$0xf]
    %v252 = vunpack.c.l.s4 1983009808
    %v253 = vunpack.c.0.s8 %v252
    %v254 = vlaneseq
    %v255 = vshrl.u32 %v254, 7
    %v256 = vsub.s32 %v253, %v255
    %v257 = vrot.slane %v249, %v256
    %v258 = vcombine.high %v257, %v257
    %v261 = vpack.c.bf16 %v257, %v257
    %v262 = vpack.c.bf16 %v258, %v258
    %v264 = vlaneseq
    %v265 = vshrl.u32 %v264, 7
    %v266 = vsub.s32 0, %v265
    %v267 = vrot.slane %v245, %v266
    %v268 = vlaneseq
    %v269 = vshrl.u32 %v268, 7
    %v270 = vsub.s32 1, %v269
    %v271 = vrot.slane %v245, %v270
    %v306 = vunpack.c.l.b16 %v117
    %v307 = vunpack.c.h.b16 %v117
    %v308 = vunpack.c.l.b16 %v118
    %v309 = vunpack.c.h.b16 %v118
    %v310 = vunpack.c.l.b16 %v119
    %v311 = vunpack.c.h.b16 %v119
    %v312 = vunpack.c.l.b16 %v120
    %v313 = vunpack.c.h.b16 %v120
    %v314 = vunpack.c.l.b16 %v121
    %v315 = vunpack.c.h.b16 %v121
    %v316 = vunpack.c.l.b16 %v122
    %v317 = vunpack.c.h.b16 %v122
    %v318 = vunpack.c.l.b16 %v123
    %v319 = vunpack.c.h.b16 %v123
    %v320 = vunpack.c.l.b16 %v124
    %v321 = vunpack.c.h.b16 %v124
    %v322 = vunpack.c.l.b16 %v125
    %v323 = vunpack.c.h.b16 %v125
    %v324 = vunpack.c.l.b16 %v126
    %v325 = vunpack.c.h.b16 %v126
    %v326 = vunpack.c.l.b16 %v127
    %v327 = vunpack.c.h.b16 %v127
    %v328 = vunpack.c.l.b16 %v128
    %v329 = vunpack.c.h.b16 %v128
    %v330 = vunpack.c.l.b16 %v129
    %v331 = vunpack.c.h.b16 %v129
    %v332 = vunpack.c.l.b16 %v130
    %v333 = vunpack.c.h.b16 %v130
    %v334 = vunpack.c.l.b16 %v131
    %v335 = vunpack.c.h.b16 %v131
    %v336 = vunpack.c.l.b16 %v132
    %v337 = vunpack.c.h.b16 %v132
    %v338 = vunpack.c.l.b16 %v133
    %v339 = vunpack.c.h.b16 %v133
    %v340 = vunpack.c.l.b16 %v134
    %v341 = vunpack.c.h.b16 %v134
    %v342 = vunpack.c.l.b16 %v135
    %v343 = vunpack.c.h.b16 %v135
    %v344 = vunpack.c.l.b16 %v136
    %v345 = vunpack.c.h.b16 %v136
    %v346 = vunpack.c.l.b16 %v137
    %v347 = vunpack.c.h.b16 %v137
    %v348 = vunpack.c.l.b16 %v138
    %v349 = vunpack.c.h.b16 %v138
    %v350 = vunpack.c.l.b16 %v139
    %v351 = vunpack.c.h.b16 %v139
    %v352 = vunpack.c.l.b16 %v140
    %v353 = vunpack.c.h.b16 %v140
    %v354 = vunpack.c.l.b16 %v141
    %v355 = vunpack.c.h.b16 %v141
    %v356 = vunpack.c.l.b16 %v142
    %v357 = vunpack.c.h.b16 %v142
    %v358 = vunpack.c.l.b16 %v143
    %v359 = vunpack.c.h.b16 %v143
    %v360 = vunpack.c.l.b16 %v144
    %v361 = vunpack.c.h.b16 %v144
    %v362 = vunpack.c.l.b16 %v145
    %v363 = vunpack.c.h.b16 %v145
    %v364 = vunpack.c.l.b16 %v146
    %v365 = vunpack.c.h.b16 %v146
    %v366 = vunpack.c.l.b16 %v147
    %v367 = vunpack.c.h.b16 %v147
    %v368 = vunpack.c.l.b16 %v148
    %v369 = vunpack.c.h.b16 %v148
    %v370 = vpack.c.b16 %v308, %v306
    %v371 = vpack.c.b16 %v309, %v307
    %v372 = vpack.c.b16 %v312, %v310
    %v373 = vpack.c.b16 %v313, %v311
    %v374 = vpack.c.b16 %v316, %v314
    %v375 = vpack.c.b16 %v317, %v315
    %v376 = vpack.c.b16 %v320, %v318
    %v377 = vpack.c.b16 %v321, %v319
    %v378 = vpack.c.b16 %v324, %v322
    %v379 = vpack.c.b16 %v325, %v323
    %v380 = vpack.c.b16 %v328, %v326
    %v381 = vpack.c.b16 %v329, %v327
    %v382 = vpack.c.b16 %v332, %v330
    %v383 = vpack.c.b16 %v333, %v331
    %v384 = vpack.c.b16 %v336, %v334
    %v385 = vpack.c.b16 %v337, %v335
    %v386 = vpack.c.b16 %v340, %v338
    %v387 = vpack.c.b16 %v341, %v339
    %v388 = vpack.c.b16 %v344, %v342
    %v389 = vpack.c.b16 %v345, %v343
    %v390 = vpack.c.b16 %v348, %v346
    %v391 = vpack.c.b16 %v349, %v347
    %v392 = vpack.c.b16 %v352, %v350
    %v393 = vpack.c.b16 %v353, %v351
    %v394 = vpack.c.b16 %v356, %v354
    %v395 = vpack.c.b16 %v357, %v355
    %v396 = vpack.c.b16 %v360, %v358
    %v397 = vpack.c.b16 %v361, %v359
    %v398 = vpack.c.b16 %v364, %v362
    %v399 = vpack.c.b16 %v365, %v363
    %v400 = vpack.c.b16 %v368, %v366
    %v401 = vpack.c.b16 %v369, %v367
    %434 = vmatprep.subr.bf16.mxu0 %v371
    %435 = vmatpush1.bf16.msra.mxu0 %v370
    %436 = vmatprep.subr.bf16.mxu0 %v373
    %437 = vmatpush1.bf16.msra.mxu0 %v372
    %438 = vmatprep.subr.bf16.mxu0 %v375
    %439 = vmatpush1.bf16.msra.mxu0 %v374
    %440 = vmatprep.subr.bf16.mxu0 %v377
    %441 = vmatpush1.bf16.msra.mxu0 %v376
    %442 = vmatprep.subr.bf16.mxu0 %v379
    %443 = vmatpush1.bf16.msra.mxu0 %v378
    %444 = vmatprep.subr.bf16.mxu0 %v381
    %445 = vmatpush1.bf16.msra.mxu0 %v380
    %446 = vmatprep.subr.bf16.mxu0 %v383
    %447 = vmatpush1.bf16.msra.mxu0 %v382
    %448 = vmatprep.subr.bf16.mxu0 %v385
    %449 = vmatpush1.bf16.msra.mxu0 %v384
    %450 = vmatprep.subr.bf16.mxu0 %v387
    %451 = vmatpush1.bf16.msra.mxu0 %v386
    %452 = vmatprep.subr.bf16.mxu0 %v389
    %453 = vmatpush1.bf16.msra.mxu0 %v388
    %454 = vmatprep.subr.bf16.mxu0 %v391
    %455 = vmatpush1.bf16.msra.mxu0 %v390
    %456 = vmatprep.subr.bf16.mxu0 %v393
    %457 = vmatpush1.bf16.msra.mxu0 %v392
    %458 = vmatprep.subr.bf16.mxu0 %v395
    %459 = vmatpush1.bf16.msra.mxu0 %v394
    %460 = vmatprep.subr.bf16.mxu0 %v397
    %461 = vmatpush1.bf16.msra.mxu0 %v396
    %462 = vmatprep.subr.bf16.mxu0 %v399
    %463 = vmatpush1.bf16.msra.mxu0 %v398
    %464 = vmatprep.subr.bf16.mxu0 %v401
    %465 = vmatpush1.bf16.msra.mxu0 %v400
    %466 = vmatprep.mubr.bf16.mxu0 %v262
    %467 = vmatmul.mubr.bf16.gmra.mrb[0].mxu0 %v261
    %v468 = vpop.f32.mrb[0].mxu0
    %v469 = vadd.f32 %v267, %v468
    %v470 = vpop.f32.mrb[0].mxu0
    %v471 = vadd.f32 %v271, %v470
    %v472 = vpop.f32.mrb[0].mxu0
    %v473 = vpop.f32.mrb[0].mxu0
    %474 = vdwg.mxu0
    %v475 = vtanh.pop %v469
    %v476 = vtanh.pop %v471
    %v477 = vpack.c.bf16 %v475, %v475
    %v478 = vpack.c.bf16 %v476, %v476
    %v480 = vlaneseq
    %v481 = vshrl.u32 %v480, 7
    %v482 = vsub.s32 0, %v481
    %v483 = vrot.slane %v246, %v482
    %v484 = vlaneseq
    %v485 = vshrl.u32 %v484, 7
    %v486 = vsub.s32 1, %v485
    %v487 = vrot.slane %v246, %v486
    %v522 = vunpack.c.l.b16 %v149
    %v523 = vunpack.c.h.b16 %v149
    %v524 = vunpack.c.l.b16 %v150
    %v525 = vunpack.c.h.b16 %v150
    %v526 = vunpack.c.l.b16 %v151
    %v527 = vunpack.c.h.b16 %v151
    %v528 = vunpack.c.l.b16 %v152
    %v529 = vunpack.c.h.b16 %v152
    %v530 = vunpack.c.l.b16 %v153
    %v531 = vunpack.c.h.b16 %v153
    %v532 = vunpack.c.l.b16 %v154
    %v533 = vunpack.c.h.b16 %v154
    %v534 = vunpack.c.l.b16 %v155
    %v535 = vunpack.c.h.b16 %v155
    %v536 = vunpack.c.l.b16 %v156
    %v537 = vunpack.c.h.b16 %v156
    %v538 = vunpack.c.l.b16 %v157
    %v539 = vunpack.c.h.b16 %v157
    %v540 = vunpack.c.l.b16 %v158
    %v541 = vunpack.c.h.b16 %v158
    %v542 = vunpack.c.l.b16 %v159
    %v543 = vunpack.c.h.b16 %v159
    %v544 = vunpack.c.l.b16 %v160
    %v545 = vunpack.c.h.b16 %v160
    %v546 = vunpack.c.l.b16 %v161
    %v547 = vunpack.c.h.b16 %v161
    %v548 = vunpack.c.l.b16 %v162
    %v549 = vunpack.c.h.b16 %v162
    %v550 = vunpack.c.l.b16 %v163
    %v551 = vunpack.c.h.b16 %v163
    %v552 = vunpack.c.l.b16 %v164
    %v553 = vunpack.c.h.b16 %v164
    %v554 = vunpack.c.l.b16 %v165
    %v555 = vunpack.c.h.b16 %v165
    %v556 = vunpack.c.l.b16 %v166
    %v557 = vunpack.c.h.b16 %v166
    %v558 = vunpack.c.l.b16 %v167
    %v559 = vunpack.c.h.b16 %v167
    %v560 = vunpack.c.l.b16 %v168
    %v561 = vunpack.c.h.b16 %v168
    %v562 = vunpack.c.l.b16 %v169
    %v563 = vunpack.c.h.b16 %v169
    %v564 = vunpack.c.l.b16 %v170
    %v565 = vunpack.c.h.b16 %v170
    %v566 = vunpack.c.l.b16 %v171
    %v567 = vunpack.c.h.b16 %v171
    %v568 = vunpack.c.l.b16 %v172
    %v569 = vunpack.c.h.b16 %v172
    %v570 = vunpack.c.l.b16 %v173
    %v571 = vunpack.c.h.b16 %v173
    %v572 = vunpack.c.l.b16 %v174
    %v573 = vunpack.c.h.b16 %v174
    %v574 = vunpack.c.l.b16 %v175
    %v575 = vunpack.c.h.b16 %v175
    %v576 = vunpack.c.l.b16 %v176
    %v577 = vunpack.c.h.b16 %v176
    %v578 = vunpack.c.l.b16 %v177
    %v579 = vunpack.c.h.b16 %v177
    %v580 = vunpack.c.l.b16 %v178
    %v581 = vunpack.c.h.b16 %v178
    %v582 = vunpack.c.l.b16 %v179
    %v583 = vunpack.c.h.b16 %v179
    %v584 = vunpack.c.l.b16 %v180
    %v585 = vunpack.c.h.b16 %v180
    %v586 = vpack.c.b16 %v524, %v522
    %v587 = vpack.c.b16 %v525, %v523
    %v588 = vpack.c.b16 %v528, %v526
    %v589 = vpack.c.b16 %v529, %v527
    %v590 = vpack.c.b16 %v532, %v530
    %v591 = vpack.c.b16 %v533, %v531
    %v592 = vpack.c.b16 %v536, %v534
    %v593 = vpack.c.b16 %v537, %v535
    %v594 = vpack.c.b16 %v540, %v538
    %v595 = vpack.c.b16 %v541, %v539
    %v596 = vpack.c.b16 %v544, %v542
    %v597 = vpack.c.b16 %v545, %v543
    %v598 = vpack.c.b16 %v548, %v546
    %v599 = vpack.c.b16 %v549, %v547
    %v600 = vpack.c.b16 %v552, %v550
    %v601 = vpack.c.b16 %v553, %v551
    %v602 = vpack.c.b16 %v556, %v554
    %v603 = vpack.c.b16 %v557, %v555
    %v604 = vpack.c.b16 %v560, %v558
    %v605 = vpack.c.b16 %v561, %v559
    %v606 = vpack.c.b16 %v564, %v562
    %v607 = vpack.c.b16 %v565, %v563
    %v608 = vpack.c.b16 %v568, %v566
    %v609 = vpack.c.b16 %v569, %v567
    %v610 = vpack.c.b16 %v572, %v570
    %v611 = vpack.c.b16 %v573, %v571
    %v612 = vpack.c.b16 %v576, %v574
    %v613 = vpack.c.b16 %v577, %v575
    %v614 = vpack.c.b16 %v580, %v578
    %v615 = vpack.c.b16 %v581, %v579
    %v616 = vpack.c.b16 %v584, %v582
    %v617 = vpack.c.b16 %v585, %v583
    %650 = vmatprep.subr.bf16.mxu0 %v587
    %651 = vmatpush1.bf16.msra.mxu0 %v586
    %652 = vmatprep.subr.bf16.mxu0 %v589
    %653 = vmatpush1.bf16.msra.mxu0 %v588
    %654 = vmatprep.subr.bf16.mxu0 %v591
    %655 = vmatpush1.bf16.msra.mxu0 %v590
    %656 = vmatprep.subr.bf16.mxu0 %v593
    %657 = vmatpush1.bf16.msra.mxu0 %v592
    %658 = vmatprep.subr.bf16.mxu0 %v595
    %659 = vmatpush1.bf16.msra.mxu0 %v594
    %660 = vmatprep.subr.bf16.mxu0 %v597
    %661 = vmatpush1.bf16.msra.mxu0 %v596
    %662 = vmatprep.subr.bf16.mxu0 %v599
    %663 = vmatpush1.bf16.msra.mxu0 %v598
    %664 = vmatprep.subr.bf16.mxu0 %v601
    %665 = vmatpush1.bf16.msra.mxu0 %v600
    %666 = vmatprep.subr.bf16.mxu0 %v603
    %667 = vmatpush1.bf16.msra.mxu0 %v602
    %668 = vmatprep.subr.bf16.mxu0 %v605
    %669 = vmatpush1.bf16.msra.mxu0 %v604
    %670 = vmatprep.subr.bf16.mxu0 %v607
    %671 = vmatpush1.bf16.msra.mxu0 %v606
    %672 = vmatprep.subr.bf16.mxu0 %v609
    %673 = vmatpush1.bf16.msra.mxu0 %v608
    %674 = vmatprep.subr.bf16.mxu0 %v611
    %675 = vmatpush1.bf16.msra.mxu0 %v610
    %676 = vmatprep.subr.bf16.mxu0 %v613
    %677 = vmatpush1.bf16.msra.mxu0 %v612
    %678 = vmatprep.subr.bf16.mxu0 %v615
    %679 = vmatpush1.bf16.msra.mxu0 %v614
    %680 = vmatprep.subr.bf16.mxu0 %v617
    %681 = vmatpush1.bf16.msra.mxu0 %v616
    %682 = vmatprep.mubr.bf16.mxu0 %v478
    %683 = vmatmul.mubr.bf16.gmra.mrb[0].mxu0 %v477
    %v684 = vpop.f32.mrb[0].mxu0
    %v685 = vadd.f32 %v483, %v684
    %v686 = vpop.f32.mrb[0].mxu0
    %v687 = vadd.f32 %v487, %v686
    %v688 = vpop.f32.mrb[0].mxu0
    %v689 = vpop.f32.mrb[0].mxu0
    %690 = vdwg.mxu0
    %v691 = vmul.f32 %v685, 0.5
    %v692 = vmul.f32 %v687, 0.5
    %v693 = vmul.f32 %v685, 0.044715
    %v694 = vmul.f32 %v687, 0.044715
    %v695 = vmul.f32 %v693, %v685
    %v696 = vmul.f32 %v694, %v687
    %v697 = vmul.f32 %v695, %v685
    %v698 = vmul.f32 %v696, %v687
    %v699 = vadd.f32 %v685, %v697
    %v700 = vadd.f32 %v687, %v698
    %v701 = vmul.f32 %v699, 0.7978846
    %v702 = vmul.f32 %v700, 0.7978846
    %v703 = vtanh.pop %v701
    %v704 = vtanh.pop %v702
    %v705 = vadd.f32 %v703, 1.0
    %v706 = vadd.f32 %v704, 1.0
    %v707 = vmul.f32 %v691, %v705
    %v708 = vmul.f32 %v692, %v706
    %v709 = vpack.c.bf16 %v707, %v707
    %v710 = vpack.c.bf16 %v708, %v708
    %v712 = vlaneseq
    %v713 = vshrl.u32 %v712, 7
    %v714 = vsub.s32 0, %v713
    %v715 = vrot.slane %v247, %v714
    %v716 = vlaneseq
    %v717 = vshrl.u32 %v716, 7
    %v718 = vsub.s32 1, %v717
    %v719 = vrot.slane %v247, %v718
    %v754 = vunpack.c.l.b16 %v181
    %v755 = vunpack.c.h.b16 %v181
    %v756 = vunpack.c.l.b16 %v182
    %v757 = vunpack.c.h.b16 %v182
    %v758 = vunpack.c.l.b16 %v183
    %v759 = vunpack.c.h.b16 %v183
    %v760 = vunpack.c.l.b16 %v184
    %v761 = vunpack.c.h.b16 %v184
    %v762 = vunpack.c.l.b16 %v185
    %v763 = vunpack.c.h.b16 %v185
    %v764 = vunpack.c.l.b16 %v186
    %v765 = vunpack.c.h.b16 %v186
    %v766 = vunpack.c.l.b16 %v187
    %v767 = vunpack.c.h.b16 %v187
    %v768 = vunpack.c.l.b16 %v188
    %v769 = vunpack.c.h.b16 %v188
    %v770 = vunpack.c.l.b16 %v189
    %v771 = vunpack.c.h.b16 %v189
    %v772 = vunpack.c.l.b16 %v190
    %v773 = vunpack.c.h.b16 %v190
    %v774 = vunpack.c.l.b16 %v191
    %v775 = vunpack.c.h.b16 %v191
    %v776 = vunpack.c.l.b16 %v192
    %v777 = vunpack.c.h.b16 %v192
    %v778 = vunpack.c.l.b16 %v193
    %v779 = vunpack.c.h.b16 %v193
    %v780 = vunpack.c.l.b16 %v194
    %v781 = vunpack.c.h.b16 %v194
    %v782 = vunpack.c.l.b16 %v195
    %v783 = vunpack.c.h.b16 %v195
    %v784 = vunpack.c.l.b16 %v196
    %v785 = vunpack.c.h.b16 %v196
    %v786 = vunpack.c.l.b16 %v197
    %v787 = vunpack.c.h.b16 %v197
    %v788 = vunpack.c.l.b16 %v198
    %v789 = vunpack.c.h.b16 %v198
    %v790 = vunpack.c.l.b16 %v199
    %v791 = vunpack.c.h.b16 %v199
    %v792 = vunpack.c.l.b16 %v200
    %v793 = vunpack.c.h.b16 %v200
    %v794 = vunpack.c.l.b16 %v201
    %v795 = vunpack.c.h.b16 %v201
    %v796 = vunpack.c.l.b16 %v202
    %v797 = vunpack.c.h.b16 %v202
    %v798 = vunpack.c.l.b16 %v203
    %v799 = vunpack.c.h.b16 %v203
    %v800 = vunpack.c.l.b16 %v204
    %v801 = vunpack.c.h.b16 %v204
    %v802 = vunpack.c.l.b16 %v205
    %v803 = vunpack.c.h.b16 %v205
    %v804 = vunpack.c.l.b16 %v206
    %v805 = vunpack.c.h.b16 %v206
    %v806 = vunpack.c.l.b16 %v207
    %v807 = vunpack.c.h.b16 %v207
    %v808 = vunpack.c.l.b16 %v208
    %v809 = vunpack.c.h.b16 %v208
    %v810 = vunpack.c.l.b16 %v209
    %v811 = vunpack.c.h.b16 %v209
    %v812 = vunpack.c.l.b16 %v210
    %v813 = vunpack.c.h.b16 %v210
    %v814 = vunpack.c.l.b16 %v211
    %v815 = vunpack.c.h.b16 %v211
    %v816 = vunpack.c.l.b16 %v212
    %v817 = vunpack.c.h.b16 %v212
    %v818 = vpack.c.b16 %v756, %v754
    %v819 = vpack.c.b16 %v757, %v755
    %v820 = vpack.c.b16 %v760, %v758
    %v821 = vpack.c.b16 %v761, %v759
    %v822 = vpack.c.b16 %v764, %v762
    %v823 = vpack.c.b16 %v765, %v763
    %v824 = vpack.c.b16 %v768, %v766
    %v825 = vpack.c.b16 %v769, %v767
    %v826 = vpack.c.b16 %v772, %v770
    %v827 = vpack.c.b16 %v773, %v771
    %v828 = vpack.c.b16 %v776, %v774
    %v829 = vpack.c.b16 %v777, %v775
    %v830 = vpack.c.b16 %v780, %v778
    %v831 = vpack.c.b16 %v781, %v779
    %v832 = vpack.c.b16 %v784, %v782
    %v833 = vpack.c.b16 %v785, %v783
    %v834 = vpack.c.b16 %v788, %v786
    %v835 = vpack.c.b16 %v789, %v787
    %v836 = vpack.c.b16 %v792, %v790
    %v837 = vpack.c.b16 %v793, %v791
    %v838 = vpack.c.b16 %v796, %v794
    %v839 = vpack.c.b16 %v797, %v795
    %v840 = vpack.c.b16 %v800, %v798
    %v841 = vpack.c.b16 %v801, %v799
    %v842 = vpack.c.b16 %v804, %v802
    %v843 = vpack.c.b16 %v805, %v803
    %v844 = vpack.c.b16 %v808, %v806
    %v845 = vpack.c.b16 %v809, %v807
    %v846 = vpack.c.b16 %v812, %v810
    %v847 = vpack.c.b16 %v813, %v811
    %v848 = vpack.c.b16 %v816, %v814
    %v849 = vpack.c.b16 %v817, %v815
    %882 = vmatprep.subr.bf16.mxu0 %v819
    %883 = vmatpush1.bf16.msra.mxu0 %v818
    %884 = vmatprep.subr.bf16.mxu0 %v821
    %885 = vmatpush1.bf16.msra.mxu0 %v820
    %886 = vmatprep.subr.bf16.mxu0 %v823
    %887 = vmatpush1.bf16.msra.mxu0 %v822
    %888 = vmatprep.subr.bf16.mxu0 %v825
    %889 = vmatpush1.bf16.msra.mxu0 %v824
    %890 = vmatprep.subr.bf16.mxu0 %v827
    %891 = vmatpush1.bf16.msra.mxu0 %v826
    %892 = vmatprep.subr.bf16.mxu0 %v829
    %893 = vmatpush1.bf16.msra.mxu0 %v828
    %894 = vmatprep.subr.bf16.mxu0 %v831
    %895 = vmatpush1.bf16.msra.mxu0 %v830
    %896 = vmatprep.subr.bf16.mxu0 %v833
    %897 = vmatpush1.bf16.msra.mxu0 %v832
    %898 = vmatprep.subr.bf16.mxu0 %v835
    %899 = vmatpush1.bf16.msra.mxu0 %v834
    %900 = vmatprep.subr.bf16.mxu0 %v837
    %901 = vmatpush1.bf16.msra.mxu0 %v836
    %902 = vmatprep.subr.bf16.mxu0 %v839
    %903 = vmatpush1.bf16.msra.mxu0 %v838
    %904 = vmatprep.subr.bf16.mxu0 %v841
    %905 = vmatpush1.bf16.msra.mxu0 %v840
    %906 = vmatprep.subr.bf16.mxu0 %v843
    %907 = vmatpush1.bf16.msra.mxu0 %v842
    %908 = vmatprep.subr.bf16.mxu0 %v845
    %909 = vmatpush1.bf16.msra.mxu0 %v844
    %910 = vmatprep.subr.bf16.mxu0 %v847
    %911 = vmatpush1.bf16.msra.mxu0 %v846
    %912 = vmatprep.subr.bf16.mxu0 %v849
    %913 = vmatpush1.bf16.msra.mxu0 %v848
    %914 = vmatprep.mubr.bf16.mxu0 %v710
    %915 = vmatmul.mubr.bf16.gmra.mrb[0].mxu0 %v709
    %v916 = vpop.f32.mrb[0].mxu0
    %v917 = vadd.f32 %v715, %v916
    %v918 = vpop.f32.mrb[0].mxu0
    %v919 = vadd.f32 %v719, %v918
    %v920 = vpop.f32.mrb[0].mxu0
    %v921 = vpop.f32.mrb[0].mxu0
    %922 = vdwg.mxu0
    %v923 = vmul.f32 %v917, 0.5
    %v924 = vmul.f32 %v919, 0.5
    %v925 = vmul.f32 %v917, 0.044715
    %v926 = vmul.f32 %v919, 0.044715
    %v927 = vmul.f32 %v925, %v917
    %v928 = vmul.f32 %v926, %v919
    %v929 = vmul.f32 %v927, %v917
    %v930 = vmul.f32 %v928, %v919
    %v931 = vadd.f32 %v917, %v929
    %v932 = vadd.f32 %v919, %v930
    %v933 = vmul.f32 %v931, 0.7978846
    %v934 = vmul.f32 %v932, 0.7978846
    %v935 = vtanh.pop %v933
    %v936 = vtanh.pop %v934
    %v937 = vadd.f32 %v935, 1.0
    %v938 = vadd.f32 %v936, 1.0
    %v939 = vmul.f32 %v923, %v937
    %v940 = vmul.f32 %v924, %v938
    %v941 = vpack.c.bf16 %v939, %v939
    %v942 = vpack.c.bf16 %v940, %v940
    %v944 = vlaneseq
    %v945 = vshrl.u32 %v944, 7
    %v946 = vsub.s32 0, %v945
    %v947 = vrot.slane %v248, %v946
    %v948 = vlaneseq
    %v949 = vshrl.u32 %v948, 7
    %v950 = vsub.s32 1, %v949
    %v951 = vrot.slane %v248, %v950
    %v986 = vunpack.c.l.b16 %v213
    %v987 = vunpack.c.h.b16 %v213
    %v988 = vunpack.c.l.b16 %v214
    %v989 = vunpack.c.h.b16 %v214
    %v990 = vunpack.c.l.b16 %v215
    %v991 = vunpack.c.h.b16 %v215
    %v992 = vunpack.c.l.b16 %v216
    %v993 = vunpack.c.h.b16 %v216
    %v994 = vunpack.c.l.b16 %v217
    %v995 = vunpack.c.h.b16 %v217
    %v996 = vunpack.c.l.b16 %v218
    %v997 = vunpack.c.h.b16 %v218
    %v998 = vunpack.c.l.b16 %v219
    %v999 = vunpack.c.h.b16 %v219
    %v1000 = vunpack.c.l.b16 %v220
    %v1001 = vunpack.c.h.b16 %v220
    %v1002 = vunpack.c.l.b16 %v221
    %v1003 = vunpack.c.h.b16 %v221
    %v1004 = vunpack.c.l.b16 %v222
    %v1005 = vunpack.c.h.b16 %v222
    %v1006 = vunpack.c.l.b16 %v223
    %v1007 = vunpack.c.h.b16 %v223
    %v1008 = vunpack.c.l.b16 %v224
    %v1009 = vunpack.c.h.b16 %v224
    %v1010 = vunpack.c.l.b16 %v225
    %v1011 = vunpack.c.h.b16 %v225
    %v1012 = vunpack.c.l.b16 %v226
    %v1013 = vunpack.c.h.b16 %v226
    %v1014 = vunpack.c.l.b16 %v227
    %v1015 = vunpack.c.h.b16 %v227
    %v1016 = vunpack.c.l.b16 %v228
    %v1017 = vunpack.c.h.b16 %v228
    %v1018 = vunpack.c.l.b16 %v229
    %v1019 = vunpack.c.h.b16 %v229
    %v1020 = vunpack.c.l.b16 %v230
    %v1021 = vunpack.c.h.b16 %v230
    %v1022 = vunpack.c.l.b16 %v231
    %v1023 = vunpack.c.h.b16 %v231
    %v1024 = vunpack.c.l.b16 %v232
    %v1025 = vunpack.c.h.b16 %v232
    %v1026 = vunpack.c.l.b16 %v233
    %v1027 = vunpack.c.h.b16 %v233
    %v1028 = vunpack.c.l.b16 %v234
    %v1029 = vunpack.c.h.b16 %v234
    %v1030 = vunpack.c.l.b16 %v235
    %v1031 = vunpack.c.h.b16 %v235
    %v1032 = vunpack.c.l.b16 %v236
    %v1033 = vunpack.c.h.b16 %v236
    %v1034 = vunpack.c.l.b16 %v237
    %v1035 = vunpack.c.h.b16 %v237
    %v1036 = vunpack.c.l.b16 %v238
    %v1037 = vunpack.c.h.b16 %v238
    %v1038 = vunpack.c.l.b16 %v239
    %v1039 = vunpack.c.h.b16 %v239
    %v1040 = vunpack.c.l.b16 %v240
    %v1041 = vunpack.c.h.b16 %v240
    %v1042 = vunpack.c.l.b16 %v241
    %v1043 = vunpack.c.h.b16 %v241
    %v1044 = vunpack.c.l.b16 %v242
    %v1045 = vunpack.c.h.b16 %v242
    %v1046 = vunpack.c.l.b16 %v243
    %v1047 = vunpack.c.h.b16 %v243
    %v1048 = vunpack.c.l.b16 %v244
    %v1049 = vunpack.c.h.b16 %v244
    %v1050 = vpack.c.b16 %v988, %v986
    %v1051 = vpack.c.b16 %v989, %v987
    %v1052 = vpack.c.b16 %v992, %v990
    %v1053 = vpack.c.b16 %v993, %v991
    %v1054 = vpack.c.b16 %v996, %v994
    %v1055 = vpack.c.b16 %v997, %v995
    %v1056 = vpack.c.b16 %v1000, %v998
    %v1057 = vpack.c.b16 %v1001, %v999
    %v1058 = vpack.c.b16 %v1004, %v1002
    %v1059 = vpack.c.b16 %v1005, %v1003
    %v1060 = vpack.c.b16 %v1008, %v1006
    %v1061 = vpack.c.b16 %v1009, %v1007
    %v1062 = vpack.c.b16 %v1012, %v1010
    %v1063 = vpack.c.b16 %v1013, %v1011
    %v1064 = vpack.c.b16 %v1016, %v1014
    %v1065 = vpack.c.b16 %v1017, %v1015
    %v1066 = vpack.c.b16 %v1020, %v1018
    %v1067 = vpack.c.b16 %v1021, %v1019
    %v1068 = vpack.c.b16 %v1024, %v1022
    %v1069 = vpack.c.b16 %v1025, %v1023
    %v1070 = vpack.c.b16 %v1028, %v1026
    %v1071 = vpack.c.b16 %v1029, %v1027
    %v1072 = vpack.c.b16 %v1032, %v1030
    %v1073 = vpack.c.b16 %v1033, %v1031
    %v1074 = vpack.c.b16 %v1036, %v1034
    %v1075 = vpack.c.b16 %v1037, %v1035
    %v1076 = vpack.c.b16 %v1040, %v1038
    %v1077 = vpack.c.b16 %v1041, %v1039
    %v1078 = vpack.c.b16 %v1044, %v1042
    %v1079 = vpack.c.b16 %v1045, %v1043
    %v1080 = vpack.c.b16 %v1048, %v1046
    %v1081 = vpack.c.b16 %v1049, %v1047
    %1114 = vmatprep.subr.bf16.mxu0 %v1051
    %1115 = vmatpush1.bf16.msra.mxu0 %v1050
    %1116 = vmatprep.subr.bf16.mxu0 %v1053
    %1117 = vmatpush1.bf16.msra.mxu0 %v1052
    %1118 = vmatprep.subr.bf16.mxu0 %v1055
    %1119 = vmatpush1.bf16.msra.mxu0 %v1054
    %1120 = vmatprep.subr.bf16.mxu0 %v1057
    %1121 = vmatpush1.bf16.msra.mxu0 %v1056
    %1122 = vmatprep.subr.bf16.mxu0 %v1059
    %1123 = vmatpush1.bf16.msra.mxu0 %v1058
    %1124 = vmatprep.subr.bf16.mxu0 %v1061
    %1125 = vmatpush1.bf16.msra.mxu0 %v1060
    %1126 = vmatprep.subr.bf16.mxu0 %v1063
    %1127 = vmatpush1.bf16.msra.mxu0 %v1062
    %1128 = vmatprep.subr.bf16.mxu0 %v1065
    %1129 = vmatpush1.bf16.msra.mxu0 %v1064
    %1130 = vmatprep.subr.bf16.mxu0 %v1067
    %1131 = vmatpush1.bf16.msra.mxu0 %v1066
    %1132 = vmatprep.subr.bf16.mxu0 %v1069
    %1133 = vmatpush1.bf16.msra.mxu0 %v1068
    %1134 = vmatprep.subr.bf16.mxu0 %v1071
    %1135 = vmatpush1.bf16.msra.mxu0 %v1070
    %1136 = vmatprep.subr.bf16.mxu0 %v1073
    %1137 = vmatpush1.bf16.msra.mxu0 %v1072
    %1138 = vmatprep.subr.bf16.mxu0 %v1075
    %1139 = vmatpush1.bf16.msra.mxu0 %v1074
    %1140 = vmatprep.subr.bf16.mxu0 %v1077
    %1141 = vmatpush1.bf16.msra.mxu0 %v1076
    %1142 = vmatprep.subr.bf16.mxu0 %v1079
    %1143 = vmatpush1.bf16.msra.mxu0 %v1078
    %1144 = vmatprep.subr.bf16.mxu0 %v1081
    %1145 = vmatpush1.bf16.msra.mxu0 %v1080
    %1146 = vmatprep.mubr.bf16.mxu0 %v942
    %1147 = vmatmul.mubr.bf16.gmra.mrb[0].mxu0 %v941
    %v1148 = vpop.f32.mrb[0].mxu0
    %v1149 = vadd.f32 %v947, %v1148
    %v1150 = vpop.f32.mrb[0].mxu0
    %v1151 = vadd.f32 %v951, %v1150
    %v1152 = vpop.f32.mrb[0].mxu0
    %v1153 = vpop.f32.mrb[0].mxu0
    %1154 = vdwg.mxu0
    %v1155 = vmul.f32 %v1149, %v1149
    %v1156 = vmul.f32 %v1151, %v1151
    %vm1157 = vcmask 1041408
    %v1158 = vsel %vm1157, %v1155, 0.0
    %v1159 = vsel %vm1157, %v1156, 0.0
    %v1160 = vadd.f32 %v1158, %v1159
    %1161 = vadd.xlane.f32.xlu0 %v1160
    %v1162 = vpop.xlane.xlu0 %1161
    %v1163 = vmax.f32 %v1162, 1e-24
    %v1164 = vrsqrt.pop %v1163
    %v1165 = vmul.f32 %v1149, %v1164
    %v1166 = vmul.f32 %v1151, %v1164
    %v1169 = vcombine.low %v1165, %v1166
    %v1171 = vunpack.c.l.s4 1983009808
    %v1172 = vunpack.c.0.s8 %v1171
    %v1173 = vlaneseq
    %v1174 = vshrl.u32 %v1173, 7
    %v1175 = vsub.s32 %v1172, %v1174
    %v1176 = vrot.slane %v1169, %v1175
    %1178 = vst [vmem:[#allocation13] sm:$0xf] %v1176
    %v1179 = vld [vmem:[#allocation5] sm:$0xf]
    %v1182 = vunpack.c.l.s4 1983009808
    %v1183 = vunpack.c.0.s8 %v1182
    %v1184 = vlaneseq
    %v1185 = vshrl.u32 %v1184, 7
    %v1186 = vsub.s32 %v1183, %v1185
    %v1187 = vrot.slane %v1179, %v1186
    %v1188 = vcombine.high %v1187, %v1187
    %v1191 = vpack.c.bf16 %v1187, %v1187
    %v1192 = vpack.c.bf16 %v1188, %v1188
    %1193 = vmatprep.subr.bf16.mxu0 %v371
    %1194 = vmatpush1.bf16.msra.mxu0 %v370
    %1195 = vmatprep.subr.bf16.mxu0 %v373
    %1196 = vmatpush1.bf16.msra.mxu0 %v372
    %1197 = vmatprep.subr.bf16.mxu0 %v375
    %1198 = vmatpush1.bf16.msra.mxu0 %v374
    %1199 = vmatprep.subr.bf16.mxu0 %v377
    %1200 = vmatpush1.bf16.msra.mxu0 %v376
    %1201 = vmatprep.subr.bf16.mxu0 %v379
    %1202 = vmatpush1.bf16.msra.mxu0 %v378
    %1203 = vmatprep.subr.bf16.mxu0 %v381
    %1204 = vmatpush1.bf16.msra.mxu0 %v380
    %1205 = vmatprep.subr.bf16.mxu0 %v383
    %1206 = vmatpush1.bf16.msra.mxu0 %v382
    %1207 = vmatprep.subr.bf16.mxu0 %v385
    %1208 = vmatpush1.bf16.msra.mxu0 %v384
    %1209 = vmatprep.subr.bf16.mxu0 %v387
    %1210 = vmatpush1.bf16.msra.mxu0 %v386
    %1211 = vmatprep.subr.bf16.mxu0 %v389
    %1212 = vmatpush1.bf16.msra.mxu0 %v388
    %1213 = vmatprep.subr.bf16.mxu0 %v391
    %1214 = vmatpush1.bf16.msra.mxu0 %v390
    %1215 = vmatprep.subr.bf16.mxu0 %v393
    %1216 = vmatpush1.bf16.msra.mxu0 %v392
    %1217 = vmatprep.subr.bf16.mxu0 %v395
    %1218 = vmatpush1.bf16.msra.mxu0 %v394
    %1219 = vmatprep.subr.bf16.mxu0 %v397
    %1220 = vmatpush1.bf16.msra.mxu0 %v396
    %1221 = vmatprep.subr.bf16.mxu0 %v399
    %1222 = vmatpush1.bf16.msra.mxu0 %v398
    %1223 = vmatprep.subr.bf16.mxu0 %v401
    %1224 = vmatpush1.bf16.msra.mxu0 %v400
    %1225 = vmatprep.mubr.bf16.mxu0 %v1192
    %1226 = vmatmul.mubr.bf16.gmra.mrb[0].mxu0 %v1191
    %v1227 = vpop.f32.mrb[0].mxu0
    %v1228 = vadd.f32 %v267, %v1227
    %v1229 = vpop.f32.mrb[0].mxu0
    %v1230 = vadd.f32 %v271, %v1229
    %v1231 = vpop.f32.mrb[0].mxu0
    %v1232 = vpop.f32.mrb[0].mxu0
    %1233 = vdwg.mxu0
    %v1234 = vtanh.pop %v1228
    %v1235 = vtanh.pop %v1230
    %v1236 = vpack.c.bf16 %v1234, %v1234
    %v1237 = vpack.c.bf16 %v1235, %v1235
    %1238 = vmatprep.subr.bf16.mxu0 %v587
    %1239 = vmatpush1.bf16.msra.mxu0 %v586
    %1240 = vmatprep.subr.bf16.mxu0 %v589
    %1241 = vmatpush1.bf16.msra.mxu0 %v588
    %1242 = vmatprep.subr.bf16.mxu0 %v591
    %1243 = vmatpush1.bf16.msra.mxu0 %v590
    %1244 = vmatprep.subr.bf16.mxu0 %v593
    %1245 = vmatpush1.bf16.msra.mxu0 %v592
    %1246 = vmatprep.subr.bf16.mxu0 %v595
    %1247 = vmatpush1.bf16.msra.mxu0 %v594
    %1248 = vmatprep.subr.bf16.mxu0 %v597
    %1249 = vmatpush1.bf16.msra.mxu0 %v596
    %1250 = vmatprep.subr.bf16.mxu0 %v599
    %1251 = vmatpush1.bf16.msra.mxu0 %v598
    %1252 = vmatprep.subr.bf16.mxu0 %v601
    %1253 = vmatpush1.bf16.msra.mxu0 %v600
    %1254 = vmatprep.subr.bf16.mxu0 %v603
    %1255 = vmatpush1.bf16.msra.mxu0 %v602
    %1256 = vmatprep.subr.bf16.mxu0 %v605
    %1257 = vmatpush1.bf16.msra.mxu0 %v604
    %1258 = vmatprep.subr.bf16.mxu0 %v607
    %1259 = vmatpush1.bf16.msra.mxu0 %v606
    %1260 = vmatprep.subr.bf16.mxu0 %v609
    %1261 = vmatpush1.bf16.msra.mxu0 %v608
    %1262 = vmatprep.subr.bf16.mxu0 %v611
    %1263 = vmatpush1.bf16.msra.mxu0 %v610
    %1264 = vmatprep.subr.bf16.mxu0 %v613
    %1265 = vmatpush1.bf16.msra.mxu0 %v612
    %1266 = vmatprep.subr.bf16.mxu0 %v615
    %1267 = vmatpush1.bf16.msra.mxu0 %v614
    %1268 = vmatprep.subr.bf16.mxu0 %v617
    %1269 = vmatpush1.bf16.msra.mxu0 %v616
    %1270 = vmatprep.mubr.bf16.mxu0 %v1237
    %1271 = vmatmul.mubr.bf16.gmra.mrb[0].mxu0 %v1236
    %v1272 = vpop.f32.mrb[0].mxu0
    %v1273 = vadd.f32 %v483, %v1272
    %v1274 = vpop.f32.mrb[0].mxu0
    %v1275 = vadd.f32 %v487, %v1274
    %v1276 = vpop.f32.mrb[0].mxu0
    %v1277 = vpop.f32.mrb[0].mxu0
    %1278 = vdwg.mxu0
    %v1279 = vmul.f32 %v1273, 0.5
    %v1280 = vmul.f32 %v1275, 0.5
    %v1281 = vmul.f32 %v1273, 0.044715
    %v1282 = vmul.f32 %v1275, 0.044715
    %v1283 = vmul.f32 %v1281, %v1273
    %v1284 = vmul.f32 %v1282, %v1275
    %v1285 = vmul.f32 %v1283, %v1273
    %v1286 = vmul.f32 %v1284, %v1275
    %v1287 = vadd.f32 %v1273, %v1285
    %v1288 = vadd.f32 %v1275, %v1286
    %v1289 = vmul.f32 %v1287, 0.7978846
    %v1290 = vmul.f32 %v1288, 0.7978846
    %v1291 = vtanh.pop %v1289
    %v1292 = vtanh.pop %v1290
    %v1293 = vadd.f32 %v1291, 1.0
    %v1294 = vadd.f32 %v1292, 1.0
    %v1295 = vmul.f32 %v1279, %v1293
    %v1296 = vmul.f32 %v1280, %v1294
    %v1297 = vpack.c.bf16 %v1295, %v1295
    %v1298 = vpack.c.bf16 %v1296, %v1296
    %1299 = vmatprep.subr.bf16.mxu0 %v819
    %1300 = vmatpush1.bf16.msra.mxu0 %v818
    %1301 = vmatprep.subr.bf16.mxu0 %v821
    %1302 = vmatpush1.bf16.msra.mxu0 %v820
    %1303 = vmatprep.subr.bf16.mxu0 %v823
    %1304 = vmatpush1.bf16.msra.mxu0 %v822
    %1305 = vmatprep.subr.bf16.mxu0 %v825
    %1306 = vmatpush1.bf16.msra.mxu0 %v824
    %1307 = vmatprep.subr.bf16.mxu0 %v827
    %1308 = vmatpush1.bf16.msra.mxu0 %v826
    %1309 = vmatprep.subr.bf16.mxu0 %v829
    %1310 = vmatpush1.bf16.msra.mxu0 %v828
    %1311 = vmatprep.subr.bf16.mxu0 %v831
    %1312 = vmatpush1.bf16.msra.mxu0 %v830
    %1313 = vmatprep.subr.bf16.mxu0 %v833
    %1314 = vmatpush1.bf16.msra.mxu0 %v832
    %1315 = vmatprep.subr.bf16.mxu0 %v835
    %1316 = vmatpush1.bf16.msra.mxu0 %v834
    %1317 = vmatprep.subr.bf16.mxu0 %v837
    %1318 = vmatpush1.bf16.msra.mxu0 %v836
    %1319 = vmatprep.subr.bf16.mxu0 %v839
    %1320 = vmatpush1.bf16.msra.mxu0 %v838
    %1321 = vmatprep.subr.bf16.mxu0 %v841
    %1322 = vmatpush1.bf16.msra.mxu0 %v840
    %1323 = vmatprep.subr.bf16.mxu0 %v843
    %1324 = vmatpush1.bf16.msra.mxu0 %v842
    %1325 = vmatprep.subr.bf16.mxu0 %v845
    %1326 = vmatpush1.bf16.msra.mxu0 %v844
    %1327 = vmatprep.subr.bf16.mxu0 %v847
    %1328 = vmatpush1.bf16.msra.mxu0 %v846
    %1329 = vmatprep.subr.bf16.mxu0 %v849
    %1330 = vmatpush1.bf16.msra.mxu0 %v848
    %1331 = vmatprep.mubr.bf16.mxu0 %v1298
    %1332 = vmatmul.mubr.bf16.gmra.mrb[0].mxu0 %v1297
    %v1333 = vpop.f32.mrb[0].mxu0
    %v1334 = vadd.f32 %v715, %v1333
    %v1335 = vpop.f32.mrb[0].mxu0
    %v1336 = vadd.f32 %v719, %v1335
    %v1337 = vpop.f32.mrb[0].mxu0
    %v1338 = vpop.f32.mrb[0].mxu0
    %1339 = vdwg.mxu0
    %v1340 = vmul.f32 %v1334, 0.5
    %v1341 = vmul.f32 %v1336, 0.5
    %v1342 = vmul.f32 %v1334, 0.044715
    %v1343 = vmul.f32 %v1336, 0.044715
    %v1344 = vmul.f32 %v1342, %v1334
    %v1345 = vmul.f32 %v1343, %v1336
    %v1346 = vmul.f32 %v1344, %v1334
    %v1347 = vmul.f32 %v1345, %v1336
    %v1348 = vadd.f32 %v1334, %v1346
    %v1349 = vadd.f32 %v1336, %v1347
    %v1350 = vmul.f32 %v1348, 0.7978846
    %v1351 = vmul.f32 %v1349, 0.7978846
    %v1352 = vtanh.pop %v1350
    %v1353 = vtanh.pop %v1351
    %v1354 = vadd.f32 %v1352, 1.0
    %v1355 = vadd.f32 %v1353, 1.0
    %v1356 = vmul.f32 %v1340, %v1354
    %v1357 = vmul.f32 %v1341, %v1355
    %v1358 = vpack.c.bf16 %v1356, %v1356
    %v1359 = vpack.c.bf16 %v1357, %v1357
    %1360 = vmatprep.subr.bf16.mxu0 %v1051
    %1361 = vmatpush1.bf16.msra.mxu0 %v1050
    %1362 = vmatprep.subr.bf16.mxu0 %v1053
    %1363 = vmatpush1.bf16.msra.mxu0 %v1052
    %1364 = vmatprep.subr.bf16.mxu0 %v1055
    %1365 = vmatpush1.bf16.msra.mxu0 %v1054
    %1366 = vmatprep.subr.bf16.mxu0 %v1057
    %1367 = vmatpush1.bf16.msra.mxu0 %v1056
    %1368 = vmatprep.subr.bf16.mxu0 %v1059
    %1369 = vmatpush1.bf16.msra.mxu0 %v1058
    %1370 = vmatprep.subr.bf16.mxu0 %v1061
    %1371 = vmatpush1.bf16.msra.mxu0 %v1060
    %1372 = vmatprep.subr.bf16.mxu0 %v1063
    %1373 = vmatpush1.bf16.msra.mxu0 %v1062
    %1374 = vmatprep.subr.bf16.mxu0 %v1065
    %1375 = vmatpush1.bf16.msra.mxu0 %v1064
    %1376 = vmatprep.subr.bf16.mxu0 %v1067
    %1377 = vmatpush1.bf16.msra.mxu0 %v1066
    %1378 = vmatprep.subr.bf16.mxu0 %v1069
    %1379 = vmatpush1.bf16.msra.mxu0 %v1068
    %1380 = vmatprep.subr.bf16.mxu0 %v1071
    %1381 = vmatpush1.bf16.msra.mxu0 %v1070
    %1382 = vmatprep.subr.bf16.mxu0 %v1073
    %1383 = vmatpush1.bf16.msra.mxu0 %v1072
    %1384 = vmatprep.subr.bf16.mxu0 %v1075
    %1385 = vmatpush1.bf16.msra.mxu0 %v1074
    %1386 = vmatprep.subr.bf16.mxu0 %v1077
    %1387 = vmatpush1.bf16.msra.mxu0 %v1076
    %1388 = vmatprep.subr.bf16.mxu0 %v1079
    %1389 = vmatpush1.bf16.msra.mxu0 %v1078
    %1390 = vmatprep.subr.bf16.mxu0 %v1081
    %1391 = vmatpush1.bf16.msra.mxu0 %v1080
    %1392 = vmatprep.mubr.bf16.mxu0 %v1359
    %1393 = vmatmul.mubr.bf16.gmra.mrb[0].mxu0 %v1358
    %v1394 = vpop.f32.mrb[0].mxu0
    %v1395 = vadd.f32 %v947, %v1394
    %v1396 = vpop.f32.mrb[0].mxu0
    %v1397 = vadd.f32 %v951, %v1396
    %v1398 = vpop.f32.mrb[0].mxu0
    %v1399 = vpop.f32.mrb[0].mxu0
    %1400 = vdwg.mxu0
    %v1401 = vmul.f32 %v1395, %v1395
    %v1402 = vmul.f32 %v1397, %v1397
    %v1403 = vsel %vm1157, %v1401, 0.0
    %v1404 = vsel %vm1157, %v1402, 0.0
    %v1405 = vadd.f32 %v1403, %v1404
    %1406 = vadd.xlane.f32.xlu0 %v1405
    %v1407 = vpop.xlane.xlu0 %1406
    %v1408 = vmax.f32 %v1407, 1e-24
    %v1409 = vrsqrt.pop %v1408
    %v1410 = vmul.f32 %v1395, %v1409
    %v1411 = vmul.f32 %v1397, %v1409
    %v1414 = vcombine.low %v1410, %v1411
    %v1416 = vunpack.c.l.s4 1983009808
    %v1417 = vunpack.c.0.s8 %v1416
    %v1418 = vlaneseq
    %v1419 = vshrl.u32 %v1418, 7
    %v1420 = vsub.s32 %v1417, %v1419
    %v1421 = vrot.slane %v1414, %v1420
    %1423 = vst [vmem:[#allocation14] sm:$0xf] %v1421
    // Predicated region
    $region66: #{tpu_custom_call.1} parent=1 // pred_check
      _
    $region67: #{tpu_custom_call.1} parent=1 // pred_check_branch
      %1425 = sbr.rel (0) target = $region69
    $region68: #{tpu_custom_call.1} parent=1 // pred_region
      %s1427 = ssub.s32 64, 64
      %1428 = vsyncadd [#allocation4], %s1427
      %s1430 = sshll.u32 [#allocation13], 4
      %s1431 = int_to_ptr.vmem [resolvable:$true] %s1430
      %1433 = dma.vmem_to_hbm [thread:$0]  %s1431, 64, %s10, [#allocation4]
    $region69: #{tpu_custom_call.1} parent=1 // pred_fallthru
      _
    // Predicated region
    $region70: #{tpu_custom_call.1} parent=1 // pred_check
      _
    $region71: #{tpu_custom_call.1} parent=1 // pred_check_branch
      %1435 = sbr.rel (0) target = $region73
    $region72: #{tpu_custom_call.1} parent=1 // pred_region
      %s1437 = ssub.s32 64, 64
      %1438 = vsyncadd [#allocation15], %s1437
      %s1440 = sshll.u32 [#allocation14], 4
      %s1441 = int_to_ptr.vmem [resolvable:$true] %s1440
      %1443 = dma.vmem_to_hbm [thread:$0]  %s1441, 64, %s11, [#allocation15]
    $region73: #{tpu_custom_call.1} parent=1 // pred_fallthru
      _
    // Predicated region
    $region74: #{tpu_custom_call.1} parent=1 // pred_check
      _
    $region75: #{tpu_custom_call.1} parent=1 // pred_check_branch
      %1445 = sbr.rel (0) target = $region77
    $region76: #{tpu_custom_call.1} parent=1 // pred_region
      %1446 = dma.done [#allocation4], 64
    $region77: #{tpu_custom_call.1} parent=1 // pred_fallthru
      _
    // Predicated region
    $region78: #{tpu_custom_call.1} parent=1 // pred_check
      _
    $region79: #{tpu_custom_call.1} parent=1 // pred_check_branch
      %1448 = sbr.rel (0) target = $region81
    $region80: #{tpu_custom_call.1} parent=1 // pred_region
      %1449 = dma.done [#allocation15], 64
    $region81: #{tpu_custom_call.1} parent=1 // pred_fallthru
      _
    %1450 = vsyncpa [#allocation3], 1
    %1451 = vsyncpa [#allocation6], 1
    %1452 = vsyncpa [#allocation9], 1
    %1453 = vsyncpa [#allocation12], 1
    %1454 = vsyncpa [#allocation4], 1
    %1455 = vsyncpa [#allocation15], 1

</llo_original>
